<compile_context>
chip_gen: v6e
topology: v6e:2x2x1
jax: 0.10.0
libtpu: 0.0.40
codegen_flags: <defaults>
</compile_context>

<pallas_src>
import math
import numpy as np
import jax
import jax.numpy as jnp
from jax.experimental import pallas as pl
from jax.experimental.pallas import tpu as pltpu

# ---------------- small, self-consistent config ----------------
IMG       = 16          # img_size
PATCH     = 8           # patch_size
IN_CHANS  = 3
EMBED     = 32          # embed_dim
DEPTH     = 2
HEADS     = 4
MLP_RATIO = 4.0
FRAMES    = 4           # all_frames
TUBELET   = 2
B         = 2

GRID      = IMG // PATCH                 # 2  (per-axis patches)
HW        = GRID * GRID                  # 4  (patches per frame-pair)
T         = FRAMES // TUBELET            # 2  (temporal tokens)
N_TOK     = T * HW                       # 8
BN        = B * N_TOK                    # 16 (batch folded into tokens)
BH        = B * HEADS                    # 8  (batched attention axis)
HEAD_DIM  = EMBED // HEADS               # 8
HIDDEN    = int(EMBED * MLP_RATIO)       # 128
PATCH_DIM = IN_CHANS * TUBELET * PATCH * PATCH   # 384
EPS       = 1e-5                         # nn.LayerNorm default
SCALE     = HEAD_DIM ** -0.5


# ---------------- in-kernel helpers (f32 elementwise math) ----------------
def _layernorm(x, w, b):
    mu  = jnp.mean(x, axis=-1, keepdims=True)
    var = jnp.mean((x - mu) ** 2, axis=-1, keepdims=True)
    return (x - mu) * jax.lax.rsqrt(var + EPS) * w + b


def _gelu(x):
    # exact (erf) GELU, matching nn.GELU() default numerics
    return 0.5 * x * (1.0 + jax.lax.erf(x * (1.0 / math.sqrt(2.0))))


# ---------------- the single fused kernel ----------------
def vit_fused_kernel(patches_ref, w_pe_ref, b_pe_ref, pos_ref,
                     ln1w_ref, ln1b_ref, wq_ref, wk_ref, wv_ref,
                     projw_ref, projb_ref,
                     ln2w_ref, ln2b_ref, fc1w_ref, fc1b_ref, fc2w_ref, fc2b_ref,
                     normw_ref, normb_ref, pool_ref, out_ref):
    bf16 = jnp.bfloat16
    f32  = jnp.float32

    # ---- patch embedding (Conv3d stride==kernel as matmul) + sinusoid pos ----
    x = jnp.dot(patches_ref[...].astype(bf16), w_pe_ref[...],
                preferred_element_type=f32)
    x = x + b_pe_ref[...] + pos_ref[...]                          # (BN, C) f32

    # ---- transformer blocks: static unroll (DEPTH=2), weights VMEM-resident ----
    for d in range(DEPTH):
        # -------- attention --------
        xn = _layernorm(x, ln1w_ref[d], ln1b_ref[d])
        xn_bf = xn.astype(bf16)

        # Per-head q/k/v from pre-split per-head weights: no narrow lane slices,
        # no reshuffles.  Softmax scale is folded into wq at init.
        q_h, k_h, v_h = [], [], []
        for h in range(HEADS):                                    # static loop
            q_h.append(jnp.dot(xn_bf, wq_ref[d, h],
                               preferred_element_type=f32).reshape(B, N_TOK, HEAD_DIM))
            k_h.append(jnp.dot(xn_bf, wk_ref[d, h],
                               preferred_element_type=f32).reshape(B, N_TOK, HEAD_DIM))
            v_h.append(jnp.dot(xn_bf, wv_ref[d, h],
                               preferred_element_type=f32).reshape(B, N_TOK, HEAD_DIM))
        # Head-major stacking along the (major) batch axis: x-axis order = (h, b).
        qx = jnp.concatenate(q_h, axis=0).astype(bf16)            # (BH, N, Dh)
        kx = jnp.concatenate(k_h, axis=0).astype(bf16)
        vx = jnp.concatenate(v_h, axis=0).astype(bf16)

        # One batched attention over all (head, batch) pairs, one softmax.
        s = jnp.einsum('xqd,xkd->xqk', qx, kx,
                       preferred_element_type=f32)                # (BH, N, N) f32
        s = s - jnp.max(s, axis=-1, keepdims=True)
        e = jnp.exp(s)
        inv = pl.reciprocal(jnp.sum(e, axis=-1, keepdims=True), approx=True)
        o = jnp.einsum('xqk,xkd->xqd', e.astype(bf16), vx,
                       preferred_element_type=f32)                # (BH, N, Dh) f32
        o = o * inv                                               # fold softmax denom post-PV

        # Reassemble heads into (BN, EMBED) head-major columns (one lane concat),
        # then ONE projection matmul instead of 4 accumulated K=8 matmuls.
        heads = [o[h * B:(h + 1) * B].reshape(BN, HEAD_DIM) for h in range(HEADS)]
        attn_cat = jnp.concatenate(heads, axis=-1)                # (BN, EMBED)
        x = x + jnp.dot(attn_cat.astype(bf16), projw_ref[d],
                        preferred_element_type=f32) + projb_ref[d]   # residual 1

        # -------- MLP --------
        xn2 = _layernorm(x, ln2w_ref[d], ln2b_ref[d])
        hdn = _gelu(jnp.dot(xn2.astype(bf16), fc1w_ref[d],
                            preferred_element_type=f32) + fc1b_ref[d])
        x = x + jnp.dot(hdn.astype(bf16), fc2w_ref[d],
                        preferred_element_type=f32) + fc2b_ref[d]    # residual 2

    # ---- final LayerNorm + per-frame mean pool as one matmul (kept f32) ----
    xn = _layernorm(x, normw_ref[...], normb_ref[...])
    out_ref[...] = jnp.dot(pool_ref[...], xn,
                           preferred_element_type=f32)            # (B*T, C)


# ---------------- pallas_call wrapper (single launch, no grid) ----------------
def run_fused_vit(patches, p):
    args = (patches, p["w_pe"], p["b_pe"], p["pos"],
            p["ln1_w"], p["ln1_b"], p["wq"], p["wk"], p["wv"],
            p["proj_w"], p["proj_b"],
            p["ln2_w"], p["ln2_b"], p["fc1_w"], p["fc1_b"], p["fc2_w"], p["fc2_b"],
            p["norm_w"], p["norm_b"], p["pool"])
    return pl.pallas_call(
        vit_fused_kernel,
        out_shape=jax.ShapeDtypeStruct((B * T, EMBED), jnp.float32),
        in_specs=[pl.BlockSpec(memory_space=pltpu.MemorySpace.VMEM) for _ in args],
        out_specs=pl.BlockSpec(memory_space=pltpu.MemorySpace.VMEM),
    )(*args)


# ---------------- host-side glue (plain JAX / numpy) ----------------
def get_sinusoid_encoding_table(n_position, d_hid):
    def angle_vec(position):
        return [position / np.power(10000, 2 * (j // 2) / d_hid) for j in range(d_hid)]
    tbl = np.array([angle_vec(p) for p in range(n_position)])
    tbl[:, 0::2] = np.sin(tbl[:, 0::2])
    tbl[:, 1::2] = np.cos(tbl[:, 1::2])
    return jnp.asarray(tbl, dtype=jnp.float32)      # (N, C)


def extract_patches(x):
    # x: (B, C_in, F, H, W) -> (B*N_TOK, PATCH_DIM); channel-major within each
    # patch (C, tubelet, ph, pw), matching the Conv3d weight layout; token order
    # is t-major (t, hp, wp), matching x.flatten(2).transpose(1, 2).
    xb = x.reshape(B, IN_CHANS, T, TUBELET, GRID, PATCH, GRID, PATCH)
    xb = xb.transpose(0, 2, 4, 6, 1, 3, 5, 7)        # (B, T, Hp, Wp, C, tub, ph, pw)
    return xb.reshape(B * N_TOK, PATCH_DIM)


def _pool_matrix():
    # (B*T, B*N_TOK): row (b, t) averages the HW spatial tokens of frame t in batch b.
    pm = np.zeros((B * T, BN), np.float32)
    for b in range(B):
        for t in range(T):
            pm[b * T + t, b * N_TOK + t * HW: b * N_TOK + (t + 1) * HW] = 1.0 / HW
    return jnp.asarray(pm)


def init_params(key):
    std = 0.02
    bf16 = jnp.bfloat16
    keys = jax.random.split(key, 2 + DEPTH)
    conv_w = jax.random.normal(keys[0], (EMBED, IN_CHANS, TUBELET, PATCH, PATCH),
                               jnp.float32) * std
    conv_b = jax.random.normal(keys[1], (EMBED,), jnp.float32) * std

    ln1_w, ln1_b, wq, wk, wv, proj_w, proj_b = [], [], [], [], [], [], []
    ln2_w, ln2_b, fc1_w, fc1_b, fc2_w, fc2_b = [], [], [], [], [], []
    for d in range(DEPTH):
        ks = jax.random.split(keys[2 + d], 4)
        qkvw = jax.random.normal(ks[0], (EMBED, 3 * EMBED), jnp.float32) * std
        # pre-split q/k/v per head (DEPTH, HEADS, EMBED, HEAD_DIM); fold the
        # softmax scale into the q weights (one-time, host side).
        qw = (qkvw[:, :EMBED] * SCALE).reshape(EMBED, HEADS, HEAD_DIM).transpose(1, 0, 2)
        kw = qkvw[:, EMBED:2 * EMBED].reshape(EMBED, HEADS, HEAD_DIM).transpose(1, 0, 2)
        vw = qkvw[:, 2 * EMBED:].reshape(EMBED, HEADS, HEAD_DIM).transpose(1, 0, 2)
        pw = jax.random.normal(ks[1], (EMBED, EMBED), jnp.float32) * std

        ln1_w.append(jnp.ones((1, EMBED), jnp.float32))
        ln1_b.append(jnp.zeros((1, EMBED), jnp.float32))
        wq.append(qw); wk.append(kw); wv.append(vw)
        proj_w.append(pw)                               # rows head-major == concat(heads)
        proj_b.append(jnp.zeros((1, EMBED), jnp.float32))
        ln2_w.append(jnp.ones((1, EMBED), jnp.float32))
        ln2_b.append(jnp.zeros((1, EMBED), jnp.float32))
        fc1_w.append(jax.random.normal(ks[2], (EMBED, HIDDEN), jnp.float32) * std)
        fc1_b.append(jnp.zeros((1, HIDDEN), jnp.float32))
        fc2_w.append(jax.random.normal(ks[3], (HIDDEN, EMBED), jnp.float32) * std)
        fc2_b.append(jnp.zeros((1, EMBED), jnp.float32))

    # interpolate_pos_embed_online is the identity here (input spatial size ==
    # module grid_size), so the raw sinusoid table is used, tiled over the batch.
    pos = jnp.tile(get_sinusoid_encoding_table(N_TOK, EMBED), (B, 1))   # (B*N, C)

    return dict(
        # MXU-feeding weights stored in bf16 (f32 accumulation in-kernel);
        # biases / LN params / pos / pool kept f32.
        w_pe=conv_w.reshape(EMBED, PATCH_DIM).T.astype(bf16),     # (PATCH_DIM, EMBED)
        b_pe=conv_b.reshape(1, EMBED),
        pos=pos,
        ln1_w=jnp.stack(ln1_w), ln1_b=jnp.stack(ln1_b),
        wq=jnp.stack(wq).astype(bf16),                            # (DEPTH, H, EMBED, Dh)
        wk=jnp.stack(wk).astype(bf16),
        wv=jnp.stack(wv).astype(bf16),
        proj_w=jnp.stack(proj_w).astype(bf16),                    # (DEPTH, EMBED, EMBED)
        proj_b=jnp.stack(proj_b),
        ln2_w=jnp.stack(ln2_w), ln2_b=jnp.stack(ln2_b),
        fc1_w=jnp.stack(fc1_w).astype(bf16), fc1_b=jnp.stack(fc1_b),
        fc2_w=jnp.stack(fc2_w).astype(bf16), fc2_b=jnp.stack(fc2_b),
        norm_w=jnp.ones((1, EMBED), jnp.float32),
        norm_b=jnp.zeros((1, EMBED), jnp.float32),
        pool=_pool_matrix(),
    )


@jax.jit
def vit_forward(x, sgn_lengths, params):
    patches = extract_patches(x)                               # (B*N, PATCH_DIM)
    sgn = run_fused_vit(patches, params).reshape(B, T, EMBED)  # (B, T, EMBED)

    # Dropout / DropPath are identity (drop_rate = drop_path_rate = 0, eval mode).
    valid_len_out = jnp.floor(sgn_lengths / TUBELET).astype(jnp.int32)
    sgn_mask = (jnp.arange(T, dtype=jnp.int32)[None, None, :]
                < valid_len_out[:, None, None])
    # TODO(synk): `decode` (TF CTC beam search) is host-side post-processing with
    # no Pallas equivalent; omitted.
    return {"sgn": sgn, "sgn_mask": [sgn_mask], "valid_len_out": [valid_len_out]}


# ---------------- main ----------------
if __name__ == "__main__":
    key = jax.random.PRNGKey(0)
    k_x, k_p = jax.random.split(key)

    x = jax.random.normal(k_x, (B, IN_CHANS, FRAMES, IMG, IMG), jnp.float32)
    sgn_lengths = jnp.array([4.0, 3.0], jnp.float32)

    params = init_params(k_p)
    out = vit_forward(x, sgn_lengths, params)

    jax.block_until_ready(out["sgn"])
    jax.block_until_ready(out["sgn_mask"][0])
    jax.block_until_ready(out["valid_len_out"][0])

    assert out["sgn"].shape == (B, T, EMBED)
    assert out["sgn_mask"][0].shape == (B, 1, T)
    assert out["valid_len_out"][0].shape == (B,)
    print("KERNEL_OK")
</pallas_src>

<mosaic_0001>
module attributes {stable_mosaic.version = 11 : i64} {
  func.func @vit_fused_kernel(%arg0: memref<16x384xf32, #tpu.memory_space<vmem>>, %arg1: memref<384x32xbf16, #tpu.memory_space<vmem>>, %arg2: memref<1x32xf32, #tpu.memory_space<vmem>>, %arg3: memref<16x32xf32, #tpu.memory_space<vmem>>, %arg4: memref<2x1x32xf32, #tpu.memory_space<vmem>>, %arg5: memref<2x1x32xf32, #tpu.memory_space<vmem>>, %arg6: memref<2x4x32x8xbf16, #tpu.memory_space<vmem>>, %arg7: memref<2x4x32x8xbf16, #tpu.memory_space<vmem>>, %arg8: memref<2x4x32x8xbf16, #tpu.memory_space<vmem>>, %arg9: memref<2x32x32xbf16, #tpu.memory_space<vmem>>, %arg10: memref<2x1x32xf32, #tpu.memory_space<vmem>>, %arg11: memref<2x1x32xf32, #tpu.memory_space<vmem>>, %arg12: memref<2x1x32xf32, #tpu.memory_space<vmem>>, %arg13: memref<2x32x128xbf16, #tpu.memory_space<vmem>>, %arg14: memref<2x1x128xf32, #tpu.memory_space<vmem>>, %arg15: memref<2x128x32xbf16, #tpu.memory_space<vmem>>, %arg16: memref<2x1x32xf32, #tpu.memory_space<vmem>>, %arg17: memref<1x32xf32, #tpu.memory_space<vmem>>, %arg18: memref<1x32xf32, #tpu.memory_space<vmem>>, %arg19: memref<4x16xf32, #tpu.memory_space<vmem>>, %arg20: memref<4x32xf32, #tpu.memory_space<vmem>>) attributes {dimension_semantics = [], scalar_prefetch = 0 : i64, scratch_operands = 0 : i64, tpu.core_type = #tpu.core_type<tc>} {
    %c0 = arith.constant 0 : index
    %c0_0 = arith.constant 0 : index
    %0 = vector.load %arg0[%c0, %c0_0] : memref<16x384xf32, #tpu.memory_space<vmem>>, vector<16x384xf32>
    %1 = arith.truncf %0 : vector<16x384xf32> to vector<16x384xbf16>
    %c0_1 = arith.constant 0 : index
    %c0_2 = arith.constant 0 : index
    %2 = vector.load %arg1[%c0_1, %c0_2] : memref<384x32xbf16, #tpu.memory_space<vmem>>, vector<384x32xbf16>
    %cst = arith.constant dense<0.000000e+00> : vector<16x32xf32>
    %3 = tpu.matmul %1, %2, %cst {dimension_numbers = #tpu.dot_dimension_numbers<[1], [0], [0], [1], [0, 0, 1, 1], [], []>} : vector<16x384xbf16>, vector<384x32xbf16>, vector<16x32xf32> -> vector<16x32xf32>
    %c0_3 = arith.constant 0 : index
    %c0_4 = arith.constant 0 : index
    %4 = vector.load %arg2[%c0_3, %c0_4] : memref<1x32xf32, #tpu.memory_space<vmem>>, vector<1x32xf32>
    %5 = vector.broadcast %4 : vector<1x32xf32> to vector<16x32xf32>
    %6 = arith.addf %3, %5 : vector<16x32xf32>
    %c0_5 = arith.constant 0 : index
    %c0_6 = arith.constant 0 : index
    %7 = vector.load %arg3[%c0_5, %c0_6] : memref<16x32xf32, #tpu.memory_space<vmem>>, vector<16x32xf32>
    %8 = arith.addf %6, %7 : vector<16x32xf32>
    %c0_7 = arith.constant 0 : index
    %c0_8 = arith.constant 0 : index
    %c0_9 = arith.constant 0 : index
    %9 = vector.load %arg4[%c0_7, %c0_8, %c0_9] : memref<2x1x32xf32, #tpu.memory_space<vmem>>, vector<1x1x32xf32>
    %10 = vector.shape_cast %9 : vector<1x1x32xf32> to vector<1x32xf32>
    %c0_10 = arith.constant 0 : index
    %c0_11 = arith.constant 0 : index
    %c0_12 = arith.constant 0 : index
    %11 = vector.load %arg5[%c0_10, %c0_11, %c0_12] : memref<2x1x32xf32, #tpu.memory_space<vmem>>, vector<1x1x32xf32>
    %12 = vector.shape_cast %11 : vector<1x1x32xf32> to vector<1x32xf32>
    %cst_13 = arith.constant dense<0.000000e+00> : vector<16xf32>
    %13 = vector.multi_reduction <add>, %8, %cst_13 [1] : vector<16x32xf32> to vector<16xf32>
    %14 = vector.shape_cast %13 : vector<16xf32> to vector<16x1xf32>
    %cst_14 = arith.constant 3.200000e+01 : f32
    %15 = vector.broadcast %cst_14 : f32 to vector<16x1xf32>
    %16 = arith.divf %14, %15 : vector<16x1xf32>
    %17 = vector.broadcast %16 : vector<16x1xf32> to vector<16x32xf32>
    %18 = arith.subf %8, %17 : vector<16x32xf32>
    %19 = arith.mulf %18, %18 : vector<16x32xf32>
    %cst_15 = arith.constant dense<0.000000e+00> : vector<16xf32>
    %20 = vector.multi_reduction <add>, %19, %cst_15 [1] : vector<16x32xf32> to vector<16xf32>
    %21 = vector.shape_cast %20 : vector<16xf32> to vector<16x1xf32>
    %cst_16 = arith.constant 3.200000e+01 : f32
    %22 = vector.broadcast %cst_16 : f32 to vector<16x1xf32>
    %23 = arith.divf %21, %22 : vector<16x1xf32>
    %24 = vector.broadcast %16 : vector<16x1xf32> to vector<16x32xf32>
    %25 = arith.subf %8, %24 : vector<16x32xf32>
    %cst_17 = arith.constant 9.99999974E-6 : f32
    %26 = vector.broadcast %cst_17 : f32 to vector<16x1xf32>
    %27 = arith.addf %23, %26 : vector<16x1xf32>
    %28 = math.rsqrt %27 : vector<16x1xf32>
    %29 = vector.broadcast %28 : vector<16x1xf32> to vector<16x32xf32>
    %30 = arith.mulf %25, %29 : vector<16x32xf32>
    %31 = vector.broadcast %10 : vector<1x32xf32> to vector<16x32xf32>
    %32 = arith.mulf %30, %31 : vector<16x32xf32>
    %33 = vector.broadcast %12 : vector<1x32xf32> to vector<16x32xf32>
    %34 = arith.addf %32, %33 : vector<16x32xf32>
    %35 = arith.truncf %34 : vector<16x32xf32> to vector<16x32xbf16>
    %c0_18 = arith.constant 0 : index
    %c0_19 = arith.constant 0 : index
    %c0_20 = arith.constant 0 : index
    %c0_21 = arith.constant 0 : index
    %36 = vector.load %arg6[%c0_18, %c0_19, %c0_20, %c0_21] : memref<2x4x32x8xbf16, #tpu.memory_space<vmem>>, vector<1x1x32x8xbf16>
    %37 = vector.shape_cast %36 : vector<1x1x32x8xbf16> to vector<32x8xbf16>
    %cst_22 = arith.constant dense<0.000000e+00> : vector<16x8xf32>
    %38 = tpu.matmul %35, %37, %cst_22 {dimension_numbers = #tpu.dot_dimension_numbers<[1], [0], [0], [1], [0, 0, 1, 1], [], []>} : vector<16x32xbf16>, vector<32x8xbf16>, vector<16x8xf32> -> vector<16x8xf32>
    %39 = vector.shape_cast %38 : vector<16x8xf32> to vector<2x8x8xf32>
    %c0_23 = arith.constant 0 : index
    %c0_24 = arith.constant 0 : index
    %c0_25 = arith.constant 0 : index
    %c0_26 = arith.constant 0 : index
    %40 = vector.load %arg7[%c0_23, %c0_24, %c0_25, %c0_26] : memref<2x4x32x8xbf16, #tpu.memory_space<vmem>>, vector<1x1x32x8xbf16>
    %41 = vector.shape_cast %40 : vector<1x1x32x8xbf16> to vector<32x8xbf16>
    %cst_27 = arith.constant dense<0.000000e+00> : vector<16x8xf32>
    %42 = tpu.matmul %35, %41, %cst_27 {dimension_numbers = #tpu.dot_dimension_numbers<[1], [0], [0], [1], [0, 0, 1, 1], [], []>} : vector<16x32xbf16>, vector<32x8xbf16>, vector<16x8xf32> -> vector<16x8xf32>
    %43 = vector.shape_cast %42 : vector<16x8xf32> to vector<2x8x8xf32>
    %c0_28 = arith.constant 0 : index
    %c0_29 = arith.constant 0 : index
    %c0_30 = arith.constant 0 : index
    %c0_31 = arith.constant 0 : index
    %44 = vector.load %arg8[%c0_28, %c0_29, %c0_30, %c0_31] : memref<2x4x32x8xbf16, #tpu.memory_space<vmem>>, vector<1x1x32x8xbf16>
    %45 = vector.shape_cast %44 : vector<1x1x32x8xbf16> to vector<32x8xbf16>
    %cst_32 = arith.constant dense<0.000000e+00> : vector<16x8xf32>
    %46 = tpu.matmul %35, %45, %cst_32 {dimension_numbers = #tpu.dot_dimension_numbers<[1], [0], [0], [1], [0, 0, 1, 1], [], []>} : vector<16x32xbf16>, vector<32x8xbf16>, vector<16x8xf32> -> vector<16x8xf32>
    %47 = vector.shape_cast %46 : vector<16x8xf32> to vector<2x8x8xf32>
    %c0_33 = arith.constant 0 : index
    %c1 = arith.constant 1 : index
    %c0_34 = arith.constant 0 : index
    %c0_35 = arith.constant 0 : index
    %48 = vector.load %arg6[%c0_33, %c1, %c0_34, %c0_35] : memref<2x4x32x8xbf16, #tpu.memory_space<vmem>>, vector<1x1x32x8xbf16>
    %49 = vector.shape_cast %48 : vector<1x1x32x8xbf16> to vector<32x8xbf16>
    %cst_36 = arith.constant dense<0.000000e+00> : vector<16x8xf32>
    %50 = tpu.matmul %35, %49, %cst_36 {dimension_numbers = #tpu.dot_dimension_numbers<[1], [0], [0], [1], [0, 0, 1, 1], [], []>} : vector<16x32xbf16>, vector<32x8xbf16>, vector<16x8xf32> -> vector<16x8xf32>
    %51 = vector.shape_cast %50 : vector<16x8xf32> to vector<2x8x8xf32>
    %c0_37 = arith.constant 0 : index
    %c1_38 = arith.constant 1 : index
    %c0_39 = arith.constant 0 : index
    %c0_40 = arith.constant 0 : index
    %52 = vector.load %arg7[%c0_37, %c1_38, %c0_39, %c0_40] : memref<2x4x32x8xbf16, #tpu.memory_space<vmem>>, vector<1x1x32x8xbf16>
    %53 = vector.shape_cast %52 : vector<1x1x32x8xbf16> to vector<32x8xbf16>
    %cst_41 = arith.constant dense<0.000000e+00> : vector<16x8xf32>
    %54 = tpu.matmul %35, %53, %cst_41 {dimension_numbers = #tpu.dot_dimension_numbers<[1], [0], [0], [1], [0, 0, 1, 1], [], []>} : vector<16x32xbf16>, vector<32x8xbf16>, vector<16x8xf32> -> vector<16x8xf32>
    %55 = vector.shape_cast %54 : vector<16x8xf32> to vector<2x8x8xf32>
    %c0_42 = arith.constant 0 : index
    %c1_43 = arith.constant 1 : index
    %c0_44 = arith.constant 0 : index
    %c0_45 = arith.constant 0 : index
    %56 = vector.load %arg8[%c0_42, %c1_43, %c0_44, %c0_45] : memref<2x4x32x8xbf16, #tpu.memory_space<vmem>>, vector<1x1x32x8xbf16>
    %57 = vector.shape_cast %56 : vector<1x1x32x8xbf16> to vector<32x8xbf16>
    %cst_46 = arith.constant dense<0.000000e+00> : vector<16x8xf32>
    %58 = tpu.matmul %35, %57, %cst_46 {dimension_numbers = #tpu.dot_dimension_numbers<[1], [0], [0], [1], [0, 0, 1, 1], [], []>} : vector<16x32xbf16>, vector<32x8xbf16>, vector<16x8xf32> -> vector<16x8xf32>
    %59 = vector.shape_cast %58 : vector<16x8xf32> to vector<2x8x8xf32>
    %c0_47 = arith.constant 0 : index
    %c2 = arith.constant 2 : index
    %c0_48 = arith.constant 0 : index
    %c0_49 = arith.constant 0 : index
    %60 = vector.load %arg6[%c0_47, %c2, %c0_48, %c0_49] : memref<2x4x32x8xbf16, #tpu.memory_space<vmem>>, vector<1x1x32x8xbf16>
    %61 = vector.shape_cast %60 : vector<1x1x32x8xbf16> to vector<32x8xbf16>
    %cst_50 = arith.constant dense<0.000000e+00> : vector<16x8xf32>
    %62 = tpu.matmul %35, %61, %cst_50 {dimension_numbers = #tpu.dot_dimension_numbers<[1], [0], [0], [1], [0, 0, 1, 1], [], []>} : vector<16x32xbf16>, vector<32x8xbf16>, vector<16x8xf32> -> vector<16x8xf32>
    %63 = vector.shape_cast %62 : vector<16x8xf32> to vector<2x8x8xf32>
    %c0_51 = arith.constant 0 : index
    %c2_52 = arith.constant 2 : index
    %c0_53 = arith.constant 0 : index
    %c0_54 = arith.constant 0 : index
    %64 = vector.load %arg7[%c0_51, %c2_52, %c0_53, %c0_54] : memref<2x4x32x8xbf16, #tpu.memory_space<vmem>>, vector<1x1x32x8xbf16>
    %65 = vector.shape_cast %64 : vector<1x1x32x8xbf16> to vector<32x8xbf16>
    %cst_55 = arith.constant dense<0.000000e+00> : vector<16x8xf32>
    %66 = tpu.matmul %35, %65, %cst_55 {dimension_numbers = #tpu.dot_dimension_numbers<[1], [0], [0], [1], [0, 0, 1, 1], [], []>} : vector<16x32xbf16>, vector<32x8xbf16>, vector<16x8xf32> -> vector<16x8xf32>
    %67 = vector.shape_cast %66 : vector<16x8xf32> to vector<2x8x8xf32>
    %c0_56 = arith.constant 0 : index
    %c2_57 = arith.constant 2 : index
    %c0_58 = arith.constant 0 : index
    %c0_59 = arith.constant 0 : index
    %68 = vector.load %arg8[%c0_56, %c2_57, %c0_58, %c0_59] : memref<2x4x32x8xbf16, #tpu.memory_space<vmem>>, vector<1x1x32x8xbf16>
    %69 = vector.shape_cast %68 : vector<1x1x32x8xbf16> to vector<32x8xbf16>
    %cst_60 = arith.constant dense<0.000000e+00> : vector<16x8xf32>
    %70 = tpu.matmul %35, %69, %cst_60 {dimension_numbers = #tpu.dot_dimension_numbers<[1], [0], [0], [1], [0, 0, 1, 1], [], []>} : vector<16x32xbf16>, vector<32x8xbf16>, vector<16x8xf32> -> vector<16x8xf32>
    %71 = vector.shape_cast %70 : vector<16x8xf32> to vector<2x8x8xf32>
    %c0_61 = arith.constant 0 : index
    %c3 = arith.constant 3 : index
    %c0_62 = arith.constant 0 : index
    %c0_63 = arith.constant 0 : index
    %72 = vector.load %arg6[%c0_61, %c3, %c0_62, %c0_63] : memref<2x4x32x8xbf16, #tpu.memory_space<vmem>>, vector<1x1x32x8xbf16>
    %73 = vector.shape_cast %72 : vector<1x1x32x8xbf16> to vector<32x8xbf16>
    %cst_64 = arith.constant dense<0.000000e+00> : vector<16x8xf32>
    %74 = tpu.matmul %35, %73, %cst_64 {dimension_numbers = #tpu.dot_dimension_numbers<[1], [0], [0], [1], [0, 0, 1, 1], [], []>} : vector<16x32xbf16>, vector<32x8xbf16>, vector<16x8xf32> -> vector<16x8xf32>
    %75 = vector.shape_cast %74 : vector<16x8xf32> to vector<2x8x8xf32>
    %c0_65 = arith.constant 0 : index
    %c3_66 = arith.constant 3 : index
    %c0_67 = arith.constant 0 : index
    %c0_68 = arith.constant 0 : index
    %76 = vector.load %arg7[%c0_65, %c3_66, %c0_67, %c0_68] : memref<2x4x32x8xbf16, #tpu.memory_space<vmem>>, vector<1x1x32x8xbf16>
    %77 = vector.shape_cast %76 : vector<1x1x32x8xbf16> to vector<32x8xbf16>
    %cst_69 = arith.constant dense<0.000000e+00> : vector<16x8xf32>
    %78 = tpu.matmul %35, %77, %cst_69 {dimension_numbers = #tpu.dot_dimension_numbers<[1], [0], [0], [1], [0, 0, 1, 1], [], []>} : vector<16x32xbf16>, vector<32x8xbf16>, vector<16x8xf32> -> vector<16x8xf32>
    %79 = vector.shape_cast %78 : vector<16x8xf32> to vector<2x8x8xf32>
    %c0_70 = arith.constant 0 : index
    %c3_71 = arith.constant 3 : index
    %c0_72 = arith.constant 0 : index
    %c0_73 = arith.constant 0 : index
    %80 = vector.load %arg8[%c0_70, %c3_71, %c0_72, %c0_73] : memref<2x4x32x8xbf16, #tpu.memory_space<vmem>>, vector<1x1x32x8xbf16>
    %81 = vector.shape_cast %80 : vector<1x1x32x8xbf16> to vector<32x8xbf16>
    %cst_74 = arith.constant dense<0.000000e+00> : vector<16x8xf32>
    %82 = tpu.matmul %35, %81, %cst_74 {dimension_numbers = #tpu.dot_dimension_numbers<[1], [0], [0], [1], [0, 0, 1, 1], [], []>} : vector<16x32xbf16>, vector<32x8xbf16>, vector<16x8xf32> -> vector<16x8xf32>
    %83 = vector.shape_cast %82 : vector<16x8xf32> to vector<2x8x8xf32>
    %84 = tpu.concatenate %39, %51, %63, %75 in 0 : vector<2x8x8xf32>, vector<2x8x8xf32>, vector<2x8x8xf32>, vector<2x8x8xf32> -> vector<8x8x8xf32>
    %85 = arith.truncf %84 : vector<8x8x8xf32> to vector<8x8x8xbf16>
    %86 = tpu.concatenate %43, %55, %67, %79 in 0 : vector<2x8x8xf32>, vector<2x8x8xf32>, vector<2x8x8xf32>, vector<2x8x8xf32> -> vector<8x8x8xf32>
    %87 = arith.truncf %86 : vector<8x8x8xf32> to vector<8x8x8xbf16>
    %88 = tpu.concatenate %47, %59, %71, %83 in 0 : vector<2x8x8xf32>, vector<2x8x8xf32>, vector<2x8x8xf32>, vector<2x8x8xf32> -> vector<8x8x8xf32>
    %89 = arith.truncf %88 : vector<8x8x8xf32> to vector<8x8x8xbf16>
    "tpu.trace_start"() <{level = 10 : i32, message = "xqd,xkd->xqk"}> : () -> ()
    %cst_75 = arith.constant dense<0.000000e+00> : vector<8x8x8xf32>
    %90 = tpu.matmul %85, %87, %cst_75 {dimension_numbers = #tpu.dot_dimension_numbers<[2], [2], [1], [1], [0, 0, 0, 1, 1, 1], [0], [0]>} : vector<8x8x8xbf16>, vector<8x8x8xbf16>, vector<8x8x8xf32> -> vector<8x8x8xf32>
    "tpu.trace_stop"() : () -> ()
    %cst_76 = arith.constant dense<0xFF800000> : vector<8x8xf32>
    %91 = vector.multi_reduction <maximumf>, %90, %cst_76 [2] : vector<8x8x8xf32> to vector<8x8xf32>
    %92 = vector.shape_cast %91 : vector<8x8xf32> to vector<8x8x1xf32>
    %93 = vector.broadcast %92 : vector<8x8x1xf32> to vector<8x8x8xf32>
    %94 = arith.subf %90, %93 : vector<8x8x8xf32>
    %95 = math.exp %94 : vector<8x8x8xf32>
    %cst_77 = arith.constant dense<0.000000e+00> : vector<8x8xf32>
    %96 = vector.multi_reduction <add>, %95, %cst_77 [2] : vector<8x8x8xf32> to vector<8x8xf32>
    %97 = vector.shape_cast %96 : vector<8x8xf32> to vector<8x8x1xf32>
    %98 = tpu.reciprocal %97 {approx = true} : vector<8x8x1xf32> -> vector<8x8x1xf32>
    %99 = arith.truncf %95 : vector<8x8x8xf32> to vector<8x8x8xbf16>
    "tpu.trace_start"() <{level = 10 : i32, message = "xqk,xkd->xqd"}> : () -> ()
    %cst_78 = arith.constant dense<0.000000e+00> : vector<8x8x8xf32>
    %100 = tpu.matmul %99, %89, %cst_78 {dimension_numbers = #tpu.dot_dimension_numbers<[2], [1], [1], [2], [0, 0, 0, 1, 1, 2], [0], [0]>} : vector<8x8x8xbf16>, vector<8x8x8xbf16>, vector<8x8x8xf32> -> vector<8x8x8xf32>
    "tpu.trace_stop"() : () -> ()
    %101 = vector.broadcast %98 : vector<8x8x1xf32> to vector<8x8x8xf32>
    %102 = arith.mulf %100, %101 : vector<8x8x8xf32>
    %103 = vector.extract_strided_slice %102 {offsets = [0, 0, 0], sizes = [2, 8, 8], strides = [1, 1, 1]} : vector<8x8x8xf32> to vector<2x8x8xf32>
    %104 = vector.shape_cast %103 : vector<2x8x8xf32> to vector<16x8xf32>
    %105 = vector.extract_strided_slice %102 {offsets = [2, 0, 0], sizes = [2, 8, 8], strides = [1, 1, 1]} : vector<8x8x8xf32> to vector<2x8x8xf32>
    %106 = vector.shape_cast %105 : vector<2x8x8xf32> to vector<16x8xf32>
    %107 = vector.extract_strided_slice %102 {offsets = [4, 0, 0], sizes = [2, 8, 8], strides = [1, 1, 1]} : vector<8x8x8xf32> to vector<2x8x8xf32>
    %108 = vector.shape_cast %107 : vector<2x8x8xf32> to vector<16x8xf32>
    %109 = vector.extract_strided_slice %102 {offsets = [6, 0, 0], sizes = [2, 8, 8], strides = [1, 1, 1]} : vector<8x8x8xf32> to vector<2x8x8xf32>
    %110 = vector.shape_cast %109 : vector<2x8x8xf32> to vector<16x8xf32>
    %111 = tpu.concatenate %104, %106, %108, %110 in 1 : vector<16x8xf32>, vector<16x8xf32>, vector<16x8xf32>, vector<16x8xf32> -> vector<16x32xf32>
    %112 = arith.truncf %111 : vector<16x32xf32> to vector<16x32xbf16>
    %c0_79 = arith.constant 0 : index
    %c0_80 = arith.constant 0 : index
    %c0_81 = arith.constant 0 : index
    %113 = vector.load %arg9[%c0_79, %c0_80, %c0_81] : memref<2x32x32xbf16, #tpu.memory_space<vmem>>, vector<1x32x32xbf16>
    %114 = vector.shape_cast %113 : vector<1x32x32xbf16> to vector<32x32xbf16>
    %cst_82 = arith.constant dense<0.000000e+00> : vector<16x32xf32>
    %115 = tpu.matmul %112, %114, %cst_82 {dimension_numbers = #tpu.dot_dimension_numbers<[1], [0], [0], [1], [0, 0, 1, 1], [], []>} : vector<16x32xbf16>, vector<32x32xbf16>, vector<16x32xf32> -> vector<16x32xf32>
    %116 = arith.addf %8, %115 : vector<16x32xf32>
    %c0_83 = arith.constant 0 : index
    %c0_84 = arith.constant 0 : index
    %c0_85 = arith.constant 0 : index
    %117 = vector.load %arg10[%c0_83, %c0_84, %c0_85] : memref<2x1x32xf32, #tpu.memory_space<vmem>>, vector<1x1x32xf32>
    %118 = vector.shape_cast %117 : vector<1x1x32xf32> to vector<1x32xf32>
    %119 = vector.broadcast %118 : vector<1x32xf32> to vector<16x32xf32>
    %120 = arith.addf %116, %119 : vector<16x32xf32>
    %c0_86 = arith.constant 0 : index
    %c0_87 = arith.constant 0 : index
    %c0_88 = arith.constant 0 : index
    %121 = vector.load %arg11[%c0_86, %c0_87, %c0_88] : memref<2x1x32xf32, #tpu.memory_space<vmem>>, vector<1x1x32xf32>
    %122 = vector.shape_cast %121 : vector<1x1x32xf32> to vector<1x32xf32>
    %c0_89 = arith.constant 0 : index
    %c0_90 = arith.constant 0 : index
    %c0_91 = arith.constant 0 : index
    %123 = vector.load %arg12[%c0_89, %c0_90, %c0_91] : memref<2x1x32xf32, #tpu.memory_space<vmem>>, vector<1x1x32xf32>
    %124 = vector.shape_cast %123 : vector<1x1x32xf32> to vector<1x32xf32>
    %cst_92 = arith.constant dense<0.000000e+00> : vector<16xf32>
    %125 = vector.multi_reduction <add>, %120, %cst_92 [1] : vector<16x32xf32> to vector<16xf32>
    %126 = vector.shape_cast %125 : vector<16xf32> to vector<16x1xf32>
    %cst_93 = arith.constant 3.200000e+01 : f32
    %127 = vector.broadcast %cst_93 : f32 to vector<16x1xf32>
    %128 = arith.divf %126, %127 : vector<16x1xf32>
    %129 = vector.broadcast %128 : vector<16x1xf32> to vector<16x32xf32>
    %130 = arith.subf %120, %129 : vector<16x32xf32>
    %131 = arith.mulf %130, %130 : vector<16x32xf32>
    %cst_94 = arith.constant dense<0.000000e+00> : vector<16xf32>
    %132 = vector.multi_reduction <add>, %131, %cst_94 [1] : vector<16x32xf32> to vector<16xf32>
    %133 = vector.shape_cast %132 : vector<16xf32> to vector<16x1xf32>
    %cst_95 = arith.constant 3.200000e+01 : f32
    %134 = vector.broadcast %cst_95 : f32 to vector<16x1xf32>
    %135 = arith.divf %133, %134 : vector<16x1xf32>
    %136 = vector.broadcast %128 : vector<16x1xf32> to vector<16x32xf32>
    %137 = arith.subf %120, %136 : vector<16x32xf32>
    %cst_96 = arith.constant 9.99999974E-6 : f32
    %138 = vector.broadcast %cst_96 : f32 to vector<16x1xf32>
    %139 = arith.addf %135, %138 : vector<16x1xf32>
    %140 = math.rsqrt %139 : vector<16x1xf32>
    %141 = vector.broadcast %140 : vector<16x1xf32> to vector<16x32xf32>
    %142 = arith.mulf %137, %141 : vector<16x32xf32>
    %143 = vector.broadcast %122 : vector<1x32xf32> to vector<16x32xf32>
    %144 = arith.mulf %142, %143 : vector<16x32xf32>
    %145 = vector.broadcast %124 : vector<1x32xf32> to vector<16x32xf32>
    %146 = arith.addf %144, %145 : vector<16x32xf32>
    %147 = arith.truncf %146 : vector<16x32xf32> to vector<16x32xbf16>
    %c0_97 = arith.constant 0 : index
    %c0_98 = arith.constant 0 : index
    %c0_99 = arith.constant 0 : index
    %148 = vector.load %arg13[%c0_97, %c0_98, %c0_99] : memref<2x32x128xbf16, #tpu.memory_space<vmem>>, vector<1x32x128xbf16>
    %149 = vector.shape_cast %148 : vector<1x32x128xbf16> to vector<32x128xbf16>
    %cst_100 = arith.constant dense<0.000000e+00> : vector<16x128xf32>
    %150 = tpu.matmul %147, %149, %cst_100 {dimension_numbers = #tpu.dot_dimension_numbers<[1], [0], [0], [1], [0, 0, 1, 1], [], []>} : vector<16x32xbf16>, vector<32x128xbf16>, vector<16x128xf32> -> vector<16x128xf32>
    %c0_101 = arith.constant 0 : index
    %c0_102 = arith.constant 0 : index
    %c0_103 = arith.constant 0 : index
    %151 = vector.load %arg14[%c0_101, %c0_102, %c0_103] : memref<2x1x128xf32, #tpu.memory_space<vmem>>, vector<1x1x128xf32>
    %152 = vector.shape_cast %151 : vector<1x1x128xf32> to vector<1x128xf32>
    %153 = vector.broadcast %152 : vector<1x128xf32> to vector<16x128xf32>
    %154 = arith.addf %150, %153 : vector<16x128xf32>
    %cst_104 = arith.constant 5.000000e-01 : f32
    %155 = vector.broadcast %cst_104 : f32 to vector<16x128xf32>
    %156 = arith.mulf %155, %154 : vector<16x128xf32>
    %cst_105 = arith.constant 0.707106769 : f32
    %157 = vector.broadcast %cst_105 : f32 to vector<16x128xf32>
    %158 = arith.mulf %154, %157 : vector<16x128xf32>
    %159 = math.erf %158 : vector<16x128xf32>
    %cst_106 = arith.constant 1.000000e+00 : f32
    %160 = vector.broadcast %cst_106 : f32 to vector<16x128xf32>
    %161 = arith.addf %160, %159 : vector<16x128xf32>
    %162 = arith.mulf %156, %161 : vector<16x128xf32>
    %163 = arith.truncf %162 : vector<16x128xf32> to vector<16x128xbf16>
    %c0_107 = arith.constant 0 : index
    %c0_108 = arith.constant 0 : index
    %c0_109 = arith.constant 0 : index
    %164 = vector.load %arg15[%c0_107, %c0_108, %c0_109] : memref<2x128x32xbf16, #tpu.memory_space<vmem>>, vector<1x128x32xbf16>
    %165 = vector.shape_cast %164 : vector<1x128x32xbf16> to vector<128x32xbf16>
    %cst_110 = arith.constant dense<0.000000e+00> : vector<16x32xf32>
    %166 = tpu.matmul %163, %165, %cst_110 {dimension_numbers = #tpu.dot_dimension_numbers<[1], [0], [0], [1], [0, 0, 1, 1], [], []>} : vector<16x128xbf16>, vector<128x32xbf16>, vector<16x32xf32> -> vector<16x32xf32>
    %167 = arith.addf %120, %166 : vector<16x32xf32>
    %c0_111 = arith.constant 0 : index
    %c0_112 = arith.constant 0 : index
    %c0_113 = arith.constant 0 : index
    %168 = vector.load %arg16[%c0_111, %c0_112, %c0_113] : memref<2x1x32xf32, #tpu.memory_space<vmem>>, vector<1x1x32xf32>
    %169 = vector.shape_cast %168 : vector<1x1x32xf32> to vector<1x32xf32>
    %170 = vector.broadcast %169 : vector<1x32xf32> to vector<16x32xf32>
    %171 = arith.addf %167, %170 : vector<16x32xf32>
    %c1_114 = arith.constant 1 : index
    %c0_115 = arith.constant 0 : index
    %c0_116 = arith.constant 0 : index
    %172 = vector.load %arg4[%c1_114, %c0_115, %c0_116] : memref<2x1x32xf32, #tpu.memory_space<vmem>>, vector<1x1x32xf32>
    %173 = vector.shape_cast %172 : vector<1x1x32xf32> to vector<1x32xf32>
    %c1_117 = arith.constant 1 : index
    %c0_118 = arith.constant 0 : index
    %c0_119 = arith.constant 0 : index
    %174 = vector.load %arg5[%c1_117, %c0_118, %c0_119] : memref<2x1x32xf32, #tpu.memory_space<vmem>>, vector<1x1x32xf32>
    %175 = vector.shape_cast %174 : vector<1x1x32xf32> to vector<1x32xf32>
    %cst_120 = arith.constant dense<0.000000e+00> : vector<16xf32>
    %176 = vector.multi_reduction <add>, %171, %cst_120 [1] : vector<16x32xf32> to vector<16xf32>
    %177 = vector.shape_cast %176 : vector<16xf32> to vector<16x1xf32>
    %cst_121 = arith.constant 3.200000e+01 : f32
    %178 = vector.broadcast %cst_121 : f32 to vector<16x1xf32>
    %179 = arith.divf %177, %178 : vector<16x1xf32>
    %180 = vector.broadcast %179 : vector<16x1xf32> to vector<16x32xf32>
    %181 = arith.subf %171, %180 : vector<16x32xf32>
    %182 = arith.mulf %181, %181 : vector<16x32xf32>
    %cst_122 = arith.constant dense<0.000000e+00> : vector<16xf32>
    %183 = vector.multi_reduction <add>, %182, %cst_122 [1] : vector<16x32xf32> to vector<16xf32>
    %184 = vector.shape_cast %183 : vector<16xf32> to vector<16x1xf32>
    %cst_123 = arith.constant 3.200000e+01 : f32
    %185 = vector.broadcast %cst_123 : f32 to vector<16x1xf32>
    %186 = arith.divf %184, %185 : vector<16x1xf32>
    %187 = vector.broadcast %179 : vector<16x1xf32> to vector<16x32xf32>
    %188 = arith.subf %171, %187 : vector<16x32xf32>
    %cst_124 = arith.constant 9.99999974E-6 : f32
    %189 = vector.broadcast %cst_124 : f32 to vector<16x1xf32>
    %190 = arith.addf %186, %189 : vector<16x1xf32>
    %191 = math.rsqrt %190 : vector<16x1xf32>
    %192 = vector.broadcast %191 : vector<16x1xf32> to vector<16x32xf32>
    %193 = arith.mulf %188, %192 : vector<16x32xf32>
    %194 = vector.broadcast %173 : vector<1x32xf32> to vector<16x32xf32>
    %195 = arith.mulf %193, %194 : vector<16x32xf32>
    %196 = vector.broadcast %175 : vector<1x32xf32> to vector<16x32xf32>
    %197 = arith.addf %195, %196 : vector<16x32xf32>
    %198 = arith.truncf %197 : vector<16x32xf32> to vector<16x32xbf16>
    %c1_125 = arith.constant 1 : index
    %c0_126 = arith.constant 0 : index
    %c0_127 = arith.constant 0 : index
    %c0_128 = arith.constant 0 : index
    %199 = vector.load %arg6[%c1_125, %c0_126, %c0_127, %c0_128] : memref<2x4x32x8xbf16, #tpu.memory_space<vmem>>, vector<1x1x32x8xbf16>
    %200 = vector.shape_cast %199 : vector<1x1x32x8xbf16> to vector<32x8xbf16>
    %cst_129 = arith.constant dense<0.000000e+00> : vector<16x8xf32>
    %201 = tpu.matmul %198, %200, %cst_129 {dimension_numbers = #tpu.dot_dimension_numbers<[1], [0], [0], [1], [0, 0, 1, 1], [], []>} : vector<16x32xbf16>, vector<32x8xbf16>, vector<16x8xf32> -> vector<16x8xf32>
    %202 = vector.shape_cast %201 : vector<16x8xf32> to vector<2x8x8xf32>
    %c1_130 = arith.constant 1 : index
    %c0_131 = arith.constant 0 : index
    %c0_132 = arith.constant 0 : index
    %c0_133 = arith.constant 0 : index
    %203 = vector.load %arg7[%c1_130, %c0_131, %c0_132, %c0_133] : memref<2x4x32x8xbf16, #tpu.memory_space<vmem>>, vector<1x1x32x8xbf16>
    %204 = vector.shape_cast %203 : vector<1x1x32x8xbf16> to vector<32x8xbf16>
    %cst_134 = arith.constant dense<0.000000e+00> : vector<16x8xf32>
    %205 = tpu.matmul %198, %204, %cst_134 {dimension_numbers = #tpu.dot_dimension_numbers<[1], [0], [0], [1], [0, 0, 1, 1], [], []>} : vector<16x32xbf16>, vector<32x8xbf16>, vector<16x8xf32> -> vector<16x8xf32>
    %206 = vector.shape_cast %205 : vector<16x8xf32> to vector<2x8x8xf32>
    %c1_135 = arith.constant 1 : index
    %c0_136 = arith.constant 0 : index
    %c0_137 = arith.constant 0 : index
    %c0_138 = arith.constant 0 : index
    %207 = vector.load %arg8[%c1_135, %c0_136, %c0_137, %c0_138] : memref<2x4x32x8xbf16, #tpu.memory_space<vmem>>, vector<1x1x32x8xbf16>
    %208 = vector.shape_cast %207 : vector<1x1x32x8xbf16> to vector<32x8xbf16>
    %cst_139 = arith.constant dense<0.000000e+00> : vector<16x8xf32>
    %209 = tpu.matmul %198, %208, %cst_139 {dimension_numbers = #tpu.dot_dimension_numbers<[1], [0], [0], [1], [0, 0, 1, 1], [], []>} : vector<16x32xbf16>, vector<32x8xbf16>, vector<16x8xf32> -> vector<16x8xf32>
    %210 = vector.shape_cast %209 : vector<16x8xf32> to vector<2x8x8xf32>
    %c1_140 = arith.constant 1 : index
    %c1_141 = arith.constant 1 : index
    %c0_142 = arith.constant 0 : index
    %c0_143 = arith.constant 0 : index
    %211 = vector.load %arg6[%c1_140, %c1_141, %c0_142, %c0_143] : memref<2x4x32x8xbf16, #tpu.memory_space<vmem>>, vector<1x1x32x8xbf16>
    %212 = vector.shape_cast %211 : vector<1x1x32x8xbf16> to vector<32x8xbf16>
    %cst_144 = arith.constant dense<0.000000e+00> : vector<16x8xf32>
    %213 = tpu.matmul %198, %212, %cst_144 {dimension_numbers = #tpu.dot_dimension_numbers<[1], [0], [0], [1], [0, 0, 1, 1], [], []>} : vector<16x32xbf16>, vector<32x8xbf16>, vector<16x8xf32> -> vector<16x8xf32>
    %214 = vector.shape_cast %213 : vector<16x8xf32> to vector<2x8x8xf32>
    %c1_145 = arith.constant 1 : index
    %c1_146 = arith.constant 1 : index
    %c0_147 = arith.constant 0 : index
    %c0_148 = arith.constant 0 : index
    %215 = vector.load %arg7[%c1_145, %c1_146, %c0_147, %c0_148] : memref<2x4x32x8xbf16, #tpu.memory_space<vmem>>, vector<1x1x32x8xbf16>
    %216 = vector.shape_cast %215 : vector<1x1x32x8xbf16> to vector<32x8xbf16>
    %cst_149 = arith.constant dense<0.000000e+00> : vector<16x8xf32>
    %217 = tpu.matmul %198, %216, %cst_149 {dimension_numbers = #tpu.dot_dimension_numbers<[1], [0], [0], [1], [0, 0, 1, 1], [], []>} : vector<16x32xbf16>, vector<32x8xbf16>, vector<16x8xf32> -> vector<16x8xf32>
    %218 = vector.shape_cast %217 : vector<16x8xf32> to vector<2x8x8xf32>
    %c1_150 = arith.constant 1 : index
    %c1_151 = arith.constant 1 : index
    %c0_152 = arith.constant 0 : index
    %c0_153 = arith.constant 0 : index
    %219 = vector.load %arg8[%c1_150, %c1_151, %c0_152, %c0_153] : memref<2x4x32x8xbf16, #tpu.memory_space<vmem>>, vector<1x1x32x8xbf16>
    %220 = vector.shape_cast %219 : vector<1x1x32x8xbf16> to vector<32x8xbf16>
    %cst_154 = arith.constant dense<0.000000e+00> : vector<16x8xf32>
    %221 = tpu.matmul %198, %220, %cst_154 {dimension_numbers = #tpu.dot_dimension_numbers<[1], [0], [0], [1], [0, 0, 1, 1], [], []>} : vector<16x32xbf16>, vector<32x8xbf16>, vector<16x8xf32> -> vector<16x8xf32>
    %222 = vector.shape_cast %221 : vector<16x8xf32> to vector<2x8x8xf32>
    %c1_155 = arith.constant 1 : index
    %c2_156 = arith.constant 2 : index
    %c0_157 = arith.constant 0 : index
    %c0_158 = arith.constant 0 : index
    %223 = vector.load %arg6[%c1_155, %c2_156, %c0_157, %c0_158] : memref<2x4x32x8xbf16, #tpu.memory_space<vmem>>, vector<1x1x32x8xbf16>
    %224 = vector.shape_cast %223 : vector<1x1x32x8xbf16> to vector<32x8xbf16>
    %cst_159 = arith.constant dense<0.000000e+00> : vector<16x8xf32>
    %225 = tpu.matmul %198, %224, %cst_159 {dimension_numbers = #tpu.dot_dimension_numbers<[1], [0], [0], [1], [0, 0, 1, 1], [], []>} : vector<16x32xbf16>, vector<32x8xbf16>, vector<16x8xf32> -> vector<16x8xf32>
    %226 = vector.shape_cast %225 : vector<16x8xf32> to vector<2x8x8xf32>
    %c1_160 = arith.constant 1 : index
    %c2_161 = arith.constant 2 : index
    %c0_162 = arith.constant 0 : index
    %c0_163 = arith.constant 0 : index
    %227 = vector.load %arg7[%c1_160, %c2_161, %c0_162, %c0_163] : memref<2x4x32x8xbf16, #tpu.memory_space<vmem>>, vector<1x1x32x8xbf16>
    %228 = vector.shape_cast %227 : vector<1x1x32x8xbf16> to vector<32x8xbf16>
    %cst_164 = arith.constant dense<0.000000e+00> : vector<16x8xf32>
    %229 = tpu.matmul %198, %228, %cst_164 {dimension_numbers = #tpu.dot_dimension_numbers<[1], [0], [0], [1], [0, 0, 1, 1], [], []>} : vector<16x32xbf16>, vector<32x8xbf16>, vector<16x8xf32> -> vector<16x8xf32>
    %230 = vector.shape_cast %229 : vector<16x8xf32> to vector<2x8x8xf32>
    %c1_165 = arith.constant 1 : index
    %c2_166 = arith.constant 2 : index
    %c0_167 = arith.constant 0 : index
    %c0_168 = arith.constant 0 : index
    %231 = vector.load %arg8[%c1_165, %c2_166, %c0_167, %c0_168] : memref<2x4x32x8xbf16, #tpu.memory_space<vmem>>, vector<1x1x32x8xbf16>
    %232 = vector.shape_cast %231 : vector<1x1x32x8xbf16> to vector<32x8xbf16>
    %cst_169 = arith.constant dense<0.000000e+00> : vector<16x8xf32>
    %233 = tpu.matmul %198, %232, %cst_169 {dimension_numbers = #tpu.dot_dimension_numbers<[1], [0], [0], [1], [0, 0, 1, 1], [], []>} : vector<16x32xbf16>, vector<32x8xbf16>, vector<16x8xf32> -> vector<16x8xf32>
    %234 = vector.shape_cast %233 : vector<16x8xf32> to vector<2x8x8xf32>
    %c1_170 = arith.constant 1 : index
    %c3_171 = arith.constant 3 : index
    %c0_172 = arith.constant 0 : index
    %c0_173 = arith.constant 0 : index
    %235 = vector.load %arg6[%c1_170, %c3_171, %c0_172, %c0_173] : memref<2x4x32x8xbf16, #tpu.memory_space<vmem>>, vector<1x1x32x8xbf16>
    %236 = vector.shape_cast %235 : vector<1x1x32x8xbf16> to vector<32x8xbf16>
    %cst_174 = arith.constant dense<0.000000e+00> : vector<16x8xf32>
    %237 = tpu.matmul %198, %236, %cst_174 {dimension_numbers = #tpu.dot_dimension_numbers<[1], [0], [0], [1], [0, 0, 1, 1], [], []>} : vector<16x32xbf16>, vector<32x8xbf16>, vector<16x8xf32> -> vector<16x8xf32>
    %238 = vector.shape_cast %237 : vector<16x8xf32> to vector<2x8x8xf32>
    %c1_175 = arith.constant 1 : index
    %c3_176 = arith.constant 3 : index
    %c0_177 = arith.constant 0 : index
    %c0_178 = arith.constant 0 : index
    %239 = vector.load %arg7[%c1_175, %c3_176, %c0_177, %c0_178] : memref<2x4x32x8xbf16, #tpu.memory_space<vmem>>, vector<1x1x32x8xbf16>
    %240 = vector.shape_cast %239 : vector<1x1x32x8xbf16> to vector<32x8xbf16>
    %cst_179 = arith.constant dense<0.000000e+00> : vector<16x8xf32>
    %241 = tpu.matmul %198, %240, %cst_179 {dimension_numbers = #tpu.dot_dimension_numbers<[1], [0], [0], [1], [0, 0, 1, 1], [], []>} : vector<16x32xbf16>, vector<32x8xbf16>, vector<16x8xf32> -> vector<16x8xf32>
    %242 = vector.shape_cast %241 : vector<16x8xf32> to vector<2x8x8xf32>
    %c1_180 = arith.constant 1 : index
    %c3_181 = arith.constant 3 : index
    %c0_182 = arith.constant 0 : index
    %c0_183 = arith.constant 0 : index
    %243 = vector.load %arg8[%c1_180, %c3_181, %c0_182, %c0_183] : memref<2x4x32x8xbf16, #tpu.memory_space<vmem>>, vector<1x1x32x8xbf16>
    %244 = vector.shape_cast %243 : vector<1x1x32x8xbf16> to vector<32x8xbf16>
    %cst_184 = arith.constant dense<0.000000e+00> : vector<16x8xf32>
    %245 = tpu.matmul %198, %244, %cst_184 {dimension_numbers = #tpu.dot_dimension_numbers<[1], [0], [0], [1], [0, 0, 1, 1], [], []>} : vector<16x32xbf16>, vector<32x8xbf16>, vector<16x8xf32> -> vector<16x8xf32>
    %246 = vector.shape_cast %245 : vector<16x8xf32> to vector<2x8x8xf32>
    %247 = tpu.concatenate %202, %214, %226, %238 in 0 : vector<2x8x8xf32>, vector<2x8x8xf32>, vector<2x8x8xf32>, vector<2x8x8xf32> -> vector<8x8x8xf32>
    %248 = arith.truncf %247 : vector<8x8x8xf32> to vector<8x8x8xbf16>
    %249 = tpu.concatenate %206, %218, %230, %242 in 0 : vector<2x8x8xf32>, vector<2x8x8xf32>, vector<2x8x8xf32>, vector<2x8x8xf32> -> vector<8x8x8xf32>
    %250 = arith.truncf %249 : vector<8x8x8xf32> to vector<8x8x8xbf16>
    %251 = tpu.concatenate %210, %222, %234, %246 in 0 : vector<2x8x8xf32>, vector<2x8x8xf32>, vector<2x8x8xf32>, vector<2x8x8xf32> -> vector<8x8x8xf32>
    %252 = arith.truncf %251 : vector<8x8x8xf32> to vector<8x8x8xbf16>
    "tpu.trace_start"() <{level = 10 : i32, message = "xqd,xkd->xqk"}> : () -> ()
    %cst_185 = arith.constant dense<0.000000e+00> : vector<8x8x8xf32>
    %253 = tpu.matmul %248, %250, %cst_185 {dimension_numbers = #tpu.dot_dimension_numbers<[2], [2], [1], [1], [0, 0, 0, 1, 1, 1], [0], [0]>} : vector<8x8x8xbf16>, vector<8x8x8xbf16>, vector<8x8x8xf32> -> vector<8x8x8xf32>
    "tpu.trace_stop"() : () -> ()
    %cst_186 = arith.constant dense<0xFF800000> : vector<8x8xf32>
    %254 = vector.multi_reduction <maximumf>, %253, %cst_186 [2] : vector<8x8x8xf32> to vector<8x8xf32>
    %255 = vector.shape_cast %254 : vector<8x8xf32> to vector<8x8x1xf32>
    %256 = vector.broadcast %255 : vector<8x8x1xf32> to vector<8x8x8xf32>
    %257 = arith.subf %253, %256 : vector<8x8x8xf32>
    %258 = math.exp %257 : vector<8x8x8xf32>
    %cst_187 = arith.constant dense<0.000000e+00> : vector<8x8xf32>
    %259 = vector.multi_reduction <add>, %258, %cst_187 [2] : vector<8x8x8xf32> to vector<8x8xf32>
    %260 = vector.shape_cast %259 : vector<8x8xf32> to vector<8x8x1xf32>
    %261 = tpu.reciprocal %260 {approx = true} : vector<8x8x1xf32> -> vector<8x8x1xf32>
    %262 = arith.truncf %258 : vector<8x8x8xf32> to vector<8x8x8xbf16>
    "tpu.trace_start"() <{level = 10 : i32, message = "xqk,xkd->xqd"}> : () -> ()
    %cst_188 = arith.constant dense<0.000000e+00> : vector<8x8x8xf32>
    %263 = tpu.matmul %262, %252, %cst_188 {dimension_numbers = #tpu.dot_dimension_numbers<[2], [1], [1], [2], [0, 0, 0, 1, 1, 2], [0], [0]>} : vector<8x8x8xbf16>, vector<8x8x8xbf16>, vector<8x8x8xf32> -> vector<8x8x8xf32>
    "tpu.trace_stop"() : () -> ()
    %264 = vector.broadcast %261 : vector<8x8x1xf32> to vector<8x8x8xf32>
    %265 = arith.mulf %263, %264 : vector<8x8x8xf32>
    %266 = vector.extract_strided_slice %265 {offsets = [0, 0, 0], sizes = [2, 8, 8], strides = [1, 1, 1]} : vector<8x8x8xf32> to vector<2x8x8xf32>
    %267 = vector.shape_cast %266 : vector<2x8x8xf32> to vector<16x8xf32>
    %268 = vector.extract_strided_slice %265 {offsets = [2, 0, 0], sizes = [2, 8, 8], strides = [1, 1, 1]} : vector<8x8x8xf32> to vector<2x8x8xf32>
    %269 = vector.shape_cast %268 : vector<2x8x8xf32> to vector<16x8xf32>
    %270 = vector.extract_strided_slice %265 {offsets = [4, 0, 0], sizes = [2, 8, 8], strides = [1, 1, 1]} : vector<8x8x8xf32> to vector<2x8x8xf32>
    %271 = vector.shape_cast %270 : vector<2x8x8xf32> to vector<16x8xf32>
    %272 = vector.extract_strided_slice %265 {offsets = [6, 0, 0], sizes = [2, 8, 8], strides = [1, 1, 1]} : vector<8x8x8xf32> to vector<2x8x8xf32>
    %273 = vector.shape_cast %272 : vector<2x8x8xf32> to vector<16x8xf32>
    %274 = tpu.concatenate %267, %269, %271, %273 in 1 : vector<16x8xf32>, vector<16x8xf32>, vector<16x8xf32>, vector<16x8xf32> -> vector<16x32xf32>
    %275 = arith.truncf %274 : vector<16x32xf32> to vector<16x32xbf16>
    %c1_189 = arith.constant 1 : index
    %c0_190 = arith.constant 0 : index
    %c0_191 = arith.constant 0 : index
    %276 = vector.load %arg9[%c1_189, %c0_190, %c0_191] : memref<2x32x32xbf16, #tpu.memory_space<vmem>>, vector<1x32x32xbf16>
    %277 = vector.shape_cast %276 : vector<1x32x32xbf16> to vector<32x32xbf16>
    %cst_192 = arith.constant dense<0.000000e+00> : vector<16x32xf32>
    %278 = tpu.matmul %275, %277, %cst_192 {dimension_numbers = #tpu.dot_dimension_numbers<[1], [0], [0], [1], [0, 0, 1, 1], [], []>} : vector<16x32xbf16>, vector<32x32xbf16>, vector<16x32xf32> -> vector<16x32xf32>
    %279 = arith.addf %171, %278 : vector<16x32xf32>
    %c1_193 = arith.constant 1 : index
    %c0_194 = arith.constant 0 : index
    %c0_195 = arith.constant 0 : index
    %280 = vector.load %arg10[%c1_193, %c0_194, %c0_195] : memref<2x1x32xf32, #tpu.memory_space<vmem>>, vector<1x1x32xf32>
    %281 = vector.shape_cast %280 : vector<1x1x32xf32> to vector<1x32xf32>
    %282 = vector.broadcast %281 : vector<1x32xf32> to vector<16x32xf32>
    %283 = arith.addf %279, %282 : vector<16x32xf32>
    %c1_196 = arith.constant 1 : index
    %c0_197 = arith.constant 0 : index
    %c0_198 = arith.constant 0 : index
    %284 = vector.load %arg11[%c1_196, %c0_197, %c0_198] : memref<2x1x32xf32, #tpu.memory_space<vmem>>, vector<1x1x32xf32>
    %285 = vector.shape_cast %284 : vector<1x1x32xf32> to vector<1x32xf32>
    %c1_199 = arith.constant 1 : index
    %c0_200 = arith.constant 0 : index
    %c0_201 = arith.constant 0 : index
    %286 = vector.load %arg12[%c1_199, %c0_200, %c0_201] : memref<2x1x32xf32, #tpu.memory_space<vmem>>, vector<1x1x32xf32>
    %287 = vector.shape_cast %286 : vector<1x1x32xf32> to vector<1x32xf32>
    %cst_202 = arith.constant dense<0.000000e+00> : vector<16xf32>
    %288 = vector.multi_reduction <add>, %283, %cst_202 [1] : vector<16x32xf32> to vector<16xf32>
    %289 = vector.shape_cast %288 : vector<16xf32> to vector<16x1xf32>
    %cst_203 = arith.constant 3.200000e+01 : f32
    %290 = vector.broadcast %cst_203 : f32 to vector<16x1xf32>
    %291 = arith.divf %289, %290 : vector<16x1xf32>
    %292 = vector.broadcast %291 : vector<16x1xf32> to vector<16x32xf32>
    %293 = arith.subf %283, %292 : vector<16x32xf32>
    %294 = arith.mulf %293, %293 : vector<16x32xf32>
    %cst_204 = arith.constant dense<0.000000e+00> : vector<16xf32>
    %295 = vector.multi_reduction <add>, %294, %cst_204 [1] : vector<16x32xf32> to vector<16xf32>
    %296 = vector.shape_cast %295 : vector<16xf32> to vector<16x1xf32>
    %cst_205 = arith.constant 3.200000e+01 : f32
    %297 = vector.broadcast %cst_205 : f32 to vector<16x1xf32>
    %298 = arith.divf %296, %297 : vector<16x1xf32>
    %299 = vector.broadcast %291 : vector<16x1xf32> to vector<16x32xf32>
    %300 = arith.subf %283, %299 : vector<16x32xf32>
    %cst_206 = arith.constant 9.99999974E-6 : f32
    %301 = vector.broadcast %cst_206 : f32 to vector<16x1xf32>
    %302 = arith.addf %298, %301 : vector<16x1xf32>
    %303 = math.rsqrt %302 : vector<16x1xf32>
    %304 = vector.broadcast %303 : vector<16x1xf32> to vector<16x32xf32>
    %305 = arith.mulf %300, %304 : vector<16x32xf32>
    %306 = vector.broadcast %285 : vector<1x32xf32> to vector<16x32xf32>
    %307 = arith.mulf %305, %306 : vector<16x32xf32>
    %308 = vector.broadcast %287 : vector<1x32xf32> to vector<16x32xf32>
    %309 = arith.addf %307, %308 : vector<16x32xf32>
    %310 = arith.truncf %309 : vector<16x32xf32> to vector<16x32xbf16>
    %c1_207 = arith.constant 1 : index
    %c0_208 = arith.constant 0 : index
    %c0_209 = arith.constant 0 : index
    %311 = vector.load %arg13[%c1_207, %c0_208, %c0_209] : memref<2x32x128xbf16, #tpu.memory_space<vmem>>, vector<1x32x128xbf16>
    %312 = vector.shape_cast %311 : vector<1x32x128xbf16> to vector<32x128xbf16>
    %cst_210 = arith.constant dense<0.000000e+00> : vector<16x128xf32>
    %313 = tpu.matmul %310, %312, %cst_210 {dimension_numbers = #tpu.dot_dimension_numbers<[1], [0], [0], [1], [0, 0, 1, 1], [], []>} : vector<16x32xbf16>, vector<32x128xbf16>, vector<16x128xf32> -> vector<16x128xf32>
    %c1_211 = arith.constant 1 : index
    %c0_212 = arith.constant 0 : index
    %c0_213 = arith.constant 0 : index
    %314 = vector.load %arg14[%c1_211, %c0_212, %c0_213] : memref<2x1x128xf32, #tpu.memory_space<vmem>>, vector<1x1x128xf32>
    %315 = vector.shape_cast %314 : vector<1x1x128xf32> to vector<1x128xf32>
    %316 = vector.broadcast %315 : vector<1x128xf32> to vector<16x128xf32>
    %317 = arith.addf %313, %316 : vector<16x128xf32>
    %cst_214 = arith.constant 5.000000e-01 : f32
    %318 = vector.broadcast %cst_214 : f32 to vector<16x128xf32>
    %319 = arith.mulf %318, %317 : vector<16x128xf32>
    %cst_215 = arith.constant 0.707106769 : f32
    %320 = vector.broadcast %cst_215 : f32 to vector<16x128xf32>
    %321 = arith.mulf %317, %320 : vector<16x128xf32>
    %322 = math.erf %321 : vector<16x128xf32>
    %cst_216 = arith.constant 1.000000e+00 : f32
    %323 = vector.broadcast %cst_216 : f32 to vector<16x128xf32>
    %324 = arith.addf %323, %322 : vector<16x128xf32>
    %325 = arith.mulf %319, %324 : vector<16x128xf32>
    %326 = arith.truncf %325 : vector<16x128xf32> to vector<16x128xbf16>
    %c1_217 = arith.constant 1 : index
    %c0_218 = arith.constant 0 : index
    %c0_219 = arith.constant 0 : index
    %327 = vector.load %arg15[%c1_217, %c0_218, %c0_219] : memref<2x128x32xbf16, #tpu.memory_space<vmem>>, vector<1x128x32xbf16>
    %328 = vector.shape_cast %327 : vector<1x128x32xbf16> to vector<128x32xbf16>
    %cst_220 = arith.constant dense<0.000000e+00> : vector<16x32xf32>
    %329 = tpu.matmul %326, %328, %cst_220 {dimension_numbers = #tpu.dot_dimension_numbers<[1], [0], [0], [1], [0, 0, 1, 1], [], []>} : vector<16x128xbf16>, vector<128x32xbf16>, vector<16x32xf32> -> vector<16x32xf32>
    %330 = arith.addf %283, %329 : vector<16x32xf32>
    %c1_221 = arith.constant 1 : index
    %c0_222 = arith.constant 0 : index
    %c0_223 = arith.constant 0 : index
    %331 = vector.load %arg16[%c1_221, %c0_222, %c0_223] : memref<2x1x32xf32, #tpu.memory_space<vmem>>, vector<1x1x32xf32>
    %332 = vector.shape_cast %331 : vector<1x1x32xf32> to vector<1x32xf32>
    %333 = vector.broadcast %332 : vector<1x32xf32> to vector<16x32xf32>
    %334 = arith.addf %330, %333 : vector<16x32xf32>
    %c0_224 = arith.constant 0 : index
    %c0_225 = arith.constant 0 : index
    %335 = vector.load %arg17[%c0_224, %c0_225] : memref<1x32xf32, #tpu.memory_space<vmem>>, vector<1x32xf32>
    %c0_226 = arith.constant 0 : index
    %c0_227 = arith.constant 0 : index
    %336 = vector.load %arg18[%c0_226, %c0_227] : memref<1x32xf32, #tpu.memory_space<vmem>>, vector<1x32xf32>
    %cst_228 = arith.constant dense<0.000000e+00> : vector<16xf32>
    %337 = vector.multi_reduction <add>, %334, %cst_228 [1] : vector<16x32xf32> to vector<16xf32>
    %338 = vector.shape_cast %337 : vector<16xf32> to vector<16x1xf32>
    %cst_229 = arith.constant 3.200000e+01 : f32
    %339 = vector.broadcast %cst_229 : f32 to vector<16x1xf32>
    %340 = arith.divf %338, %339 : vector<16x1xf32>
    %341 = vector.broadcast %340 : vector<16x1xf32> to vector<16x32xf32>
    %342 = arith.subf %334, %341 : vector<16x32xf32>
    %343 = arith.mulf %342, %342 : vector<16x32xf32>
    %cst_230 = arith.constant dense<0.000000e+00> : vector<16xf32>
    %344 = vector.multi_reduction <add>, %343, %cst_230 [1] : vector<16x32xf32> to vector<16xf32>
    %345 = vector.shape_cast %344 : vector<16xf32> to vector<16x1xf32>
    %cst_231 = arith.constant 3.200000e+01 : f32
    %346 = vector.broadcast %cst_231 : f32 to vector<16x1xf32>
    %347 = arith.divf %345, %346 : vector<16x1xf32>
    %348 = vector.broadcast %340 : vector<16x1xf32> to vector<16x32xf32>
    %349 = arith.subf %334, %348 : vector<16x32xf32>
    %cst_232 = arith.constant 9.99999974E-6 : f32
    %350 = vector.broadcast %cst_232 : f32 to vector<16x1xf32>
    %351 = arith.addf %347, %350 : vector<16x1xf32>
    %352 = math.rsqrt %351 : vector<16x1xf32>
    %353 = vector.broadcast %352 : vector<16x1xf32> to vector<16x32xf32>
    %354 = arith.mulf %349, %353 : vector<16x32xf32>
    %355 = vector.broadcast %335 : vector<1x32xf32> to vector<16x32xf32>
    %356 = arith.mulf %354, %355 : vector<16x32xf32>
    %357 = vector.broadcast %336 : vector<1x32xf32> to vector<16x32xf32>
    %358 = arith.addf %356, %357 : vector<16x32xf32>
    %c0_233 = arith.constant 0 : index
    %c0_234 = arith.constant 0 : index
    %359 = vector.load %arg19[%c0_233, %c0_234] : memref<4x16xf32, #tpu.memory_space<vmem>>, vector<4x16xf32>
    %cst_235 = arith.constant dense<0.000000e+00> : vector<4x32xf32>
    %360 = tpu.matmul %359, %358, %cst_235 {dimension_numbers = #tpu.dot_dimension_numbers<[1], [0], [0], [1], [0, 0, 1, 1], [], []>} : vector<4x16xf32>, vector<16x32xf32>, vector<4x32xf32> -> vector<4x32xf32>
    %c0_236 = arith.constant 0 : index
    %c0_237 = arith.constant 0 : index
    %361 = vector.load %arg20[%c0_236, %c0_237] : memref<4x32xf32, #tpu.memory_space<vmem>>, vector<4x32xf32>
    tpu.vector_store %arg20[%c0_236, %c0_237], %360 {strides = array<i32>} : memref<4x32xf32, #tpu.memory_space<vmem>>, vector<4x32xf32>,
    return
  }
}

</mosaic_0001>

<llo_original>
// kernel: vit_forward.1
$region0: #{vit_forward.1}
  #allocation0 [shape = 'u32[]', space=smem, size = 0x4, offset = 0x4, fixed_abs, tag = 'smem constant byte address 0x4 - core index']
  #allocation1 [shape = 'u32[144,128]{1,0:T(1,128)}', space=vmem, size = 0x12000, scoped, tag = 'internal scratch']
  %s0 = inlined_call_operand.vmem [shape: f32[16,384], index: 0, kind: input, shape index: {}]
  %s1 = inlined_call_operand.vmem [shape: bf16[384,32], index: 1, kind: input, shape index: {}]
  %s2 = inlined_call_operand.vmem [shape: f32[1,32], index: 2, kind: input, shape index: {}]
  %s3 = inlined_call_operand.vmem [shape: f32[16,32], index: 3, kind: input, shape index: {}]
  %s4 = inlined_call_operand.vmem [shape: f32[2,1,32], index: 4, kind: input, shape index: {}]
  %s5 = inlined_call_operand.vmem [shape: f32[2,1,32], index: 5, kind: input, shape index: {}]
  %s6 = inlined_call_operand.vmem [shape: bf16[2,4,32,8], index: 6, kind: input, shape index: {}]
  %s7 = inlined_call_operand.vmem [shape: bf16[2,4,32,8], index: 7, kind: input, shape index: {}]
  %s8 = inlined_call_operand.vmem [shape: bf16[2,4,32,8], index: 8, kind: input, shape index: {}]
  %s9 = inlined_call_operand.vmem [shape: bf16[2,32,32], index: 9, kind: input, shape index: {}]
  %s10 = inlined_call_operand.vmem [shape: f32[2,1,32], index: 10, kind: input, shape index: {}]
  %s11 = inlined_call_operand.vmem [shape: f32[2,1,32], index: 11, kind: input, shape index: {}]
  %s12 = inlined_call_operand.vmem [shape: f32[2,1,32], index: 12, kind: input, shape index: {}]
  %s13 = inlined_call_operand.vmem [shape: bf16[2,32,128], index: 13, kind: input, shape index: {}]
  %s14 = inlined_call_operand.vmem [shape: f32[2,1,128], index: 14, kind: input, shape index: {}]
  %s15 = inlined_call_operand.vmem [shape: bf16[2,128,32], index: 15, kind: input, shape index: {}]
  %s16 = inlined_call_operand.vmem [shape: f32[2,1,32], index: 16, kind: input, shape index: {}]
  %s17 = inlined_call_operand.vmem [shape: f32[1,32], index: 17, kind: input, shape index: {}]
  %s18 = inlined_call_operand.vmem [shape: f32[1,32], index: 18, kind: input, shape index: {}]
  %s19 = inlined_call_operand.vmem [shape: f32[4,16], index: 19, kind: input, shape index: {}]
  %s20 = inlined_call_operand.hbm [shape: f32[4,32], index: 20, kind: output, shape index: {}]
  %s21 = sld [smem:[#allocation0]]
  $region90: #{vit_forward.1} parent=0
    _
  %s23 = ssub.s32 1, %s21
  %s24 = scalar_select 0, %s23, %s21
  $region1: #{vit_forward.1} parent=0
    #allocation2 [shape = 'u8[2048]{0}', space=vmem, size = 0x800, scoped, tag = 'output window, operand 0, single buffered']
    #allocation3 [shape = 's32[1]{0}', space=sflag, size = 0x4, scoped, tag = 'scoped memory for vit_forward.1']
    %25 = vsyncpa [#allocation3], 0
    // Predicated region
    $region2: #{vit_forward.1} parent=1 // pred_check
      _
    $region3: #{vit_forward.1} parent=1 // pred_check_branch
      %27 = sbr.rel (0) target = $region5
    $region4: #{vit_forward.1} parent=1 // pred_region
      _
    $region5: #{vit_forward.1} parent=1 // pred_fallthru
      _
    // Predicated region
    $region6: #{vit_forward.1} parent=1 // pred_check
      _
    $region7: #{vit_forward.1} parent=1 // pred_check_branch
      %29 = sbr.rel (0) target = $region9
    $region8: #{vit_forward.1} parent=1 // pred_region
      _
    $region9: #{vit_forward.1} parent=1 // pred_fallthru
      _
    // Predicated region
    $region10: #{vit_forward.1} parent=1 // pred_check
      _
    $region11: #{vit_forward.1} parent=1 // pred_check_branch
      %31 = sbr.rel (0) target = $region13
    $region12: #{vit_forward.1} parent=1 // pred_region
      _
    $region13: #{vit_forward.1} parent=1 // pred_fallthru
      _
    // Predicated region
    $region14: #{vit_forward.1} parent=1 // pred_check
      _
    $region15: #{vit_forward.1} parent=1 // pred_check_branch
      %33 = sbr.rel (0) target = $region17
    $region16: #{vit_forward.1} parent=1 // pred_region
      _
    $region17: #{vit_forward.1} parent=1 // pred_fallthru
      _
    // Predicated region
    $region18: #{vit_forward.1} parent=1 // pred_check
      _
    $region19: #{vit_forward.1} parent=1 // pred_check_branch
      %35 = sbr.rel (0) target = $region21
    $region20: #{vit_forward.1} parent=1 // pred_region
      _
    $region21: #{vit_forward.1} parent=1 // pred_fallthru
      _
    // Predicated region
    $region22: #{vit_forward.1} parent=1 // pred_check
      _
    $region23: #{vit_forward.1} parent=1 // pred_check_branch
      %37 = sbr.rel (0) target = $region25
    $region24: #{vit_forward.1} parent=1 // pred_region
      _
    $region25: #{vit_forward.1} parent=1 // pred_fallthru
      _
    // Predicated region
    $region26: #{vit_forward.1} parent=1 // pred_check
      _
    $region27: #{vit_forward.1} parent=1 // pred_check_branch
      %39 = sbr.rel (0) target = $region29
    $region28: #{vit_forward.1} parent=1 // pred_region
      _
    $region29: #{vit_forward.1} parent=1 // pred_fallthru
      _
    // Predicated region
    $region30: #{vit_forward.1} parent=1 // pred_check
      _
    $region31: #{vit_forward.1} parent=1 // pred_check_branch
      %41 = sbr.rel (0) target = $region33
    $region32: #{vit_forward.1} parent=1 // pred_region
      _
    $region33: #{vit_forward.1} parent=1 // pred_fallthru
      _
    // Predicated region
    $region34: #{vit_forward.1} parent=1 // pred_check
      _
    $region35: #{vit_forward.1} parent=1 // pred_check_branch
      %43 = sbr.rel (0) target = $region37
    $region36: #{vit_forward.1} parent=1 // pred_region
      _
    $region37: #{vit_forward.1} parent=1 // pred_fallthru
      _
    // Predicated region
    $region38: #{vit_forward.1} parent=1 // pred_check
      _
    $region39: #{vit_forward.1} parent=1 // pred_check_branch
      %45 = sbr.rel (0) target = $region41
    $region40: #{vit_forward.1} parent=1 // pred_region
      _
    $region41: #{vit_forward.1} parent=1 // pred_fallthru
      _
    // Predicated region
    $region42: #{vit_forward.1} parent=1 // pred_check
      _
    $region43: #{vit_forward.1} parent=1 // pred_check_branch
      %47 = sbr.rel (0) target = $region45
    $region44: #{vit_forward.1} parent=1 // pred_region
      _
    $region45: #{vit_forward.1} parent=1 // pred_fallthru
      _
    // Predicated region
    $region46: #{vit_forward.1} parent=1 // pred_check
      _
    $region47: #{vit_forward.1} parent=1 // pred_check_branch
      %49 = sbr.rel (0) target = $region49
    $region48: #{vit_forward.1} parent=1 // pred_region
      _
    $region49: #{vit_forward.1} parent=1 // pred_fallthru
      _
    // Predicated region
    $region50: #{vit_forward.1} parent=1 // pred_check
      _
    $region51: #{vit_forward.1} parent=1 // pred_check_branch
      %51 = sbr.rel (0) target = $region53
    $region52: #{vit_forward.1} parent=1 // pred_region
      _
    $region53: #{vit_forward.1} parent=1 // pred_fallthru
      _
    // Predicated region
    $region54: #{vit_forward.1} parent=1 // pred_check
      _
    $region55: #{vit_forward.1} parent=1 // pred_check_branch
      %53 = sbr.rel (0) target = $region57
    $region56: #{vit_forward.1} parent=1 // pred_region
      _
    $region57: #{vit_forward.1} parent=1 // pred_fallthru
      _
    // Predicated region
    $region58: #{vit_forward.1} parent=1 // pred_check
      _
    $region59: #{vit_forward.1} parent=1 // pred_check_branch
      %55 = sbr.rel (0) target = $region61
    $region60: #{vit_forward.1} parent=1 // pred_region
      _
    $region61: #{vit_forward.1} parent=1 // pred_fallthru
      _
    // Predicated region
    $region62: #{vit_forward.1} parent=1 // pred_check
      _
    $region63: #{vit_forward.1} parent=1 // pred_check_branch
      %57 = sbr.rel (0) target = $region65
    $region64: #{vit_forward.1} parent=1 // pred_region
      _
    $region65: #{vit_forward.1} parent=1 // pred_fallthru
      _
    // Predicated region
    $region66: #{vit_forward.1} parent=1 // pred_check
      _
    $region67: #{vit_forward.1} parent=1 // pred_check_branch
      %59 = sbr.rel (0) target = $region69
    $region68: #{vit_forward.1} parent=1 // pred_region
      _
    $region69: #{vit_forward.1} parent=1 // pred_fallthru
      _
    // Predicated region
    $region70: #{vit_forward.1} parent=1 // pred_check
      _
    $region71: #{vit_forward.1} parent=1 // pred_check_branch
      %61 = sbr.rel (0) target = $region73
    $region72: #{vit_forward.1} parent=1 // pred_region
      _
    $region73: #{vit_forward.1} parent=1 // pred_fallthru
      _
    // Predicated region
    $region74: #{vit_forward.1} parent=1 // pred_check
      _
    $region75: #{vit_forward.1} parent=1 // pred_check_branch
      %63 = sbr.rel (0) target = $region77
    $region76: #{vit_forward.1} parent=1 // pred_region
      _
    $region77: #{vit_forward.1} parent=1 // pred_fallthru
      _
    // Predicated region
    $region78: #{vit_forward.1} parent=1 // pred_check
      _
    $region79: #{vit_forward.1} parent=1 // pred_check_branch
      %65 = sbr.rel (0) target = $region81
    $region80: #{vit_forward.1} parent=1 // pred_region
      _
    $region81: #{vit_forward.1} parent=1 // pred_fallthru
      _
    %v67 = vld [vmem:[%s0] sm:$0xff]
    %v68 = vld [vmem:[%s0 + $0x8] sm:$0xff]
    %v69 = vld [vmem:[%s0 + $0x10] sm:$0xff]
    %v70 = vld [vmem:[%s0 + $0x18] sm:$0xff]
    %v71 = vld [vmem:[%s0 + $0x20] sm:$0xff]
    %v72 = vld [vmem:[%s0 + $0x28] sm:$0xff]
    %v73 = vpack.c.bf16 %v70, %v67
    %v74 = vpack.c.bf16 %v71, %v68
    %v75 = vpack.c.bf16 %v72, %v69
    %v76 = vld [vmem:[%s1] sm:$0xf]
    %v77 = vld [vmem:[%s1 + $0x4] sm:$0xf]
    %v78 = vld [vmem:[%s1 + $0x8] sm:$0xf]
    %v79 = vld [vmem:[%s1 + $0xc] sm:$0xf]
    %v80 = vld [vmem:[%s1 + $0x10] sm:$0xf]
    %v81 = vld [vmem:[%s1 + $0x14] sm:$0xf]
    %v82 = vld [vmem:[%s1 + $0x18] sm:$0xf]
    %v83 = vld [vmem:[%s1 + $0x1c] sm:$0xf]
    %v84 = vld [vmem:[%s1 + $0x20] sm:$0xf]
    %v85 = vld [vmem:[%s1 + $0x24] sm:$0xf]
    %v86 = vld [vmem:[%s1 + $0x28] sm:$0xf]
    %v87 = vld [vmem:[%s1 + $0x2c] sm:$0xf]
    %v88 = vld [vmem:[%s1 + $0x30] sm:$0xf]
    %v89 = vld [vmem:[%s1 + $0x34] sm:$0xf]
    %v90 = vld [vmem:[%s1 + $0x38] sm:$0xf]
    %v91 = vld [vmem:[%s1 + $0x3c] sm:$0xf]
    %v92 = vld [vmem:[%s1 + $0x40] sm:$0xf]
    %v93 = vld [vmem:[%s1 + $0x44] sm:$0xf]
    %v94 = vld [vmem:[%s1 + $0x48] sm:$0xf]
    %v95 = vld [vmem:[%s1 + $0x4c] sm:$0xf]
    %v96 = vld [vmem:[%s1 + $0x50] sm:$0xf]
    %v97 = vld [vmem:[%s1 + $0x54] sm:$0xf]
    %v98 = vld [vmem:[%s1 + $0x58] sm:$0xf]
    %v99 = vld [vmem:[%s1 + $0x5c] sm:$0xf]
    %v100 = vld [vmem:[%s1 + $0x60] sm:$0xf]
    %v101 = vld [vmem:[%s1 + $0x64] sm:$0xf]
    %v102 = vld [vmem:[%s1 + $0x68] sm:$0xf]
    %v103 = vld [vmem:[%s1 + $0x6c] sm:$0xf]
    %v104 = vld [vmem:[%s1 + $0x70] sm:$0xf]
    %v105 = vld [vmem:[%s1 + $0x74] sm:$0xf]
    %v106 = vld [vmem:[%s1 + $0x78] sm:$0xf]
    %v107 = vld [vmem:[%s1 + $0x7c] sm:$0xf]
    %v108 = vld [vmem:[%s1 + $0x80] sm:$0xf]
    %v109 = vld [vmem:[%s1 + $0x84] sm:$0xf]
    %v110 = vld [vmem:[%s1 + $0x88] sm:$0xf]
    %v111 = vld [vmem:[%s1 + $0x8c] sm:$0xf]
    %v112 = vld [vmem:[%s1 + $0x90] sm:$0xf]
    %v113 = vld [vmem:[%s1 + $0x94] sm:$0xf]
    %v114 = vld [vmem:[%s1 + $0x98] sm:$0xf]
    %v115 = vld [vmem:[%s1 + $0x9c] sm:$0xf]
    %v116 = vld [vmem:[%s1 + $0xa0] sm:$0xf]
    %v117 = vld [vmem:[%s1 + $0xa4] sm:$0xf]
    %v118 = vld [vmem:[%s1 + $0xa8] sm:$0xf]
    %v119 = vld [vmem:[%s1 + $0xac] sm:$0xf]
    %v120 = vld [vmem:[%s1 + $0xb0] sm:$0xf]
    %v121 = vld [vmem:[%s1 + $0xb4] sm:$0xf]
    %v122 = vld [vmem:[%s1 + $0xb8] sm:$0xf]
    %v123 = vld [vmem:[%s1 + $0xbc] sm:$0xf]
    %v124 = vld [vmem:[%s2] sm:$0x1]
    %v126 = vlaneseq
    %v127 = vshrl.u32 %v126, 7
    %v128 = vsub.s32 0, %v127
    %v129 = vrot.slane %v124, %v128
    %v179 = vunpack.c.l.b16 %v76
    %v180 = vunpack.c.l.b16 %v77
    %v181 = vunpack.c.l.b16 %v78
    %v182 = vunpack.c.l.b16 %v79
    %v183 = vunpack.c.l.b16 %v80
    %v184 = vunpack.c.l.b16 %v81
    %v185 = vunpack.c.l.b16 %v82
    %v186 = vunpack.c.l.b16 %v83
    %v187 = vunpack.c.l.b16 %v84
    %v188 = vunpack.c.l.b16 %v85
    %v189 = vunpack.c.l.b16 %v86
    %v190 = vunpack.c.l.b16 %v87
    %v191 = vunpack.c.l.b16 %v88
    %v192 = vunpack.c.l.b16 %v89
    %v193 = vunpack.c.l.b16 %v90
    %v194 = vunpack.c.l.b16 %v91
    %v195 = vunpack.c.l.b16 %v92
    %v196 = vunpack.c.l.b16 %v93
    %v197 = vunpack.c.l.b16 %v94
    %v198 = vunpack.c.l.b16 %v95
    %v199 = vunpack.c.l.b16 %v96
    %v200 = vunpack.c.l.b16 %v97
    %v201 = vunpack.c.l.b16 %v98
    %v202 = vunpack.c.l.b16 %v99
    %v203 = vunpack.c.l.b16 %v100
    %v204 = vunpack.c.l.b16 %v101
    %v205 = vunpack.c.l.b16 %v102
    %v206 = vunpack.c.l.b16 %v103
    %v207 = vunpack.c.l.b16 %v104
    %v208 = vunpack.c.l.b16 %v105
    %v209 = vunpack.c.l.b16 %v106
    %v210 = vunpack.c.l.b16 %v107
    %v211 = vunpack.c.l.b16 %v108
    %v212 = vunpack.c.l.b16 %v109
    %v213 = vunpack.c.l.b16 %v110
    %v214 = vunpack.c.l.b16 %v111
    %v215 = vunpack.c.l.b16 %v112
    %v216 = vunpack.c.l.b16 %v113
    %v217 = vunpack.c.l.b16 %v114
    %v218 = vunpack.c.l.b16 %v115
    %v219 = vunpack.c.l.b16 %v116
    %v220 = vunpack.c.l.b16 %v117
    %v221 = vunpack.c.l.b16 %v118
    %v222 = vunpack.c.l.b16 %v119
    %v223 = vunpack.c.l.b16 %v120
    %v224 = vunpack.c.l.b16 %v121
    %v225 = vunpack.c.l.b16 %v122
    %v226 = vunpack.c.l.b16 %v123
    %v227 = vpack.c.b16 %v180, %v179
    %v228 = vpack.c.b16 %v182, %v181
    %v229 = vpack.c.b16 %v184, %v183
    %v230 = vpack.c.b16 %v186, %v185
    %v231 = vpack.c.b16 %v188, %v187
    %v232 = vpack.c.b16 %v190, %v189
    %v233 = vpack.c.b16 %v192, %v191
    %v234 = vpack.c.b16 %v194, %v193
    %v235 = vpack.c.b16 %v196, %v195
    %v236 = vpack.c.b16 %v198, %v197
    %v237 = vpack.c.b16 %v200, %v199
    %v238 = vpack.c.b16 %v202, %v201
    %v239 = vpack.c.b16 %v204, %v203
    %v240 = vpack.c.b16 %v206, %v205
    %v241 = vpack.c.b16 %v208, %v207
    %v242 = vpack.c.b16 %v210, %v209
    %v243 = vpack.c.b16 %v212, %v211
    %v244 = vpack.c.b16 %v214, %v213
    %v245 = vpack.c.b16 %v216, %v215
    %v246 = vpack.c.b16 %v218, %v217
    %v247 = vpack.c.b16 %v220, %v219
    %v248 = vpack.c.b16 %v222, %v221
    %v249 = vpack.c.b16 %v224, %v223
    %v250 = vpack.c.b16 %v226, %v225
    %275 = vmatprep.subr.bf16.mxu0 0
    %276 = vmatpush1.bf16.msra.mxu0 %v234
    %277 = vmatprep.subr.bf16.mxu0 0
    %278 = vmatpush1.bf16.msra.mxu0 %v233
    %279 = vmatprep.subr.bf16.mxu0 0
    %280 = vmatpush1.bf16.msra.mxu0 %v232
    %281 = vmatprep.subr.bf16.mxu0 0
    %282 = vmatpush1.bf16.msra.mxu0 %v231
    %283 = vmatprep.subr.bf16.mxu0 0
    %284 = vmatpush1.bf16.msra.mxu0 %v230
    %285 = vmatprep.subr.bf16.mxu0 0
    %286 = vmatpush1.bf16.msra.mxu0 %v229
    %287 = vmatprep.subr.bf16.mxu0 0
    %288 = vmatpush1.bf16.msra.mxu0 %v228
    %289 = vmatprep.subr.bf16.mxu0 0
    %290 = vmatpush1.bf16.msra.mxu0 %v227
    %291 = vmatprep.subr.bf16.mxu0 0
    %292 = vmatpush2.bf16.msra.mxu0 %v242
    %293 = vmatprep.subr.bf16.mxu0 0
    %294 = vmatpush2.bf16.msra.mxu0 %v241
    %295 = vmatprep.subr.bf16.mxu0 0
    %296 = vmatpush2.bf16.msra.mxu0 %v240
    %297 = vmatprep.subr.bf16.mxu0 0
    %298 = vmatpush2.bf16.msra.mxu0 %v239
    %299 = vmatprep.subr.bf16.mxu0 0
    %300 = vmatpush2.bf16.msra.mxu0 %v238
    %301 = vmatprep.subr.bf16.mxu0 0
    %302 = vmatpush2.bf16.msra.mxu0 %v237
    %303 = vmatprep.subr.bf16.mxu0 0
    %304 = vmatpush2.bf16.msra.mxu0 %v236
    %305 = vmatprep.subr.bf16.mxu0 0
    %306 = vmatpush2.bf16.msra.mxu0 %v235
    %307 = vmatprep.mubr.bf16.mxu0 %v74
    %308 = vmatmul.mubr.bf16.gmra.mxu0 %v73
    %v309 = vpop.f32.mrf.mxu0
    %v310 = vadd.f32 %v129, %v309
    %v311 = vpop.f32.mrf.mxu0
    %v312 = vpop.f32.mrf.mxu0
    %v313 = vadd.f32 %v129, %v312
    %v314 = vpop.f32.mrf.mxu0
    %315 = vdwg.mxu0
    %316 = vmatprep.subr.bf16.mxu0 0
    %317 = vmatpush1.bf16.msra.mxu0 %v250
    %318 = vmatprep.subr.bf16.mxu0 0
    %319 = vmatpush1.bf16.msra.mxu0 %v249
    %320 = vmatprep.subr.bf16.mxu0 0
    %321 = vmatpush1.bf16.msra.mxu0 %v248
    %322 = vmatprep.subr.bf16.mxu0 0
    %323 = vmatpush1.bf16.msra.mxu0 %v247
    %324 = vmatprep.subr.bf16.mxu0 0
    %325 = vmatpush1.bf16.msra.mxu0 %v246
    %326 = vmatprep.subr.bf16.mxu0 0
    %327 = vmatpush1.bf16.msra.mxu0 %v245
    %328 = vmatprep.subr.bf16.mxu0 0
    %329 = vmatpush1.bf16.msra.mxu0 %v244
    %330 = vmatprep.subr.bf16.mxu0 0
    %331 = vmatpush1.bf16.msra.mxu0 %v243
    %332 = vmatprep.subr.bf16.mxu0 0
    %333 = vmatpush2.bf16.msra.mxu0 0
    %334 = vmatprep.subr.bf16.mxu0 0
    %335 = vmatpush2.bf16.msra.mxu0 0
    %336 = vmatprep.subr.bf16.mxu0 0
    %337 = vmatpush2.bf16.msra.mxu0 0
    %338 = vmatprep.subr.bf16.mxu0 0
    %339 = vmatpush2.bf16.msra.mxu0 0
    %340 = vmatprep.subr.bf16.mxu0 0
    %341 = vmatpush2.bf16.msra.mxu0 0
    %342 = vmatprep.subr.bf16.mxu0 0
    %343 = vmatpush2.bf16.msra.mxu0 0
    %344 = vmatprep.subr.bf16.mxu0 0
    %345 = vmatpush2.bf16.msra.mxu0 0
    %346 = vmatprep.subr.bf16.mxu0 0
    %347 = vmatpush2.bf16.msra.mxu0 0
    %348 = vmatprep.mubr.bf16.mxu0 0
    %349 = vmatmul.mubr.bf16.gmra.mxu0 %v75
    %v350 = vpop.f32.mrf.mxu0
    %v351 = vadd.f32 %v310, %v350
    %v352 = vpop.f32.mrf.mxu0
    %v353 = vpop.f32.mrf.mxu0
    %v354 = vadd.f32 %v313, %v353
    %v355 = vpop.f32.mrf.mxu0
    %356 = vdwg.mxu0
    %v357 = vld [vmem:[%s3] sm:$0xff]
    %v358 = vld [vmem:[%s3 + $0x8] sm:$0xff]
    %v359 = vadd.f32 %v351, %v357
    %v360 = vadd.f32 %v354, %v358
    %v361 = vld [vmem:[%s4] sm:$0x1]
    %v362 = vld [vmem:[%s5] sm:$0x1]
    %vm363 = vcmask 261120
    %v364 = vsel %vm363, %v359, 0.0
    %365 = vadd.xlane.f32.xlu0 %v364
    %v366 = vpop.xlane.xlu0 %365
    %v367 = vsel %vm363, %v360, 0.0
    %368 = vadd.xlane.f32.xlu0 %v367
    %v369 = vpop.xlane.xlu0 %368
    %v370 = vrcp.pop 32.0
    %v371 = vmul.f32 %v366, %v370
    %v372 = vmul.f32 %v369, %v370
    %v373 = vsub.f32 %v359, %v371
    %v374 = vsub.f32 %v360, %v372
    %v375 = vmul.f32 %v373, %v373
    %v376 = vmul.f32 %v374, %v374
    %v377 = vsel %vm363, %v375, 0.0
    %378 = vadd.xlane.f32.xlu0 %v377
    %v379 = vpop.xlane.xlu0 %378
    %v380 = vsel %vm363, %v376, 0.0
    %381 = vadd.xlane.f32.xlu0 %v380
    %v382 = vpop.xlane.xlu0 %381
    %v383 = vmul.f32 %v379, %v370
    %v384 = vmul.f32 %v382, %v370
    %v385 = vadd.f32 %v383, 1e-05
    %v386 = vadd.f32 %v384, 1e-05
    %v387 = vrsqrt.pop %v385
    %v388 = vrsqrt.pop %v386
    %v389 = vmul.f32 %v373, %v387
    %v390 = vmul.f32 %v374, %v388
    %v392 = vlaneseq
    %v393 = vshrl.u32 %v392, 7
    %v394 = vsub.s32 0, %v393
    %v395 = vrot.slane %v361, %v394
    %v397 = vmul.f32 %v389, %v395
    %v398 = vmul.f32 %v390, %v395
    %v400 = vlaneseq
    %v401 = vshrl.u32 %v400, 7
    %v402 = vsub.s32 0, %v401
    %v403 = vrot.slane %v362, %v402
    %v405 = vadd.f32 %v397, %v403
    %v406 = vadd.f32 %v398, %v403
    %v407 = vpack.c.bf16 %v406, %v405
    %v408 = vld [vmem:[%s6] sm:$0xf]
    %v409 = vld [vmem:[%s6 + $0x4] sm:$0xf]
    %v410 = vld [vmem:[%s6 + $0x8] sm:$0xf]
    %v411 = vld [vmem:[%s6 + $0xc] sm:$0xf]
    %v416 = vunpack.c.l.b16 %v408
    %v417 = vunpack.c.l.b16 %v409
    %v418 = vunpack.c.l.b16 %v410
    %v419 = vunpack.c.l.b16 %v411
    %v420 = vpack.c.b16 %v417, %v416
    %v421 = vpack.c.b16 %v419, %v418
    %v425 = vsel %vm363, %v407, 0
    %427 = vmatprep.subr.bf16.mxu0 0
    %428 = vmatpush1.bf16.msra.mxu0 0
    %429 = vmatprep.subr.bf16.mxu0 0
    %430 = vmatpush1.bf16.msra.mxu0 0
    %431 = vmatprep.subr.bf16.mxu0 0
    %432 = vmatpush1.bf16.msra.mxu0 0
    %433 = vmatprep.subr.bf16.mxu0 0
    %434 = vmatpush1.bf16.msra.mxu0 0
    %435 = vmatprep.subr.bf16.mxu0 0
    %436 = vmatpush1.bf16.msra.mxu0 0
    %437 = vmatprep.subr.bf16.mxu0 0
    %438 = vmatpush1.bf16.msra.mxu0 0
    %439 = vmatprep.subr.bf16.mxu0 0
    %440 = vmatpush1.bf16.msra.mxu0 %v421
    %441 = vmatprep.subr.bf16.mxu0 0
    %442 = vmatpush1.bf16.msra.mxu0 %v420
    %443 = vmatprep.subr.bf16.mxu0 0
    %444 = vmatpush2.bf16.msra.mxu0 0
    %445 = vmatprep.subr.bf16.mxu0 0
    %446 = vmatpush2.bf16.msra.mxu0 0
    %447 = vmatprep.subr.bf16.mxu0 0
    %448 = vmatpush2.bf16.msra.mxu0 0
    %449 = vmatprep.subr.bf16.mxu0 0
    %450 = vmatpush2.bf16.msra.mxu0 0
    %451 = vmatprep.subr.bf16.mxu0 0
    %452 = vmatpush2.bf16.msra.mxu0 0
    %453 = vmatprep.subr.bf16.mxu0 0
    %454 = vmatpush2.bf16.msra.mxu0 0
    %455 = vmatprep.subr.bf16.mxu0 0
    %456 = vmatpush2.bf16.msra.mxu0 0
    %457 = vmatprep.subr.bf16.mxu0 0
    %458 = vmatpush2.bf16.msra.mxu0 0
    %459 = vmatprep.mubr.bf16.mxu0 0
    %460 = vmatmul.mubr.bf16.gmra.mxu0 %v425
    %v461 = vpop.f32.mrf.mxu0
    %v462 = vadd.f32 0.0, %v461
    %v463 = vpop.f32.mrf.mxu0
    %v464 = vpop.f32.mrf.mxu0
    %v465 = vadd.f32 0.0, %v464
    %v466 = vpop.f32.mrf.mxu0
    %467 = vdwg.mxu0
    %v468 = vld [vmem:[%s7] sm:$0xf]
    %v469 = vld [vmem:[%s7 + $0x4] sm:$0xf]
    %v470 = vld [vmem:[%s7 + $0x8] sm:$0xf]
    %v471 = vld [vmem:[%s7 + $0xc] sm:$0xf]
    %v476 = vunpack.c.l.b16 %v468
    %v477 = vunpack.c.l.b16 %v469
    %v478 = vunpack.c.l.b16 %v470
    %v479 = vunpack.c.l.b16 %v471
    %v480 = vpack.c.b16 %v477, %v476
    %v481 = vpack.c.b16 %v479, %v478
    %484 = vmatprep.subr.bf16.mxu0 0
    %485 = vmatpush1.bf16.msra.mxu0 0
    %486 = vmatprep.subr.bf16.mxu0 0
    %487 = vmatpush1.bf16.msra.mxu0 0
    %488 = vmatprep.subr.bf16.mxu0 0
    %489 = vmatpush1.bf16.msra.mxu0 0
    %490 = vmatprep.subr.bf16.mxu0 0
    %491 = vmatpush1.bf16.msra.mxu0 0
    %492 = vmatprep.subr.bf16.mxu0 0
    %493 = vmatpush1.bf16.msra.mxu0 0
    %494 = vmatprep.subr.bf16.mxu0 0
    %495 = vmatpush1.bf16.msra.mxu0 0
    %496 = vmatprep.subr.bf16.mxu0 0
    %497 = vmatpush1.bf16.msra.mxu0 %v481
    %498 = vmatprep.subr.bf16.mxu0 0
    %499 = vmatpush1.bf16.msra.mxu0 %v480
    %500 = vmatprep.subr.bf16.mxu0 0
    %501 = vmatpush2.bf16.msra.mxu0 0
    %502 = vmatprep.subr.bf16.mxu0 0
    %503 = vmatpush2.bf16.msra.mxu0 0
    %504 = vmatprep.subr.bf16.mxu0 0
    %505 = vmatpush2.bf16.msra.mxu0 0
    %506 = vmatprep.subr.bf16.mxu0 0
    %507 = vmatpush2.bf16.msra.mxu0 0
    %508 = vmatprep.subr.bf16.mxu0 0
    %509 = vmatpush2.bf16.msra.mxu0 0
    %510 = vmatprep.subr.bf16.mxu0 0
    %511 = vmatpush2.bf16.msra.mxu0 0
    %512 = vmatprep.subr.bf16.mxu0 0
    %513 = vmatpush2.bf16.msra.mxu0 0
    %514 = vmatprep.subr.bf16.mxu0 0
    %515 = vmatpush2.bf16.msra.mxu0 0
    %516 = vmatprep.mubr.bf16.mxu0 0
    %517 = vmatmul.mubr.bf16.gmra.mxu0 %v425
    %v518 = vpop.f32.mrf.mxu0
    %v519 = vadd.f32 0.0, %v518
    %v520 = vpop.f32.mrf.mxu0
    %v521 = vpop.f32.mrf.mxu0
    %v522 = vadd.f32 0.0, %v521
    %v523 = vpop.f32.mrf.mxu0
    %524 = vdwg.mxu0
    %v525 = vld [vmem:[%s8] sm:$0xf]
    %v526 = vld [vmem:[%s8 + $0x4] sm:$0xf]
    %v527 = vld [vmem:[%s8 + $0x8] sm:$0xf]
    %v528 = vld [vmem:[%s8 + $0xc] sm:$0xf]
    %v533 = vunpack.c.l.b16 %v525
    %v534 = vunpack.c.l.b16 %v526
    %v535 = vunpack.c.l.b16 %v527
    %v536 = vunpack.c.l.b16 %v528
    %v537 = vpack.c.b16 %v534, %v533
    %v538 = vpack.c.b16 %v536, %v535
    %541 = vmatprep.subr.bf16.mxu0 0
    %542 = vmatpush1.bf16.msra.mxu0 0
    %543 = vmatprep.subr.bf16.mxu0 0
    %544 = vmatpush1.bf16.msra.mxu0 0
    %545 = vmatprep.subr.bf16.mxu0 0
    %546 = vmatpush1.bf16.msra.mxu0 0
    %547 = vmatprep.subr.bf16.mxu0 0
    %548 = vmatpush1.bf16.msra.mxu0 0
    %549 = vmatprep.subr.bf16.mxu0 0
    %550 = vmatpush1.bf16.msra.mxu0 0
    %551 = vmatprep.subr.bf16.mxu0 0
    %552 = vmatpush1.bf16.msra.mxu0 0
    %553 = vmatprep.subr.bf16.mxu0 0
    %554 = vmatpush1.bf16.msra.mxu0 %v538
    %555 = vmatprep.subr.bf16.mxu0 0
    %556 = vmatpush1.bf16.msra.mxu0 %v537
    %557 = vmatprep.subr.bf16.mxu0 0
    %558 = vmatpush2.bf16.msra.mxu0 0
    %559 = vmatprep.subr.bf16.mxu0 0
    %560 = vmatpush2.bf16.msra.mxu0 0
    %561 = vmatprep.subr.bf16.mxu0 0
    %562 = vmatpush2.bf16.msra.mxu0 0
    %563 = vmatprep.subr.bf16.mxu0 0
    %564 = vmatpush2.bf16.msra.mxu0 0
    %565 = vmatprep.subr.bf16.mxu0 0
    %566 = vmatpush2.bf16.msra.mxu0 0
    %567 = vmatprep.subr.bf16.mxu0 0
    %568 = vmatpush2.bf16.msra.mxu0 0
    %569 = vmatprep.subr.bf16.mxu0 0
    %570 = vmatpush2.bf16.msra.mxu0 0
    %571 = vmatprep.subr.bf16.mxu0 0
    %572 = vmatpush2.bf16.msra.mxu0 0
    %573 = vmatprep.mubr.bf16.mxu0 0
    %574 = vmatmul.mubr.bf16.gmra.mxu0 %v425
    %v575 = vpop.f32.mrf.mxu0
    %v576 = vadd.f32 0.0, %v575
    %v577 = vpop.f32.mrf.mxu0
    %v578 = vpop.f32.mrf.mxu0
    %v579 = vadd.f32 0.0, %v578
    %v580 = vpop.f32.mrf.mxu0
    %581 = vdwg.mxu0
    %s582 = scalar_lea.vmem %s6, 16
    %v583 = vld [vmem:[%s582] sm:$0xf]
    %v584 = vld [vmem:[%s582 + $0x4] sm:$0xf]
    %v585 = vld [vmem:[%s582 + $0x8] sm:$0xf]
    %v586 = vld [vmem:[%s582 + $0xc] sm:$0xf]
    %v591 = vunpack.c.l.b16 %v583
    %v592 = vunpack.c.l.b16 %v584
    %v593 = vunpack.c.l.b16 %v585
    %v594 = vunpack.c.l.b16 %v586
    %v595 = vpack.c.b16 %v592, %v591
    %v596 = vpack.c.b16 %v594, %v593
    %599 = vmatprep.subr.bf16.mxu0 0
    %600 = vmatpush1.bf16.msra.mxu0 0
    %601 = vmatprep.subr.bf16.mxu0 0
    %602 = vmatpush1.bf16.msra.mxu0 0
    %603 = vmatprep.subr.bf16.mxu0 0
    %604 = vmatpush1.bf16.msra.mxu0 0
    %605 = vmatprep.subr.bf16.mxu0 0
    %606 = vmatpush1.bf16.msra.mxu0 0
    %607 = vmatprep.subr.bf16.mxu0 0
    %608 = vmatpush1.bf16.msra.mxu0 0
    %609 = vmatprep.subr.bf16.mxu0 0
    %610 = vmatpush1.bf16.msra.mxu0 0
    %611 = vmatprep.subr.bf16.mxu0 0
    %612 = vmatpush1.bf16.msra.mxu0 %v596
    %613 = vmatprep.subr.bf16.mxu0 0
    %614 = vmatpush1.bf16.msra.mxu0 %v595
    %615 = vmatprep.subr.bf16.mxu0 0
    %616 = vmatpush2.bf16.msra.mxu0 0
    %617 = vmatprep.subr.bf16.mxu0 0
    %618 = vmatpush2.bf16.msra.mxu0 0
    %619 = vmatprep.subr.bf16.mxu0 0
    %620 = vmatpush2.bf16.msra.mxu0 0
    %621 = vmatprep.subr.bf16.mxu0 0
    %622 = vmatpush2.bf16.msra.mxu0 0
    %623 = vmatprep.subr.bf16.mxu0 0
    %624 = vmatpush2.bf16.msra.mxu0 0
    %625 = vmatprep.subr.bf16.mxu0 0
    %626 = vmatpush2.bf16.msra.mxu0 0
    %627 = vmatprep.subr.bf16.mxu0 0
    %628 = vmatpush2.bf16.msra.mxu0 0
    %629 = vmatprep.subr.bf16.mxu0 0
    %630 = vmatpush2.bf16.msra.mxu0 0
    %631 = vmatprep.mubr.bf16.mxu0 0
    %632 = vmatmul.mubr.bf16.gmra.mxu0 %v425
    %v633 = vpop.f32.mrf.mxu0
    %v634 = vadd.f32 0.0, %v633
    %v635 = vpop.f32.mrf.mxu0
    %v636 = vpop.f32.mrf.mxu0
    %v637 = vadd.f32 0.0, %v636
    %v638 = vpop.f32.mrf.mxu0
    %639 = vdwg.mxu0
    %s640 = scalar_lea.vmem %s7, 16
    %v641 = vld [vmem:[%s640] sm:$0xf]
    %v642 = vld [vmem:[%s640 + $0x4] sm:$0xf]
    %v643 = vld [vmem:[%s640 + $0x8] sm:$0xf]
    %v644 = vld [vmem:[%s640 + $0xc] sm:$0xf]
    %v649 = vunpack.c.l.b16 %v641
    %v650 = vunpack.c.l.b16 %v642
    %v651 = vunpack.c.l.b16 %v643
    %v652 = vunpack.c.l.b16 %v644
    %v653 = vpack.c.b16 %v650, %v649
    %v654 = vpack.c.b16 %v652, %v651
    %657 = vmatprep.subr.bf16.mxu0 0
    %658 = vmatpush1.bf16.msra.mxu0 0
    %659 = vmatprep.subr.bf16.mxu0 0
    %660 = vmatpush1.bf16.msra.mxu0 0
    %661 = vmatprep.subr.bf16.mxu0 0
    %662 = vmatpush1.bf16.msra.mxu0 0
    %663 = vmatprep.subr.bf16.mxu0 0
    %664 = vmatpush1.bf16.msra.mxu0 0
    %665 = vmatprep.subr.bf16.mxu0 0
    %666 = vmatpush1.bf16.msra.mxu0 0
    %667 = vmatprep.subr.bf16.mxu0 0
    %668 = vmatpush1.bf16.msra.mxu0 0
    %669 = vmatprep.subr.bf16.mxu0 0
    %670 = vmatpush1.bf16.msra.mxu0 %v654
    %671 = vmatprep.subr.bf16.mxu0 0
    %672 = vmatpush1.bf16.msra.mxu0 %v653
    %673 = vmatprep.subr.bf16.mxu0 0
    %674 = vmatpush2.bf16.msra.mxu0 0
    %675 = vmatprep.subr.bf16.mxu0 0
    %676 = vmatpush2.bf16.msra.mxu0 0
    %677 = vmatprep.subr.bf16.mxu0 0
    %678 = vmatpush2.bf16.msra.mxu0 0
    %679 = vmatprep.subr.bf16.mxu0 0
    %680 = vmatpush2.bf16.msra.mxu0 0
    %681 = vmatprep.subr.bf16.mxu0 0
    %682 = vmatpush2.bf16.msra.mxu0 0
    %683 = vmatprep.subr.bf16.mxu0 0
    %684 = vmatpush2.bf16.msra.mxu0 0
    %685 = vmatprep.subr.bf16.mxu0 0
    %686 = vmatpush2.bf16.msra.mxu0 0
    %687 = vmatprep.subr.bf16.mxu0 0
    %688 = vmatpush2.bf16.msra.mxu0 0
    %689 = vmatprep.mubr.bf16.mxu0 0
    %690 = vmatmul.mubr.bf16.gmra.mxu0 %v425
    %v691 = vpop.f32.mrf.mxu0
    %v692 = vadd.f32 0.0, %v691
    %v693 = vpop.f32.mrf.mxu0
    %v694 = vpop.f32.mrf.mxu0
    %v695 = vadd.f32 0.0, %v694
    %v696 = vpop.f32.mrf.mxu0
    %697 = vdwg.mxu0
    %s698 = scalar_lea.vmem %s8, 16
    %v699 = vld [vmem:[%s698] sm:$0xf]
    %v700 = vld [vmem:[%s698 + $0x4] sm:$0xf]
    %v701 = vld [vmem:[%s698 + $0x8] sm:$0xf]
    %v702 = vld [vmem:[%s698 + $0xc] sm:$0xf]
    %v707 = vunpack.c.l.b16 %v699
    %v708 = vunpack.c.l.b16 %v700
    %v709 = vunpack.c.l.b16 %v701
    %v710 = vunpack.c.l.b16 %v702
    %v711 = vpack.c.b16 %v708, %v707
    %v712 = vpack.c.b16 %v710, %v709
    %715 = vmatprep.subr.bf16.mxu0 0
    %716 = vmatpush1.bf16.msra.mxu0 0
    %717 = vmatprep.subr.bf16.mxu0 0
    %718 = vmatpush1.bf16.msra.mxu0 0
    %719 = vmatprep.subr.bf16.mxu0 0
    %720 = vmatpush1.bf16.msra.mxu0 0
    %721 = vmatprep.subr.bf16.mxu0 0
    %722 = vmatpush1.bf16.msra.mxu0 0
    %723 = vmatprep.subr.bf16.mxu0 0
    %724 = vmatpush1.bf16.msra.mxu0 0
    %725 = vmatprep.subr.bf16.mxu0 0
    %726 = vmatpush1.bf16.msra.mxu0 0
    %727 = vmatprep.subr.bf16.mxu0 0
    %728 = vmatpush1.bf16.msra.mxu0 %v712
    %729 = vmatprep.subr.bf16.mxu0 0
    %730 = vmatpush1.bf16.msra.mxu0 %v711
    %731 = vmatprep.subr.bf16.mxu0 0
    %732 = vmatpush2.bf16.msra.mxu0 0
    %733 = vmatprep.subr.bf16.mxu0 0
    %734 = vmatpush2.bf16.msra.mxu0 0
    %735 = vmatprep.subr.bf16.mxu0 0
    %736 = vmatpush2.bf16.msra.mxu0 0
    %737 = vmatprep.subr.bf16.mxu0 0
    %738 = vmatpush2.bf16.msra.mxu0 0
    %739 = vmatprep.subr.bf16.mxu0 0
    %740 = vmatpush2.bf16.msra.mxu0 0
    %741 = vmatprep.subr.bf16.mxu0 0
    %742 = vmatpush2.bf16.msra.mxu0 0
    %743 = vmatprep.subr.bf16.mxu0 0
    %744 = vmatpush2.bf16.msra.mxu0 0
    %745 = vmatprep.subr.bf16.mxu0 0
    %746 = vmatpush2.bf16.msra.mxu0 0
    %747 = vmatprep.mubr.bf16.mxu0 0
    %748 = vmatmul.mubr.bf16.gmra.mxu0 %v425
    %v749 = vpop.f32.mrf.mxu0
    %v750 = vadd.f32 0.0, %v749
    %v751 = vpop.f32.mrf.mxu0
    %v752 = vpop.f32.mrf.mxu0
    %v753 = vadd.f32 0.0, %v752
    %v754 = vpop.f32.mrf.mxu0
    %755 = vdwg.mxu0
    %s756 = scalar_lea.vmem %s6, 32
    %v757 = vld [vmem:[%s756] sm:$0xf]
    %v758 = vld [vmem:[%s756 + $0x4] sm:$0xf]
    %v759 = vld [vmem:[%s756 + $0x8] sm:$0xf]
    %v760 = vld [vmem:[%s756 + $0xc] sm:$0xf]
    %v765 = vunpack.c.l.b16 %v757
    %v766 = vunpack.c.l.b16 %v758
    %v767 = vunpack.c.l.b16 %v759
    %v768 = vunpack.c.l.b16 %v760
    %v769 = vpack.c.b16 %v766, %v765
    %v770 = vpack.c.b16 %v768, %v767
    %773 = vmatprep.subr.bf16.mxu0 0
    %774 = vmatpush1.bf16.msra.mxu0 0
    %775 = vmatprep.subr.bf16.mxu0 0
    %776 = vmatpush1.bf16.msra.mxu0 0
    %777 = vmatprep.subr.bf16.mxu0 0
    %778 = vmatpush1.bf16.msra.mxu0 0
    %779 = vmatprep.subr.bf16.mxu0 0
    %780 = vmatpush1.bf16.msra.mxu0 0
    %781 = vmatprep.subr.bf16.mxu0 0
    %782 = vmatpush1.bf16.msra.mxu0 0
    %783 = vmatprep.subr.bf16.mxu0 0
    %784 = vmatpush1.bf16.msra.mxu0 0
    %785 = vmatprep.subr.bf16.mxu0 0
    %786 = vmatpush1.bf16.msra.mxu0 %v770
    %787 = vmatprep.subr.bf16.mxu0 0
    %788 = vmatpush1.bf16.msra.mxu0 %v769
    %789 = vmatprep.subr.bf16.mxu0 0
    %790 = vmatpush2.bf16.msra.mxu0 0
    %791 = vmatprep.subr.bf16.mxu0 0
    %792 = vmatpush2.bf16.msra.mxu0 0
    %793 = vmatprep.subr.bf16.mxu0 0
    %794 = vmatpush2.bf16.msra.mxu0 0
    %795 = vmatprep.subr.bf16.mxu0 0
    %796 = vmatpush2.bf16.msra.mxu0 0
    %797 = vmatprep.subr.bf16.mxu0 0
    %798 = vmatpush2.bf16.msra.mxu0 0
    %799 = vmatprep.subr.bf16.mxu0 0
    %800 = vmatpush2.bf16.msra.mxu0 0
    %801 = vmatprep.subr.bf16.mxu0 0
    %802 = vmatpush2.bf16.msra.mxu0 0
    %803 = vmatprep.subr.bf16.mxu0 0
    %804 = vmatpush2.bf16.msra.mxu0 0
    %805 = vmatprep.mubr.bf16.mxu0 0
    %806 = vmatmul.mubr.bf16.gmra.mxu0 %v425
    %v807 = vpop.f32.mrf.mxu0
    %v808 = vadd.f32 0.0, %v807
    %v809 = vpop.f32.mrf.mxu0
    %v810 = vpop.f32.mrf.mxu0
    %v811 = vadd.f32 0.0, %v810
    %v812 = vpop.f32.mrf.mxu0
    %813 = vdwg.mxu0
    %s814 = scalar_lea.vmem %s7, 32
    %v815 = vld [vmem:[%s814] sm:$0xf]
    %v816 = vld [vmem:[%s814 + $0x4] sm:$0xf]
    %v817 = vld [vmem:[%s814 + $0x8] sm:$0xf]
    %v818 = vld [vmem:[%s814 + $0xc] sm:$0xf]
    %v823 = vunpack.c.l.b16 %v815
    %v824 = vunpack.c.l.b16 %v816
    %v825 = vunpack.c.l.b16 %v817
    %v826 = vunpack.c.l.b16 %v818
    %v827 = vpack.c.b16 %v824, %v823
    %v828 = vpack.c.b16 %v826, %v825
    %831 = vmatprep.subr.bf16.mxu0 0
    %832 = vmatpush1.bf16.msra.mxu0 0
    %833 = vmatprep.subr.bf16.mxu0 0
    %834 = vmatpush1.bf16.msra.mxu0 0
    %835 = vmatprep.subr.bf16.mxu0 0
    %836 = vmatpush1.bf16.msra.mxu0 0
    %837 = vmatprep.subr.bf16.mxu0 0
    %838 = vmatpush1.bf16.msra.mxu0 0
    %839 = vmatprep.subr.bf16.mxu0 0
    %840 = vmatpush1.bf16.msra.mxu0 0
    %841 = vmatprep.subr.bf16.mxu0 0
    %842 = vmatpush1.bf16.msra.mxu0 0
    %843 = vmatprep.subr.bf16.mxu0 0
    %844 = vmatpush1.bf16.msra.mxu0 %v828
    %845 = vmatprep.subr.bf16.mxu0 0
    %846 = vmatpush1.bf16.msra.mxu0 %v827
    %847 = vmatprep.subr.bf16.mxu0 0
    %848 = vmatpush2.bf16.msra.mxu0 0
    %849 = vmatprep.subr.bf16.mxu0 0
    %850 = vmatpush2.bf16.msra.mxu0 0
    %851 = vmatprep.subr.bf16.mxu0 0
    %852 = vmatpush2.bf16.msra.mxu0 0
    %853 = vmatprep.subr.bf16.mxu0 0
    %854 = vmatpush2.bf16.msra.mxu0 0
    %855 = vmatprep.subr.bf16.mxu0 0
    %856 = vmatpush2.bf16.msra.mxu0 0
    %857 = vmatprep.subr.bf16.mxu0 0
    %858 = vmatpush2.bf16.msra.mxu0 0
    %859 = vmatprep.subr.bf16.mxu0 0
    %860 = vmatpush2.bf16.msra.mxu0 0
    %861 = vmatprep.subr.bf16.mxu0 0
    %862 = vmatpush2.bf16.msra.mxu0 0
    %863 = vmatprep.mubr.bf16.mxu0 0
    %864 = vmatmul.mubr.bf16.gmra.mxu0 %v425
    %v865 = vpop.f32.mrf.mxu0
    %v866 = vadd.f32 0.0, %v865
    %v867 = vpop.f32.mrf.mxu0
    %v868 = vpop.f32.mrf.mxu0
    %v869 = vadd.f32 0.0, %v868
    %v870 = vpop.f32.mrf.mxu0
    %871 = vdwg.mxu0
    %s872 = scalar_lea.vmem %s8, 32
    %v873 = vld [vmem:[%s872] sm:$0xf]
    %v874 = vld [vmem:[%s872 + $0x4] sm:$0xf]
    %v875 = vld [vmem:[%s872 + $0x8] sm:$0xf]
    %v876 = vld [vmem:[%s872 + $0xc] sm:$0xf]
    %v881 = vunpack.c.l.b16 %v873
    %v882 = vunpack.c.l.b16 %v874
    %v883 = vunpack.c.l.b16 %v875
    %v884 = vunpack.c.l.b16 %v876
    %v885 = vpack.c.b16 %v882, %v881
    %v886 = vpack.c.b16 %v884, %v883
    %889 = vmatprep.subr.bf16.mxu0 0
    %890 = vmatpush1.bf16.msra.mxu0 0
    %891 = vmatprep.subr.bf16.mxu0 0
    %892 = vmatpush1.bf16.msra.mxu0 0
    %893 = vmatprep.subr.bf16.mxu0 0
    %894 = vmatpush1.bf16.msra.mxu0 0
    %895 = vmatprep.subr.bf16.mxu0 0
    %896 = vmatpush1.bf16.msra.mxu0 0
    %897 = vmatprep.subr.bf16.mxu0 0
    %898 = vmatpush1.bf16.msra.mxu0 0
    %899 = vmatprep.subr.bf16.mxu0 0
    %900 = vmatpush1.bf16.msra.mxu0 0
    %901 = vmatprep.subr.bf16.mxu0 0
    %902 = vmatpush1.bf16.msra.mxu0 %v886
    %903 = vmatprep.subr.bf16.mxu0 0
    %904 = vmatpush1.bf16.msra.mxu0 %v885
    %905 = vmatprep.subr.bf16.mxu0 0
    %906 = vmatpush2.bf16.msra.mxu0 0
    %907 = vmatprep.subr.bf16.mxu0 0
    %908 = vmatpush2.bf16.msra.mxu0 0
    %909 = vmatprep.subr.bf16.mxu0 0
    %910 = vmatpush2.bf16.msra.mxu0 0
    %911 = vmatprep.subr.bf16.mxu0 0
    %912 = vmatpush2.bf16.msra.mxu0 0
    %913 = vmatprep.subr.bf16.mxu0 0
    %914 = vmatpush2.bf16.msra.mxu0 0
    %915 = vmatprep.subr.bf16.mxu0 0
    %916 = vmatpush2.bf16.msra.mxu0 0
    %917 = vmatprep.subr.bf16.mxu0 0
    %918 = vmatpush2.bf16.msra.mxu0 0
    %919 = vmatprep.subr.bf16.mxu0 0
    %920 = vmatpush2.bf16.msra.mxu0 0
    %921 = vmatprep.mubr.bf16.mxu0 0
    %922 = vmatmul.mubr.bf16.gmra.mxu0 %v425
    %v923 = vpop.f32.mrf.mxu0
    %v924 = vadd.f32 0.0, %v923
    %v925 = vpop.f32.mrf.mxu0
    %v926 = vpop.f32.mrf.mxu0
    %v927 = vadd.f32 0.0, %v926
    %v928 = vpop.f32.mrf.mxu0
    %929 = vdwg.mxu0
    %s930 = scalar_lea.vmem %s6, 48
    %v931 = vld [vmem:[%s930] sm:$0xf]
    %v932 = vld [vmem:[%s930 + $0x4] sm:$0xf]
    %v933 = vld [vmem:[%s930 + $0x8] sm:$0xf]
    %v934 = vld [vmem:[%s930 + $0xc] sm:$0xf]
    %v939 = vunpack.c.l.b16 %v931
    %v940 = vunpack.c.l.b16 %v932
    %v941 = vunpack.c.l.b16 %v933
    %v942 = vunpack.c.l.b16 %v934
    %v943 = vpack.c.b16 %v940, %v939
    %v944 = vpack.c.b16 %v942, %v941
    %947 = vmatprep.subr.bf16.mxu0 0
    %948 = vmatpush1.bf16.msra.mxu0 0
    %949 = vmatprep.subr.bf16.mxu0 0
    %950 = vmatpush1.bf16.msra.mxu0 0
    %951 = vmatprep.subr.bf16.mxu0 0
    %952 = vmatpush1.bf16.msra.mxu0 0
    %953 = vmatprep.subr.bf16.mxu0 0
    %954 = vmatpush1.bf16.msra.mxu0 0
    %955 = vmatprep.subr.bf16.mxu0 0
    %956 = vmatpush1.bf16.msra.mxu0 0
    %957 = vmatprep.subr.bf16.mxu0 0
    %958 = vmatpush1.bf16.msra.mxu0 0
    %959 = vmatprep.subr.bf16.mxu0 0
    %960 = vmatpush1.bf16.msra.mxu0 %v944
    %961 = vmatprep.subr.bf16.mxu0 0
    %962 = vmatpush1.bf16.msra.mxu0 %v943
    %963 = vmatprep.subr.bf16.mxu0 0
    %964 = vmatpush2.bf16.msra.mxu0 0
    %965 = vmatprep.subr.bf16.mxu0 0
    %966 = vmatpush2.bf16.msra.mxu0 0
    %967 = vmatprep.subr.bf16.mxu0 0
    %968 = vmatpush2.bf16.msra.mxu0 0
    %969 = vmatprep.subr.bf16.mxu0 0
    %970 = vmatpush2.bf16.msra.mxu0 0
    %971 = vmatprep.subr.bf16.mxu0 0
    %972 = vmatpush2.bf16.msra.mxu0 0
    %973 = vmatprep.subr.bf16.mxu0 0
    %974 = vmatpush2.bf16.msra.mxu0 0
    %975 = vmatprep.subr.bf16.mxu0 0
    %976 = vmatpush2.bf16.msra.mxu0 0
    %977 = vmatprep.subr.bf16.mxu0 0
    %978 = vmatpush2.bf16.msra.mxu0 0
    %979 = vmatprep.mubr.bf16.mxu0 0
    %980 = vmatmul.mubr.bf16.gmra.mxu0 %v425
    %v981 = vpop.f32.mrf.mxu0
    %v982 = vadd.f32 0.0, %v981
    %v983 = vpop.f32.mrf.mxu0
    %v984 = vpop.f32.mrf.mxu0
    %v985 = vadd.f32 0.0, %v984
    %v986 = vpop.f32.mrf.mxu0
    %987 = vdwg.mxu0
    %s988 = scalar_lea.vmem %s7, 48
    %v989 = vld [vmem:[%s988] sm:$0xf]
    %v990 = vld [vmem:[%s988 + $0x4] sm:$0xf]
    %v991 = vld [vmem:[%s988 + $0x8] sm:$0xf]
    %v992 = vld [vmem:[%s988 + $0xc] sm:$0xf]
    %v997 = vunpack.c.l.b16 %v989
    %v998 = vunpack.c.l.b16 %v990
    %v999 = vunpack.c.l.b16 %v991
    %v1000 = vunpack.c.l.b16 %v992
    %v1001 = vpack.c.b16 %v998, %v997
    %v1002 = vpack.c.b16 %v1000, %v999
    %1005 = vmatprep.subr.bf16.mxu0 0
    %1006 = vmatpush1.bf16.msra.mxu0 0
    %1007 = vmatprep.subr.bf16.mxu0 0
    %1008 = vmatpush1.bf16.msra.mxu0 0
    %1009 = vmatprep.subr.bf16.mxu0 0
    %1010 = vmatpush1.bf16.msra.mxu0 0
    %1011 = vmatprep.subr.bf16.mxu0 0
    %1012 = vmatpush1.bf16.msra.mxu0 0
    %1013 = vmatprep.subr.bf16.mxu0 0
    %1014 = vmatpush1.bf16.msra.mxu0 0
    %1015 = vmatprep.subr.bf16.mxu0 0
    %1016 = vmatpush1.bf16.msra.mxu0 0
    %1017 = vmatprep.subr.bf16.mxu0 0
    %1018 = vmatpush1.bf16.msra.mxu0 %v1002
    %1019 = vmatprep.subr.bf16.mxu0 0
    %1020 = vmatpush1.bf16.msra.mxu0 %v1001
    %1021 = vmatprep.subr.bf16.mxu0 0
    %1022 = vmatpush2.bf16.msra.mxu0 0
    %1023 = vmatprep.subr.bf16.mxu0 0
    %1024 = vmatpush2.bf16.msra.mxu0 0
    %1025 = vmatprep.subr.bf16.mxu0 0
    %1026 = vmatpush2.bf16.msra.mxu0 0
    %1027 = vmatprep.subr.bf16.mxu0 0
    %1028 = vmatpush2.bf16.msra.mxu0 0
    %1029 = vmatprep.subr.bf16.mxu0 0
    %1030 = vmatpush2.bf16.msra.mxu0 0
    %1031 = vmatprep.subr.bf16.mxu0 0
    %1032 = vmatpush2.bf16.msra.mxu0 0
    %1033 = vmatprep.subr.bf16.mxu0 0
    %1034 = vmatpush2.bf16.msra.mxu0 0
    %1035 = vmatprep.subr.bf16.mxu0 0
    %1036 = vmatpush2.bf16.msra.mxu0 0
    %1037 = vmatprep.mubr.bf16.mxu0 0
    %1038 = vmatmul.mubr.bf16.gmra.mxu0 %v425
    %v1039 = vpop.f32.mrf.mxu0
    %v1040 = vadd.f32 0.0, %v1039
    %v1041 = vpop.f32.mrf.mxu0
    %v1042 = vpop.f32.mrf.mxu0
    %v1043 = vadd.f32 0.0, %v1042
    %v1044 = vpop.f32.mrf.mxu0
    %1045 = vdwg.mxu0
    %s1046 = scalar_lea.vmem %s8, 48
    %v1047 = vld [vmem:[%s1046] sm:$0xf]
    %v1048 = vld [vmem:[%s1046 + $0x4] sm:$0xf]
    %v1049 = vld [vmem:[%s1046 + $0x8] sm:$0xf]
    %v1050 = vld [vmem:[%s1046 + $0xc] sm:$0xf]
    %v1055 = vunpack.c.l.b16 %v1047
    %v1056 = vunpack.c.l.b16 %v1048
    %v1057 = vunpack.c.l.b16 %v1049
    %v1058 = vunpack.c.l.b16 %v1050
    %v1059 = vpack.c.b16 %v1056, %v1055
    %v1060 = vpack.c.b16 %v1058, %v1057
    %1063 = vmatprep.subr.bf16.mxu0 0
    %1064 = vmatpush1.bf16.msra.mxu0 0
    %1065 = vmatprep.subr.bf16.mxu0 0
    %1066 = vmatpush1.bf16.msra.mxu0 0
    %1067 = vmatprep.subr.bf16.mxu0 0
    %1068 = vmatpush1.bf16.msra.mxu0 0
    %1069 = vmatprep.subr.bf16.mxu0 0
    %1070 = vmatpush1.bf16.msra.mxu0 0
    %1071 = vmatprep.subr.bf16.mxu0 0
    %1072 = vmatpush1.bf16.msra.mxu0 0
    %1073 = vmatprep.subr.bf16.mxu0 0
    %1074 = vmatpush1.bf16.msra.mxu0 0
    %1075 = vmatprep.subr.bf16.mxu0 0
    %1076 = vmatpush1.bf16.msra.mxu0 %v1060
    %1077 = vmatprep.subr.bf16.mxu0 0
    %1078 = vmatpush1.bf16.msra.mxu0 %v1059
    %1079 = vmatprep.subr.bf16.mxu0 0
    %1080 = vmatpush2.bf16.msra.mxu0 0
    %1081 = vmatprep.subr.bf16.mxu0 0
    %1082 = vmatpush2.bf16.msra.mxu0 0
    %1083 = vmatprep.subr.bf16.mxu0 0
    %1084 = vmatpush2.bf16.msra.mxu0 0
    %1085 = vmatprep.subr.bf16.mxu0 0
    %1086 = vmatpush2.bf16.msra.mxu0 0
    %1087 = vmatprep.subr.bf16.mxu0 0
    %1088 = vmatpush2.bf16.msra.mxu0 0
    %1089 = vmatprep.subr.bf16.mxu0 0
    %1090 = vmatpush2.bf16.msra.mxu0 0
    %1091 = vmatprep.subr.bf16.mxu0 0
    %1092 = vmatpush2.bf16.msra.mxu0 0
    %1093 = vmatprep.subr.bf16.mxu0 0
    %1094 = vmatpush2.bf16.msra.mxu0 0
    %1095 = vmatprep.mubr.bf16.mxu0 0
    %1096 = vmatmul.mubr.bf16.gmra.mxu0 %v425
    %v1097 = vpop.f32.mrf.mxu0
    %v1098 = vadd.f32 0.0, %v1097
    %v1099 = vpop.f32.mrf.mxu0
    %v1100 = vpop.f32.mrf.mxu0
    %v1101 = vadd.f32 0.0, %v1100
    %v1102 = vpop.f32.mrf.mxu0
    %1103 = vdwg.mxu0
    %v1104 = vpack.c.bf16 %v462, %v462
    %v1105 = vpack.c.bf16 %v465, %v465
    %v1106 = vpack.c.bf16 %v634, %v634
    %v1107 = vpack.c.bf16 %v637, %v637
    %v1108 = vpack.c.bf16 %v808, %v808
    %v1109 = vpack.c.bf16 %v811, %v811
    %v1110 = vpack.c.bf16 %v982, %v982
    %v1111 = vpack.c.bf16 %v985, %v985
    %v1112 = vpack.c.bf16 %v519, %v519
    %v1113 = vpack.c.bf16 %v522, %v522
    %v1114 = vpack.c.bf16 %v692, %v692
    %v1115 = vpack.c.bf16 %v695, %v695
    %v1116 = vpack.c.bf16 %v866, %v866
    %v1117 = vpack.c.bf16 %v869, %v869
    %v1118 = vpack.c.bf16 %v1040, %v1040
    %v1119 = vpack.c.bf16 %v1043, %v1043
    %v1120 = vpack.c.bf16 %v576, %v576
    %v1121 = vpack.c.bf16 %v579, %v579
    %v1122 = vpack.c.bf16 %v750, %v750
    %v1123 = vpack.c.bf16 %v753, %v753
    %v1124 = vpack.c.bf16 %v924, %v924
    %v1125 = vpack.c.bf16 %v927, %v927
    %v1126 = vpack.c.bf16 %v1098, %v1098
    %v1127 = vpack.c.bf16 %v1101, %v1101
    %vm1128 = vcmask 64512
    %v1130 = vsel %vm1128, %v1104, 0
    %v1133 = vsel %vm1128, %v1112, 0
    %1135 = vmatprep.subr.bf16.mxu0 0
    %1136 = vmatpush1.bf16.xpose.msra.mxu0 0
    %1137 = vmatprep.subr.bf16.mxu0 0
    %1138 = vmatpush1.bf16.xpose.msra.mxu0 0
    %1139 = vmatprep.subr.bf16.mxu0 0
    %1140 = vmatpush1.bf16.xpose.msra.mxu0 0
    %1141 = vmatprep.subr.bf16.mxu0 0
    %1142 = vmatpush1.bf16.xpose.msra.mxu0 0
    %1143 = vmatprep.subr.bf16.mxu0 0
    %1144 = vmatpush1.bf16.xpose.msra.mxu0 0
    %1145 = vmatprep.subr.bf16.mxu0 0
    %1146 = vmatpush1.bf16.xpose.msra.mxu0 0
    %1147 = vmatprep.subr.bf16.mxu0 0
    %1148 = vmatpush1.bf16.xpose.msra.mxu0 0
    %1149 = vmatprep.subr.bf16.mxu0 0
    %1150 = vmatpush1.bf16.xpose.msra.mxu0 %v1133
    %1151 = vmatprep.subr.bf16.mxu0 0
    %1152 = vmatpush2.bf16.xpose.msra.mxu0 0
    %1153 = vmatprep.subr.bf16.mxu0 0
    %1154 = vmatpush2.bf16.xpose.msra.mxu0 0
    %1155 = vmatprep.subr.bf16.mxu0 0
    %1156 = vmatpush2.bf16.xpose.msra.mxu0 0
    %1157 = vmatprep.subr.bf16.mxu0 0
    %1158 = vmatpush2.bf16.xpose.msra.mxu0 0
    %1159 = vmatprep.subr.bf16.mxu0 0
    %1160 = vmatpush2.bf16.xpose.msra.mxu0 0
    %1161 = vmatprep.subr.bf16.mxu0 0
    %1162 = vmatpush2.bf16.xpose.msra.mxu0 0
    %1163 = vmatprep.subr.bf16.mxu0 0
    %1164 = vmatpush2.bf16.xpose.msra.mxu0 0
    %1165 = vmatprep.subr.bf16.mxu0 0
    %1166 = vmatpush2.bf16.xpose.msra.mxu0 0
    %1167 = vmatprep.mubr.bf16.mxu0 0
    %1168 = vmatmul.mubr.bf16.gmra.mxu0 %v1130
    %v1169 = vpop.f32.mrf.mxu0
    %v1170 = vadd.f32 0.0, %v1169
    %v1171 = vpop.f32.mrf.mxu0
    %v1172 = vpop.f32.mrf.mxu0
    %v1173 = vpop.f32.mrf.mxu0
    %1174 = vdwg.mxu0
    %v1176 = vsel %vm1128, %v1105, 0
    %v1179 = vsel %vm1128, %v1113, 0
    %1181 = vmatprep.subr.bf16.mxu0 0
    %1182 = vmatpush1.bf16.xpose.msra.mxu0 0
    %1183 = vmatprep.subr.bf16.mxu0 0
    %1184 = vmatpush1.bf16.xpose.msra.mxu0 0
    %1185 = vmatprep.subr.bf16.mxu0 0
    %1186 = vmatpush1.bf16.xpose.msra.mxu0 0
    %1187 = vmatprep.subr.bf16.mxu0 0
    %1188 = vmatpush1.bf16.xpose.msra.mxu0 0
    %1189 = vmatprep.subr.bf16.mxu0 0
    %1190 = vmatpush1.bf16.xpose.msra.mxu0 0
    %1191 = vmatprep.subr.bf16.mxu0 0
    %1192 = vmatpush1.bf16.xpose.msra.mxu0 0
    %1193 = vmatprep.subr.bf16.mxu0 0
    %1194 = vmatpush1.bf16.xpose.msra.mxu0 0
    %1195 = vmatprep.subr.bf16.mxu0 0
    %1196 = vmatpush1.bf16.xpose.msra.mxu0 %v1179
    %1197 = vmatprep.subr.bf16.mxu0 0
    %1198 = vmatpush2.bf16.xpose.msra.mxu0 0
    %1199 = vmatprep.subr.bf16.mxu0 0
    %1200 = vmatpush2.bf16.xpose.msra.mxu0 0
    %1201 = vmatprep.subr.bf16.mxu0 0
    %1202 = vmatpush2.bf16.xpose.msra.mxu0 0
    %1203 = vmatprep.subr.bf16.mxu0 0
    %1204 = vmatpush2.bf16.xpose.msra.mxu0 0
    %1205 = vmatprep.subr.bf16.mxu0 0
    %1206 = vmatpush2.bf16.xpose.msra.mxu0 0
    %1207 = vmatprep.subr.bf16.mxu0 0
    %1208 = vmatpush2.bf16.xpose.msra.mxu0 0
    %1209 = vmatprep.subr.bf16.mxu0 0
    %1210 = vmatpush2.bf16.xpose.msra.mxu0 0
    %1211 = vmatprep.subr.bf16.mxu0 0
    %1212 = vmatpush2.bf16.xpose.msra.mxu0 0
    %1213 = vmatprep.mubr.bf16.mxu0 0
    %1214 = vmatmul.mubr.bf16.gmra.mxu0 %v1176
    %v1215 = vpop.f32.mrf.mxu0
    %v1216 = vadd.f32 0.0, %v1215
    %v1217 = vpop.f32.mrf.mxu0
    %v1218 = vpop.f32.mrf.mxu0
    %v1219 = vpop.f32.mrf.mxu0
    %1220 = vdwg.mxu0
    %v1222 = vsel %vm1128, %v1106, 0
    %v1225 = vsel %vm1128, %v1114, 0
    %1227 = vmatprep.subr.bf16.mxu0 0
    %1228 = vmatpush1.bf16.xpose.msra.mxu0 0
    %1229 = vmatprep.subr.bf16.mxu0 0
    %1230 = vmatpush1.bf16.xpose.msra.mxu0 0
    %1231 = vmatprep.subr.bf16.mxu0 0
    %1232 = vmatpush1.bf16.xpose.msra.mxu0 0
    %1233 = vmatprep.subr.bf16.mxu0 0
    %1234 = vmatpush1.bf16.xpose.msra.mxu0 0
    %1235 = vmatprep.subr.bf16.mxu0 0
    %1236 = vmatpush1.bf16.xpose.msra.mxu0 0
    %1237 = vmatprep.subr.bf16.mxu0 0
    %1238 = vmatpush1.bf16.xpose.msra.mxu0 0
    %1239 = vmatprep.subr.bf16.mxu0 0
    %1240 = vmatpush1.bf16.xpose.msra.mxu0 0
    %1241 = vmatprep.subr.bf16.mxu0 0
    %1242 = vmatpush1.bf16.xpose.msra.mxu0 %v1225
    %1243 = vmatprep.subr.bf16.mxu0 0
    %1244 = vmatpush2.bf16.xpose.msra.mxu0 0
    %1245 = vmatprep.subr.bf16.mxu0 0
    %1246 = vmatpush2.bf16.xpose.msra.mxu0 0
    %1247 = vmatprep.subr.bf16.mxu0 0
    %1248 = vmatpush2.bf16.xpose.msra.mxu0 0
    %1249 = vmatprep.subr.bf16.mxu0 0
    %1250 = vmatpush2.bf16.xpose.msra.mxu0 0
    %1251 = vmatprep.subr.bf16.mxu0 0
    %1252 = vmatpush2.bf16.xpose.msra.mxu0 0
    %1253 = vmatprep.subr.bf16.mxu0 0
    %1254 = vmatpush2.bf16.xpose.msra.mxu0 0
    %1255 = vmatprep.subr.bf16.mxu0 0
    %1256 = vmatpush2.bf16.xpose.msra.mxu0 0
    %1257 = vmatprep.subr.bf16.mxu0 0
    %1258 = vmatpush2.bf16.xpose.msra.mxu0 0
    %1259 = vmatprep.mubr.bf16.mxu0 0
    %1260 = vmatmul.mubr.bf16.gmra.mxu0 %v1222
    %v1261 = vpop.f32.mrf.mxu0
    %v1262 = vadd.f32 0.0, %v1261
    %v1263 = vpop.f32.mrf.mxu0
    %v1264 = vpop.f32.mrf.mxu0
    %v1265 = vpop.f32.mrf.mxu0
    %1266 = vdwg.mxu0
    %v1268 = vsel %vm1128, %v1107, 0
    %v1271 = vsel %vm1128, %v1115, 0
    %1273 = vmatprep.subr.bf16.mxu0 0
    %1274 = vmatpush1.bf16.xpose.msra.mxu0 0
    %1275 = vmatprep.subr.bf16.mxu0 0
    %1276 = vmatpush1.bf16.xpose.msra.mxu0 0
    %1277 = vmatprep.subr.bf16.mxu0 0
    %1278 = vmatpush1.bf16.xpose.msra.mxu0 0
    %1279 = vmatprep.subr.bf16.mxu0 0
    %1280 = vmatpush1.bf16.xpose.msra.mxu0 0
    %1281 = vmatprep.subr.bf16.mxu0 0
    %1282 = vmatpush1.bf16.xpose.msra.mxu0 0
    %1283 = vmatprep.subr.bf16.mxu0 0
    %1284 = vmatpush1.bf16.xpose.msra.mxu0 0
    %1285 = vmatprep.subr.bf16.mxu0 0
    %1286 = vmatpush1.bf16.xpose.msra.mxu0 0
    %1287 = vmatprep.subr.bf16.mxu0 0
    %1288 = vmatpush1.bf16.xpose.msra.mxu0 %v1271
    %1289 = vmatprep.subr.bf16.mxu0 0
    %1290 = vmatpush2.bf16.xpose.msra.mxu0 0
    %1291 = vmatprep.subr.bf16.mxu0 0
    %1292 = vmatpush2.bf16.xpose.msra.mxu0 0
    %1293 = vmatprep.subr.bf16.mxu0 0
    %1294 = vmatpush2.bf16.xpose.msra.mxu0 0
    %1295 = vmatprep.subr.bf16.mxu0 0
    %1296 = vmatpush2.bf16.xpose.msra.mxu0 0
    %1297 = vmatprep.subr.bf16.mxu0 0
    %1298 = vmatpush2.bf16.xpose.msra.mxu0 0
    %1299 = vmatprep.subr.bf16.mxu0 0
    %1300 = vmatpush2.bf16.xpose.msra.mxu0 0
    %1301 = vmatprep.subr.bf16.mxu0 0
    %1302 = vmatpush2.bf16.xpose.msra.mxu0 0
    %1303 = vmatprep.subr.bf16.mxu0 0
    %1304 = vmatpush2.bf16.xpose.msra.mxu0 0
    %1305 = vmatprep.mubr.bf16.mxu0 0
    %1306 = vmatmul.mubr.bf16.gmra.mxu0 %v1268
    %v1307 = vpop.f32.mrf.mxu0
    %v1308 = vadd.f32 0.0, %v1307
    %v1309 = vpop.f32.mrf.mxu0
    %v1310 = vpop.f32.mrf.mxu0
    %v1311 = vpop.f32.mrf.mxu0
    %1312 = vdwg.mxu0
    %v1314 = vsel %vm1128, %v1108, 0
    %v1317 = vsel %vm1128, %v1116, 0
    %1319 = vmatprep.subr.bf16.mxu0 0
    %1320 = vmatpush1.bf16.xpose.msra.mxu0 0
    %1321 = vmatprep.subr.bf16.mxu0 0
    %1322 = vmatpush1.bf16.xpose.msra.mxu0 0
    %1323 = vmatprep.subr.bf16.mxu0 0
    %1324 = vmatpush1.bf16.xpose.msra.mxu0 0
    %1325 = vmatprep.subr.bf16.mxu0 0
    %1326 = vmatpush1.bf16.xpose.msra.mxu0 0
    %1327 = vmatprep.subr.bf16.mxu0 0
    %1328 = vmatpush1.bf16.xpose.msra.mxu0 0
    %1329 = vmatprep.subr.bf16.mxu0 0
    %1330 = vmatpush1.bf16.xpose.msra.mxu0 0
    %1331 = vmatprep.subr.bf16.mxu0 0
    %1332 = vmatpush1.bf16.xpose.msra.mxu0 0
    %1333 = vmatprep.subr.bf16.mxu0 0
    %1334 = vmatpush1.bf16.xpose.msra.mxu0 %v1317
    %1335 = vmatprep.subr.bf16.mxu0 0
    %1336 = vmatpush2.bf16.xpose.msra.mxu0 0
    %1337 = vmatprep.subr.bf16.mxu0 0
    %1338 = vmatpush2.bf16.xpose.msra.mxu0 0
    %1339 = vmatprep.subr.bf16.mxu0 0
    %1340 = vmatpush2.bf16.xpose.msra.mxu0 0
    %1341 = vmatprep.subr.bf16.mxu0 0
    %1342 = vmatpush2.bf16.xpose.msra.mxu0 0
    %1343 = vmatprep.subr.bf16.mxu0 0
    %1344 = vmatpush2.bf16.xpose.msra.mxu0 0
    %1345 = vmatprep.subr.bf16.mxu0 0
    %1346 = vmatpush2.bf16.xpose.msra.mxu0 0
    %1347 = vmatprep.subr.bf16.mxu0 0
    %1348 = vmatpush2.bf16.xpose.msra.mxu0 0
    %1349 = vmatprep.subr.bf16.mxu0 0
    %1350 = vmatpush2.bf16.xpose.msra.mxu0 0
    %1351 = vmatprep.mubr.bf16.mxu0 0
    %1352 = vmatmul.mubr.bf16.gmra.mxu0 %v1314
    %v1353 = vpop.f32.mrf.mxu0
    %v1354 = vadd.f32 0.0, %v1353
    %v1355 = vpop.f32.mrf.mxu0
    %v1356 = vpop.f32.mrf.mxu0
    %v1357 = vpop.f32.mrf.mxu0
    %1358 = vdwg.mxu0
    %v1360 = vsel %vm1128, %v1109, 0
    %v1363 = vsel %vm1128, %v1117, 0
    %1365 = vmatprep.subr.bf16.mxu0 0
    %1366 = vmatpush1.bf16.xpose.msra.mxu0 0
    %1367 = vmatprep.subr.bf16.mxu0 0
    %1368 = vmatpush1.bf16.xpose.msra.mxu0 0
    %1369 = vmatprep.subr.bf16.mxu0 0
    %1370 = vmatpush1.bf16.xpose.msra.mxu0 0
    %1371 = vmatprep.subr.bf16.mxu0 0
    %1372 = vmatpush1.bf16.xpose.msra.mxu0 0
    %1373 = vmatprep.subr.bf16.mxu0 0
    %1374 = vmatpush1.bf16.xpose.msra.mxu0 0
    %1375 = vmatprep.subr.bf16.mxu0 0
    %1376 = vmatpush1.bf16.xpose.msra.mxu0 0
    %1377 = vmatprep.subr.bf16.mxu0 0
    %1378 = vmatpush1.bf16.xpose.msra.mxu0 0
    %1379 = vmatprep.subr.bf16.mxu0 0
    %1380 = vmatpush1.bf16.xpose.msra.mxu0 %v1363
    %1381 = vmatprep.subr.bf16.mxu0 0
    %1382 = vmatpush2.bf16.xpose.msra.mxu0 0
    %1383 = vmatprep.subr.bf16.mxu0 0
    %1384 = vmatpush2.bf16.xpose.msra.mxu0 0
    %1385 = vmatprep.subr.bf16.mxu0 0
    %1386 = vmatpush2.bf16.xpose.msra.mxu0 0
    %1387 = vmatprep.subr.bf16.mxu0 0
    %1388 = vmatpush2.bf16.xpose.msra.mxu0 0
    %1389 = vmatprep.subr.bf16.mxu0 0
    %1390 = vmatpush2.bf16.xpose.msra.mxu0 0
    %1391 = vmatprep.subr.bf16.mxu0 0
    %1392 = vmatpush2.bf16.xpose.msra.mxu0 0
    %1393 = vmatprep.subr.bf16.mxu0 0
    %1394 = vmatpush2.bf16.xpose.msra.mxu0 0
    %1395 = vmatprep.subr.bf16.mxu0 0
    %1396 = vmatpush2.bf16.xpose.msra.mxu0 0
    %1397 = vmatprep.mubr.bf16.mxu0 0
    %1398 = vmatmul.mubr.bf16.gmra.mxu0 %v1360
    %v1399 = vpop.f32.mrf.mxu0
    %v1400 = vadd.f32 0.0, %v1399
    %v1401 = vpop.f32.mrf.mxu0
    %v1402 = vpop.f32.mrf.mxu0
    %v1403 = vpop.f32.mrf.mxu0
    %1404 = vdwg.mxu0
    %v1406 = vsel %vm1128, %v1110, 0
    %v1409 = vsel %vm1128, %v1118, 0
    %1411 = vmatprep.subr.bf16.mxu0 0
    %1412 = vmatpush1.bf16.xpose.msra.mxu0 0
    %1413 = vmatprep.subr.bf16.mxu0 0
    %1414 = vmatpush1.bf16.xpose.msra.mxu0 0
    %1415 = vmatprep.subr.bf16.mxu0 0
    %1416 = vmatpush1.bf16.xpose.msra.mxu0 0
    %1417 = vmatprep.subr.bf16.mxu0 0
    %1418 = vmatpush1.bf16.xpose.msra.mxu0 0
    %1419 = vmatprep.subr.bf16.mxu0 0
    %1420 = vmatpush1.bf16.xpose.msra.mxu0 0
    %1421 = vmatprep.subr.bf16.mxu0 0
    %1422 = vmatpush1.bf16.xpose.msra.mxu0 0
    %1423 = vmatprep.subr.bf16.mxu0 0
    %1424 = vmatpush1.bf16.xpose.msra.mxu0 0
    %1425 = vmatprep.subr.bf16.mxu0 0
    %1426 = vmatpush1.bf16.xpose.msra.mxu0 %v1409
    %1427 = vmatprep.subr.bf16.mxu0 0
    %1428 = vmatpush2.bf16.xpose.msra.mxu0 0
    %1429 = vmatprep.subr.bf16.mxu0 0
    %1430 = vmatpush2.bf16.xpose.msra.mxu0 0
    %1431 = vmatprep.subr.bf16.mxu0 0
    %1432 = vmatpush2.bf16.xpose.msra.mxu0 0
    %1433 = vmatprep.subr.bf16.mxu0 0
    %1434 = vmatpush2.bf16.xpose.msra.mxu0 0
    %1435 = vmatprep.subr.bf16.mxu0 0
    %1436 = vmatpush2.bf16.xpose.msra.mxu0 0
    %1437 = vmatprep.subr.bf16.mxu0 0
    %1438 = vmatpush2.bf16.xpose.msra.mxu0 0
    %1439 = vmatprep.subr.bf16.mxu0 0
    %1440 = vmatpush2.bf16.xpose.msra.mxu0 0
    %1441 = vmatprep.subr.bf16.mxu0 0
    %1442 = vmatpush2.bf16.xpose.msra.mxu0 0
    %1443 = vmatprep.mubr.bf16.mxu0 0
    %1444 = vmatmul.mubr.bf16.gmra.mxu0 %v1406
    %v1445 = vpop.f32.mrf.mxu0
    %v1446 = vadd.f32 0.0, %v1445
    %v1447 = vpop.f32.mrf.mxu0
    %v1448 = vpop.f32.mrf.mxu0
    %v1449 = vpop.f32.mrf.mxu0
    %1450 = vdwg.mxu0
    %v1452 = vsel %vm1128, %v1111, 0
    %v1455 = vsel %vm1128, %v1119, 0
    %1457 = vmatprep.subr.bf16.mxu0 0
    %1458 = vmatpush1.bf16.xpose.msra.mxu0 0
    %1459 = vmatprep.subr.bf16.mxu0 0
    %1460 = vmatpush1.bf16.xpose.msra.mxu0 0
    %1461 = vmatprep.subr.bf16.mxu0 0
    %1462 = vmatpush1.bf16.xpose.msra.mxu0 0
    %1463 = vmatprep.subr.bf16.mxu0 0
    %1464 = vmatpush1.bf16.xpose.msra.mxu0 0
    %1465 = vmatprep.subr.bf16.mxu0 0
    %1466 = vmatpush1.bf16.xpose.msra.mxu0 0
    %1467 = vmatprep.subr.bf16.mxu0 0
    %1468 = vmatpush1.bf16.xpose.msra.mxu0 0
    %1469 = vmatprep.subr.bf16.mxu0 0
    %1470 = vmatpush1.bf16.xpose.msra.mxu0 0
    %1471 = vmatprep.subr.bf16.mxu0 0
    %1472 = vmatpush1.bf16.xpose.msra.mxu0 %v1455
    %1473 = vmatprep.subr.bf16.mxu0 0
    %1474 = vmatpush2.bf16.xpose.msra.mxu0 0
    %1475 = vmatprep.subr.bf16.mxu0 0
    %1476 = vmatpush2.bf16.xpose.msra.mxu0 0
    %1477 = vmatprep.subr.bf16.mxu0 0
    %1478 = vmatpush2.bf16.xpose.msra.mxu0 0
    %1479 = vmatprep.subr.bf16.mxu0 0
    %1480 = vmatpush2.bf16.xpose.msra.mxu0 0
    %1481 = vmatprep.subr.bf16.mxu0 0
    %1482 = vmatpush2.bf16.xpose.msra.mxu0 0
    %1483 = vmatprep.subr.bf16.mxu0 0
    %1484 = vmatpush2.bf16.xpose.msra.mxu0 0
    %1485 = vmatprep.subr.bf16.mxu0 0
    %1486 = vmatpush2.bf16.xpose.msra.mxu0 0
    %1487 = vmatprep.subr.bf16.mxu0 0
    %1488 = vmatpush2.bf16.xpose.msra.mxu0 0
    %1489 = vmatprep.mubr.bf16.mxu0 0
    %1490 = vmatmul.mubr.bf16.gmra.mxu0 %v1452
    %v1491 = vpop.f32.mrf.mxu0
    %v1492 = vadd.f32 0.0, %v1491
    %v1493 = vpop.f32.mrf.mxu0
    %v1494 = vpop.f32.mrf.mxu0
    %v1495 = vpop.f32.mrf.mxu0
    %1496 = vdwg.mxu0
    %v1497 = vsel %vm1128, %v1170, -inf
    %1498 = vmax.xlane.f32.xlu0 %v1497
    %v1499 = vpop.xlane.xlu0 %1498
    %v1500 = vsel %vm1128, %v1216, -inf
    %1501 = vmax.xlane.f32.xlu0 %v1500
    %v1502 = vpop.xlane.xlu0 %1501
    %v1503 = vsel %vm1128, %v1262, -inf
    %1504 = vmax.xlane.f32.xlu0 %v1503
    %v1505 = vpop.xlane.xlu0 %1504
    %v1506 = vsel %vm1128, %v1308, -inf
    %1507 = vmax.xlane.f32.xlu0 %v1506
    %v1508 = vpop.xlane.xlu0 %1507
    %v1509 = vsel %vm1128, %v1354, -inf
    %1510 = vmax.xlane.f32.xlu0 %v1509
    %v1511 = vpop.xlane.xlu0 %1510
    %v1512 = vsel %vm1128, %v1400, -inf
    %1513 = vmax.xlane.f32.xlu0 %v1512
    %v1514 = vpop.xlane.xlu0 %1513
    %v1515 = vsel %vm1128, %v1446, -inf
    %1516 = vmax.xlane.f32.xlu0 %v1515
    %v1517 = vpop.xlane.xlu0 %1516
    %v1518 = vsel %vm1128, %v1492, -inf
    %1519 = vmax.xlane.f32.xlu0 %v1518
    %v1520 = vpop.xlane.xlu0 %1519
    %v1521 = vsub.f32 %v1170, %v1499
    %v1522 = vsub.f32 %v1216, %v1502
    %v1523 = vsub.f32 %v1262, %v1505
    %v1524 = vsub.f32 %v1308, %v1508
    %v1525 = vsub.f32 %v1354, %v1511
    %v1526 = vsub.f32 %v1400, %v1514
    %v1527 = vsub.f32 %v1446, %v1517
    %v1528 = vsub.f32 %v1492, %v1520
    %v1529 = vmul.f32 %v1521, 1.442695
    %v1530 = vpow.pop %v1529
    %v1531 = vmul.f32 %v1522, 1.442695
    %v1532 = vpow.pop %v1531
    %v1533 = vmul.f32 %v1523, 1.442695
    %v1534 = vpow.pop %v1533
    %v1535 = vmul.f32 %v1524, 1.442695
    %v1536 = vpow.pop %v1535
    %v1537 = vmul.f32 %v1525, 1.442695
    %v1538 = vpow.pop %v1537
    %v1539 = vmul.f32 %v1526, 1.442695
    %v1540 = vpow.pop %v1539
    %v1541 = vmul.f32 %v1527, 1.442695
    %v1542 = vpow.pop %v1541
    %v1543 = vmul.f32 %v1528, 1.442695
    %v1544 = vpow.pop %v1543
    %v1545 = vsel %vm1128, %v1530, 0.0
    %1546 = vadd.xlane.f32.xlu0 %v1545
    %v1547 = vpop.xlane.xlu0 %1546
    %v1548 = vsel %vm1128, %v1532, 0.0
    %1549 = vadd.xlane.f32.xlu0 %v1548
    %v1550 = vpop.xlane.xlu0 %1549
    %v1551 = vsel %vm1128, %v1534, 0.0
    %1552 = vadd.xlane.f32.xlu0 %v1551
    %v1553 = vpop.xlane.xlu0 %1552
    %v1554 = vsel %vm1128, %v1536, 0.0
    %1555 = vadd.xlane.f32.xlu0 %v1554
    %v1556 = vpop.xlane.xlu0 %1555
    %v1557 = vsel %vm1128, %v1538, 0.0
    %1558 = vadd.xlane.f32.xlu0 %v1557
    %v1559 = vpop.xlane.xlu0 %1558
    %v1560 = vsel %vm1128, %v1540, 0.0
    %1561 = vadd.xlane.f32.xlu0 %v1560
    %v1562 = vpop.xlane.xlu0 %1561
    %v1563 = vsel %vm1128, %v1542, 0.0
    %1564 = vadd.xlane.f32.xlu0 %v1563
    %v1565 = vpop.xlane.xlu0 %1564
    %v1566 = vsel %vm1128, %v1544, 0.0
    %1567 = vadd.xlane.f32.xlu0 %v1566
    %v1568 = vpop.xlane.xlu0 %1567
    %v1569 = vrcp.pop %v1547
    %v1570 = vrcp.pop %v1550
    %v1571 = vrcp.pop %v1553
    %v1572 = vrcp.pop %v1556
    %v1573 = vrcp.pop %v1559
    %v1574 = vrcp.pop %v1562
    %v1575 = vrcp.pop %v1565
    %v1576 = vrcp.pop %v1568
    %v1577 = vpack.c.bf16 %v1530, %v1530
    %v1578 = vpack.c.bf16 %v1532, %v1532
    %v1579 = vpack.c.bf16 %v1534, %v1534
    %v1580 = vpack.c.bf16 %v1536, %v1536
    %v1581 = vpack.c.bf16 %v1538, %v1538
    %v1582 = vpack.c.bf16 %v1540, %v1540
    %v1583 = vpack.c.bf16 %v1542, %v1542
    %v1584 = vpack.c.bf16 %v1544, %v1544
    %v1586 = vsel %vm1128, %v1577, 0
    %vm1588 = vcmask 1043456
    %v1590 = vsel %vm1588, %v1120, 0
    %1592 = vmatprep.subr.bf16.mxu0 0
    %1593 = vmatpush1.bf16.msra.mxu0 0
    %1594 = vmatprep.subr.bf16.mxu0 0
    %1595 = vmatpush1.bf16.msra.mxu0 0
    %1596 = vmatprep.subr.bf16.mxu0 0
    %1597 = vmatpush1.bf16.msra.mxu0 0
    %1598 = vmatprep.subr.bf16.mxu0 0
    %1599 = vmatpush1.bf16.msra.mxu0 0
    %1600 = vmatprep.subr.bf16.mxu0 0
    %1601 = vmatpush1.bf16.msra.mxu0 0
    %1602 = vmatprep.subr.bf16.mxu0 0
    %1603 = vmatpush1.bf16.msra.mxu0 0
    %1604 = vmatprep.subr.bf16.mxu0 0
    %1605 = vmatpush1.bf16.msra.mxu0 0
    %1606 = vmatprep.subr.bf16.mxu0 0
    %1607 = vmatpush1.bf16.msra.mxu0 %v1590
    %1608 = vmatprep.subr.bf16.mxu0 0
    %1609 = vmatpush2.bf16.msra.mxu0 0
    %1610 = vmatprep.subr.bf16.mxu0 0
    %1611 = vmatpush2.bf16.msra.mxu0 0
    %1612 = vmatprep.subr.bf16.mxu0 0
    %1613 = vmatpush2.bf16.msra.mxu0 0
    %1614 = vmatprep.subr.bf16.mxu0 0
    %1615 = vmatpush2.bf16.msra.mxu0 0
    %1616 = vmatprep.subr.bf16.mxu0 0
    %1617 = vmatpush2.bf16.msra.mxu0 0
    %1618 = vmatprep.subr.bf16.mxu0 0
    %1619 = vmatpush2.bf16.msra.mxu0 0
    %1620 = vmatprep.subr.bf16.mxu0 0
    %1621 = vmatpush2.bf16.msra.mxu0 0
    %1622 = vmatprep.subr.bf16.mxu0 0
    %1623 = vmatpush2.bf16.msra.mxu0 0
    %1624 = vmatprep.mubr.bf16.mxu0 0
    %1625 = vmatmul.mubr.bf16.gmra.mxu0 %v1586
    %v1626 = vpop.f32.mrf.mxu0
    %v1627 = vadd.f32 0.0, %v1626
    %v1628 = vpop.f32.mrf.mxu0
    %v1629 = vpop.f32.mrf.mxu0
    %v1630 = vpop.f32.mrf.mxu0
    %1631 = vdwg.mxu0
    %v1633 = vsel %vm1128, %v1578, 0
    %v1636 = vsel %vm1588, %v1121, 0
    %1638 = vmatprep.subr.bf16.mxu0 0
    %1639 = vmatpush1.bf16.msra.mxu0 0
    %1640 = vmatprep.subr.bf16.mxu0 0
    %1641 = vmatpush1.bf16.msra.mxu0 0
    %1642 = vmatprep.subr.bf16.mxu0 0
    %1643 = vmatpush1.bf16.msra.mxu0 0
    %1644 = vmatprep.subr.bf16.mxu0 0
    %1645 = vmatpush1.bf16.msra.mxu0 0
    %1646 = vmatprep.subr.bf16.mxu0 0
    %1647 = vmatpush1.bf16.msra.mxu0 0
    %1648 = vmatprep.subr.bf16.mxu0 0
    %1649 = vmatpush1.bf16.msra.mxu0 0
    %1650 = vmatprep.subr.bf16.mxu0 0
    %1651 = vmatpush1.bf16.msra.mxu0 0
    %1652 = vmatprep.subr.bf16.mxu0 0
    %1653 = vmatpush1.bf16.msra.mxu0 %v1636
    %1654 = vmatprep.subr.bf16.mxu0 0
    %1655 = vmatpush2.bf16.msra.mxu0 0
    %1656 = vmatprep.subr.bf16.mxu0 0
    %1657 = vmatpush2.bf16.msra.mxu0 0
    %1658 = vmatprep.subr.bf16.mxu0 0
    %1659 = vmatpush2.bf16.msra.mxu0 0
    %1660 = vmatprep.subr.bf16.mxu0 0
    %1661 = vmatpush2.bf16.msra.mxu0 0
    %1662 = vmatprep.subr.bf16.mxu0 0
    %1663 = vmatpush2.bf16.msra.mxu0 0
    %1664 = vmatprep.subr.bf16.mxu0 0
    %1665 = vmatpush2.bf16.msra.mxu0 0
    %1666 = vmatprep.subr.bf16.mxu0 0
    %1667 = vmatpush2.bf16.msra.mxu0 0
    %1668 = vmatprep.subr.bf16.mxu0 0
    %1669 = vmatpush2.bf16.msra.mxu0 0
    %1670 = vmatprep.mubr.bf16.mxu0 0
    %1671 = vmatmul.mubr.bf16.gmra.mxu0 %v1633
    %v1672 = vpop.f32.mrf.mxu0
    %v1673 = vadd.f32 0.0, %v1672
    %v1674 = vpop.f32.mrf.mxu0
    %v1675 = vpop.f32.mrf.mxu0
    %v1676 = vpop.f32.mrf.mxu0
    %1677 = vdwg.mxu0
    %v1679 = vsel %vm1128, %v1579, 0
    %v1682 = vsel %vm1588, %v1122, 0
    %1684 = vmatprep.subr.bf16.mxu0 0
    %1685 = vmatpush1.bf16.msra.mxu0 0
    %1686 = vmatprep.subr.bf16.mxu0 0
    %1687 = vmatpush1.bf16.msra.mxu0 0
    %1688 = vmatprep.subr.bf16.mxu0 0
    %1689 = vmatpush1.bf16.msra.mxu0 0
    %1690 = vmatprep.subr.bf16.mxu0 0
    %1691 = vmatpush1.bf16.msra.mxu0 0
    %1692 = vmatprep.subr.bf16.mxu0 0
    %1693 = vmatpush1.bf16.msra.mxu0 0
    %1694 = vmatprep.subr.bf16.mxu0 0
    %1695 = vmatpush1.bf16.msra.mxu0 0
    %1696 = vmatprep.subr.bf16.mxu0 0
    %1697 = vmatpush1.bf16.msra.mxu0 0
    %1698 = vmatprep.subr.bf16.mxu0 0
    %1699 = vmatpush1.bf16.msra.mxu0 %v1682
    %1700 = vmatprep.subr.bf16.mxu0 0
    %1701 = vmatpush2.bf16.msra.mxu0 0
    %1702 = vmatprep.subr.bf16.mxu0 0
    %1703 = vmatpush2.bf16.msra.mxu0 0
    %1704 = vmatprep.subr.bf16.mxu0 0
    %1705 = vmatpush2.bf16.msra.mxu0 0
    %1706 = vmatprep.subr.bf16.mxu0 0
    %1707 = vmatpush2.bf16.msra.mxu0 0
    %1708 = vmatprep.subr.bf16.mxu0 0
    %1709 = vmatpush2.bf16.msra.mxu0 0
    %1710 = vmatprep.subr.bf16.mxu0 0
    %1711 = vmatpush2.bf16.msra.mxu0 0
    %1712 = vmatprep.subr.bf16.mxu0 0
    %1713 = vmatpush2.bf16.msra.mxu0 0
    %1714 = vmatprep.subr.bf16.mxu0 0
    %1715 = vmatpush2.bf16.msra.mxu0 0
    %1716 = vmatprep.mubr.bf16.mxu0 0
    %1717 = vmatmul.mubr.bf16.gmra.mxu0 %v1679
    %v1718 = vpop.f32.mrf.mxu0
    %v1719 = vadd.f32 0.0, %v1718
    %v1720 = vpop.f32.mrf.mxu0
    %v1721 = vpop.f32.mrf.mxu0
    %v1722 = vpop.f32.mrf.mxu0
    %1723 = vdwg.mxu0
    %v1725 = vsel %vm1128, %v1580, 0
    %v1728 = vsel %vm1588, %v1123, 0
    %1730 = vmatprep.subr.bf16.mxu0 0
    %1731 = vmatpush1.bf16.msra.mxu0 0
    %1732 = vmatprep.subr.bf16.mxu0 0
    %1733 = vmatpush1.bf16.msra.mxu0 0
    %1734 = vmatprep.subr.bf16.mxu0 0
    %1735 = vmatpush1.bf16.msra.mxu0 0
    %1736 = vmatprep.subr.bf16.mxu0 0
    %1737 = vmatpush1.bf16.msra.mxu0 0
    %1738 = vmatprep.subr.bf16.mxu0 0
    %1739 = vmatpush1.bf16.msra.mxu0 0
    %1740 = vmatprep.subr.bf16.mxu0 0
    %1741 = vmatpush1.bf16.msra.mxu0 0
    %1742 = vmatprep.subr.bf16.mxu0 0
    %1743 = vmatpush1.bf16.msra.mxu0 0
    %1744 = vmatprep.subr.bf16.mxu0 0
    %1745 = vmatpush1.bf16.msra.mxu0 %v1728
    %1746 = vmatprep.subr.bf16.mxu0 0
    %1747 = vmatpush2.bf16.msra.mxu0 0
    %1748 = vmatprep.subr.bf16.mxu0 0
    %1749 = vmatpush2.bf16.msra.mxu0 0
    %1750 = vmatprep.subr.bf16.mxu0 0
    %1751 = vmatpush2.bf16.msra.mxu0 0
    %1752 = vmatprep.subr.bf16.mxu0 0
    %1753 = vmatpush2.bf16.msra.mxu0 0
    %1754 = vmatprep.subr.bf16.mxu0 0
    %1755 = vmatpush2.bf16.msra.mxu0 0
    %1756 = vmatprep.subr.bf16.mxu0 0
    %1757 = vmatpush2.bf16.msra.mxu0 0
    %1758 = vmatprep.subr.bf16.mxu0 0
    %1759 = vmatpush2.bf16.msra.mxu0 0
    %1760 = vmatprep.subr.bf16.mxu0 0
    %1761 = vmatpush2.bf16.msra.mxu0 0
    %1762 = vmatprep.mubr.bf16.mxu0 0
    %1763 = vmatmul.mubr.bf16.gmra.mxu0 %v1725
    %v1764 = vpop.f32.mrf.mxu0
    %v1765 = vadd.f32 0.0, %v1764
    %v1766 = vpop.f32.mrf.mxu0
    %v1767 = vpop.f32.mrf.mxu0
    %v1768 = vpop.f32.mrf.mxu0
    %1769 = vdwg.mxu0
    %v1771 = vsel %vm1128, %v1581, 0
    %v1774 = vsel %vm1588, %v1124, 0
    %1776 = vmatprep.subr.bf16.mxu0 0
    %1777 = vmatpush1.bf16.msra.mxu0 0
    %1778 = vmatprep.subr.bf16.mxu0 0
    %1779 = vmatpush1.bf16.msra.mxu0 0
    %1780 = vmatprep.subr.bf16.mxu0 0
    %1781 = vmatpush1.bf16.msra.mxu0 0
    %1782 = vmatprep.subr.bf16.mxu0 0
    %1783 = vmatpush1.bf16.msra.mxu0 0
    %1784 = vmatprep.subr.bf16.mxu0 0
    %1785 = vmatpush1.bf16.msra.mxu0 0
    %1786 = vmatprep.subr.bf16.mxu0 0
    %1787 = vmatpush1.bf16.msra.mxu0 0
    %1788 = vmatprep.subr.bf16.mxu0 0
    %1789 = vmatpush1.bf16.msra.mxu0 0
    %1790 = vmatprep.subr.bf16.mxu0 0
    %1791 = vmatpush1.bf16.msra.mxu0 %v1774
    %1792 = vmatprep.subr.bf16.mxu0 0
    %1793 = vmatpush2.bf16.msra.mxu0 0
    %1794 = vmatprep.subr.bf16.mxu0 0
    %1795 = vmatpush2.bf16.msra.mxu0 0
    %1796 = vmatprep.subr.bf16.mxu0 0
    %1797 = vmatpush2.bf16.msra.mxu0 0
    %1798 = vmatprep.subr.bf16.mxu0 0
    %1799 = vmatpush2.bf16.msra.mxu0 0
    %1800 = vmatprep.subr.bf16.mxu0 0
    %1801 = vmatpush2.bf16.msra.mxu0 0
    %1802 = vmatprep.subr.bf16.mxu0 0
    %1803 = vmatpush2.bf16.msra.mxu0 0
    %1804 = vmatprep.subr.bf16.mxu0 0
    %1805 = vmatpush2.bf16.msra.mxu0 0
    %1806 = vmatprep.subr.bf16.mxu0 0
    %1807 = vmatpush2.bf16.msra.mxu0 0
    %1808 = vmatprep.mubr.bf16.mxu0 0
    %1809 = vmatmul.mubr.bf16.gmra.mxu0 %v1771
    %v1810 = vpop.f32.mrf.mxu0
    %v1811 = vadd.f32 0.0, %v1810
    %v1812 = vpop.f32.mrf.mxu0
    %v1813 = vpop.f32.mrf.mxu0
    %v1814 = vpop.f32.mrf.mxu0
    %1815 = vdwg.mxu0
    %v1817 = vsel %vm1128, %v1582, 0
    %v1820 = vsel %vm1588, %v1125, 0
    %1822 = vmatprep.subr.bf16.mxu0 0
    %1823 = vmatpush1.bf16.msra.mxu0 0
    %1824 = vmatprep.subr.bf16.mxu0 0
    %1825 = vmatpush1.bf16.msra.mxu0 0
    %1826 = vmatprep.subr.bf16.mxu0 0
    %1827 = vmatpush1.bf16.msra.mxu0 0
    %1828 = vmatprep.subr.bf16.mxu0 0
    %1829 = vmatpush1.bf16.msra.mxu0 0
    %1830 = vmatprep.subr.bf16.mxu0 0
    %1831 = vmatpush1.bf16.msra.mxu0 0
    %1832 = vmatprep.subr.bf16.mxu0 0
    %1833 = vmatpush1.bf16.msra.mxu0 0
    %1834 = vmatprep.subr.bf16.mxu0 0
    %1835 = vmatpush1.bf16.msra.mxu0 0
    %1836 = vmatprep.subr.bf16.mxu0 0
    %1837 = vmatpush1.bf16.msra.mxu0 %v1820
    %1838 = vmatprep.subr.bf16.mxu0 0
    %1839 = vmatpush2.bf16.msra.mxu0 0
    %1840 = vmatprep.subr.bf16.mxu0 0
    %1841 = vmatpush2.bf16.msra.mxu0 0
    %1842 = vmatprep.subr.bf16.mxu0 0
    %1843 = vmatpush2.bf16.msra.mxu0 0
    %1844 = vmatprep.subr.bf16.mxu0 0
    %1845 = vmatpush2.bf16.msra.mxu0 0
    %1846 = vmatprep.subr.bf16.mxu0 0
    %1847 = vmatpush2.bf16.msra.mxu0 0
    %1848 = vmatprep.subr.bf16.mxu0 0
    %1849 = vmatpush2.bf16.msra.mxu0 0
    %1850 = vmatprep.subr.bf16.mxu0 0
    %1851 = vmatpush2.bf16.msra.mxu0 0
    %1852 = vmatprep.subr.bf16.mxu0 0
    %1853 = vmatpush2.bf16.msra.mxu0 0
    %1854 = vmatprep.mubr.bf16.mxu0 0
    %1855 = vmatmul.mubr.bf16.gmra.mxu0 %v1817
    %v1856 = vpop.f32.mrf.mxu0
    %v1857 = vadd.f32 0.0, %v1856
    %v1858 = vpop.f32.mrf.mxu0
    %v1859 = vpop.f32.mrf.mxu0
    %v1860 = vpop.f32.mrf.mxu0
    %1861 = vdwg.mxu0
    %v1863 = vsel %vm1128, %v1583, 0
    %v1866 = vsel %vm1588, %v1126, 0
    %1868 = vmatprep.subr.bf16.mxu0 0
    %1869 = vmatpush1.bf16.msra.mxu0 0
    %1870 = vmatprep.subr.bf16.mxu0 0
    %1871 = vmatpush1.bf16.msra.mxu0 0
    %1872 = vmatprep.subr.bf16.mxu0 0
    %1873 = vmatpush1.bf16.msra.mxu0 0
    %1874 = vmatprep.subr.bf16.mxu0 0
    %1875 = vmatpush1.bf16.msra.mxu0 0
    %1876 = vmatprep.subr.bf16.mxu0 0
    %1877 = vmatpush1.bf16.msra.mxu0 0
    %1878 = vmatprep.subr.bf16.mxu0 0
    %1879 = vmatpush1.bf16.msra.mxu0 0
    %1880 = vmatprep.subr.bf16.mxu0 0
    %1881 = vmatpush1.bf16.msra.mxu0 0
    %1882 = vmatprep.subr.bf16.mxu0 0
    %1883 = vmatpush1.bf16.msra.mxu0 %v1866
    %1884 = vmatprep.subr.bf16.mxu0 0
    %1885 = vmatpush2.bf16.msra.mxu0 0
    %1886 = vmatprep.subr.bf16.mxu0 0
    %1887 = vmatpush2.bf16.msra.mxu0 0
    %1888 = vmatprep.subr.bf16.mxu0 0
    %1889 = vmatpush2.bf16.msra.mxu0 0
    %1890 = vmatprep.subr.bf16.mxu0 0
    %1891 = vmatpush2.bf16.msra.mxu0 0
    %1892 = vmatprep.subr.bf16.mxu0 0
    %1893 = vmatpush2.bf16.msra.mxu0 0
    %1894 = vmatprep.subr.bf16.mxu0 0
    %1895 = vmatpush2.bf16.msra.mxu0 0
    %1896 = vmatprep.subr.bf16.mxu0 0
    %1897 = vmatpush2.bf16.msra.mxu0 0
    %1898 = vmatprep.subr.bf16.mxu0 0
    %1899 = vmatpush2.bf16.msra.mxu0 0
    %1900 = vmatprep.mubr.bf16.mxu0 0
    %1901 = vmatmul.mubr.bf16.gmra.mxu0 %v1863
    %v1902 = vpop.f32.mrf.mxu0
    %v1903 = vadd.f32 0.0, %v1902
    %v1904 = vpop.f32.mrf.mxu0
    %v1905 = vpop.f32.mrf.mxu0
    %v1906 = vpop.f32.mrf.mxu0
    %1907 = vdwg.mxu0
    %v1909 = vsel %vm1128, %v1584, 0
    %v1912 = vsel %vm1588, %v1127, 0
    %1914 = vmatprep.subr.bf16.mxu0 0
    %1915 = vmatpush1.bf16.msra.mxu0 0
    %1916 = vmatprep.subr.bf16.mxu0 0
    %1917 = vmatpush1.bf16.msra.mxu0 0
    %1918 = vmatprep.subr.bf16.mxu0 0
    %1919 = vmatpush1.bf16.msra.mxu0 0
    %1920 = vmatprep.subr.bf16.mxu0 0
    %1921 = vmatpush1.bf16.msra.mxu0 0
    %1922 = vmatprep.subr.bf16.mxu0 0
    %1923 = vmatpush1.bf16.msra.mxu0 0
    %1924 = vmatprep.subr.bf16.mxu0 0
    %1925 = vmatpush1.bf16.msra.mxu0 0
    %1926 = vmatprep.subr.bf16.mxu0 0
    %1927 = vmatpush1.bf16.msra.mxu0 0
    %1928 = vmatprep.subr.bf16.mxu0 0
    %1929 = vmatpush1.bf16.msra.mxu0 %v1912
    %1930 = vmatprep.subr.bf16.mxu0 0
    %1931 = vmatpush2.bf16.msra.mxu0 0
    %1932 = vmatprep.subr.bf16.mxu0 0
    %1933 = vmatpush2.bf16.msra.mxu0 0
    %1934 = vmatprep.subr.bf16.mxu0 0
    %1935 = vmatpush2.bf16.msra.mxu0 0
    %1936 = vmatprep.subr.bf16.mxu0 0
    %1937 = vmatpush2.bf16.msra.mxu0 0
    %1938 = vmatprep.subr.bf16.mxu0 0
    %1939 = vmatpush2.bf16.msra.mxu0 0
    %1940 = vmatprep.subr.bf16.mxu0 0
    %1941 = vmatpush2.bf16.msra.mxu0 0
    %1942 = vmatprep.subr.bf16.mxu0 0
    %1943 = vmatpush2.bf16.msra.mxu0 0
    %1944 = vmatprep.subr.bf16.mxu0 0
    %1945 = vmatpush2.bf16.msra.mxu0 0
    %1946 = vmatprep.mubr.bf16.mxu0 0
    %1947 = vmatmul.mubr.bf16.gmra.mxu0 %v1909
    %v1948 = vpop.f32.mrf.mxu0
    %v1949 = vadd.f32 0.0, %v1948
    %v1950 = vpop.f32.mrf.mxu0
    %v1951 = vpop.f32.mrf.mxu0
    %v1952 = vpop.f32.mrf.mxu0
    %1953 = vdwg.mxu0
    %v1954 = vmul.f32 %v1627, %v1569
    %v1955 = vmul.f32 %v1673, %v1570
    %v1956 = vmul.f32 %v1719, %v1571
    %v1957 = vmul.f32 %v1765, %v1572
    %v1958 = vmul.f32 %v1811, %v1573
    %v1959 = vmul.f32 %v1857, %v1574
    %v1960 = vmul.f32 %v1903, %v1575
    %v1961 = vmul.f32 %v1949, %v1576
    %1964 = vrot.lane.b32.xlu0 %v1956, 8
    %v1965 = vpop.permute.xlu0 %1964
    %1966 = vrot.lane.b32.xlu0 %v1957, 8
    %v1967 = vpop.permute.xlu0 %1966
    %1972 = vrot.lane.b32.xlu0 %v1958, 16
    %v1973 = vpop.permute.xlu0 %1972
    %1974 = vrot.lane.b32.xlu0 %v1959, 16
    %v1975 = vpop.permute.xlu0 %1974
    %1980 = vrot.lane.b32.xlu0 %v1960, 24
    %v1981 = vpop.permute.xlu0 %1980
    %1982 = vrot.lane.b32.xlu0 %v1961, 24
    %v1983 = vpop.permute.xlu0 %1982
    %v1986 = vsel %vm1128, %v1954, %v1965
    %v1987 = vsel %vm1128, %v1955, %v1967
    %vm1988 = vcmask 130048
    %v1989 = vsel %vm1988, %v1986, %v1973
    %v1990 = vsel %vm1988, %v1987, %v1975
    %vm1991 = vcmask 195584
    %v1992 = vsel %vm1991, %v1989, %v1981
    %v1993 = vsel %vm1991, %v1990, %v1983
    %v1994 = vpack.c.bf16 %v1993, %v1992
    %v1995 = vld [vmem:[%s9] sm:$0xf]
    %v1996 = vld [vmem:[%s9 + $0x4] sm:$0xf]
    %v1997 = vld [vmem:[%s9 + $0x8] sm:$0xf]
    %v1998 = vld [vmem:[%s9 + $0xc] sm:$0xf]
    %v2003 = vunpack.c.l.b16 %v1995
    %v2004 = vunpack.c.l.b16 %v1996
    %v2005 = vunpack.c.l.b16 %v1997
    %v2006 = vunpack.c.l.b16 %v1998
    %v2007 = vpack.c.b16 %v2004, %v2003
    %v2008 = vpack.c.b16 %v2006, %v2005
    %v2012 = vsel %vm363, %v1994, 0
    %2014 = vmatprep.subr.bf16.mxu0 0
    %2015 = vmatpush1.bf16.msra.mxu0 0
    %2016 = vmatprep.subr.bf16.mxu0 0
    %2017 = vmatpush1.bf16.msra.mxu0 0
    %2018 = vmatprep.subr.bf16.mxu0 0
    %2019 = vmatpush1.bf16.msra.mxu0 0
    %2020 = vmatprep.subr.bf16.mxu0 0
    %2021 = vmatpush1.bf16.msra.mxu0 0
    %2022 = vmatprep.subr.bf16.mxu0 0
    %2023 = vmatpush1.bf16.msra.mxu0 0
    %2024 = vmatprep.subr.bf16.mxu0 0
    %2025 = vmatpush1.bf16.msra.mxu0 0
    %2026 = vmatprep.subr.bf16.mxu0 0
    %2027 = vmatpush1.bf16.msra.mxu0 %v2008
    %2028 = vmatprep.subr.bf16.mxu0 0
    %2029 = vmatpush1.bf16.msra.mxu0 %v2007
    %2030 = vmatprep.subr.bf16.mxu0 0
    %2031 = vmatpush2.bf16.msra.mxu0 0
    %2032 = vmatprep.subr.bf16.mxu0 0
    %2033 = vmatpush2.bf16.msra.mxu0 0
    %2034 = vmatprep.subr.bf16.mxu0 0
    %2035 = vmatpush2.bf16.msra.mxu0 0
    %2036 = vmatprep.subr.bf16.mxu0 0
    %2037 = vmatpush2.bf16.msra.mxu0 0
    %2038 = vmatprep.subr.bf16.mxu0 0
    %2039 = vmatpush2.bf16.msra.mxu0 0
    %2040 = vmatprep.subr.bf16.mxu0 0
    %2041 = vmatpush2.bf16.msra.mxu0 0
    %2042 = vmatprep.subr.bf16.mxu0 0
    %2043 = vmatpush2.bf16.msra.mxu0 0
    %2044 = vmatprep.subr.bf16.mxu0 0
    %2045 = vmatpush2.bf16.msra.mxu0 0
    %2046 = vmatprep.mubr.bf16.mxu0 0
    %2047 = vmatmul.mubr.bf16.gmra.mxu0 %v2012
    %v2048 = vpop.f32.mrf.mxu0
    %v2049 = vadd.f32 0.0, %v2048
    %v2050 = vpop.f32.mrf.mxu0
    %v2051 = vpop.f32.mrf.mxu0
    %v2052 = vadd.f32 0.0, %v2051
    %v2053 = vpop.f32.mrf.mxu0
    %2054 = vdwg.mxu0
    %v2055 = vadd.f32 %v359, %v2049
    %v2056 = vadd.f32 %v360, %v2052
    %v2057 = vld [vmem:[%s10] sm:$0x1]
    %v2059 = vlaneseq
    %v2060 = vshrl.u32 %v2059, 7
    %v2061 = vsub.s32 0, %v2060
    %v2062 = vrot.slane %v2057, %v2061
    %v2064 = vadd.f32 %v2055, %v2062
    %v2065 = vadd.f32 %v2056, %v2062
    %v2066 = vld [vmem:[%s11] sm:$0x1]
    %v2067 = vld [vmem:[%s12] sm:$0x1]
    %v2068 = vsel %vm363, %v2064, 0.0
    %2069 = vadd.xlane.f32.xlu0 %v2068
    %v2070 = vpop.xlane.xlu0 %2069
    %v2071 = vsel %vm363, %v2065, 0.0
    %2072 = vadd.xlane.f32.xlu0 %v2071
    %v2073 = vpop.xlane.xlu0 %2072
    %v2074 = vmul.f32 %v2070, %v370
    %v2075 = vmul.f32 %v2073, %v370
    %v2076 = vsub.f32 %v2064, %v2074
    %v2077 = vsub.f32 %v2065, %v2075
    %v2078 = vmul.f32 %v2076, %v2076
    %v2079 = vmul.f32 %v2077, %v2077
    %v2080 = vsel %vm363, %v2078, 0.0
    %2081 = vadd.xlane.f32.xlu0 %v2080
    %v2082 = vpop.xlane.xlu0 %2081
    %v2083 = vsel %vm363, %v2079, 0.0
    %2084 = vadd.xlane.f32.xlu0 %v2083
    %v2085 = vpop.xlane.xlu0 %2084
    %v2086 = vmul.f32 %v2082, %v370
    %v2087 = vmul.f32 %v2085, %v370
    %v2088 = vadd.f32 %v2086, 1e-05
    %v2089 = vadd.f32 %v2087, 1e-05
    %v2090 = vrsqrt.pop %v2088
    %v2091 = vrsqrt.pop %v2089
    %v2092 = vmul.f32 %v2076, %v2090
    %v2093 = vmul.f32 %v2077, %v2091
    %v2095 = vlaneseq
    %v2096 = vshrl.u32 %v2095, 7
    %v2097 = vsub.s32 0, %v2096
    %v2098 = vrot.slane %v2066, %v2097
    %v2100 = vmul.f32 %v2092, %v2098
    %v2101 = vmul.f32 %v2093, %v2098
    %v2103 = vlaneseq
    %v2104 = vshrl.u32 %v2103, 7
    %v2105 = vsub.s32 0, %v2104
    %v2106 = vrot.slane %v2067, %v2105
    %v2108 = vadd.f32 %v2100, %v2106
    %v2109 = vadd.f32 %v2101, %v2106
    %v2110 = vpack.c.bf16 %v2109, %v2108
    %v2111 = vld [vmem:[%s13] sm:$0xf]
    %v2112 = vld [vmem:[%s13 + $0x4] sm:$0xf]
    %v2113 = vld [vmem:[%s13 + $0x8] sm:$0xf]
    %v2114 = vld [vmem:[%s13 + $0xc] sm:$0xf]
    %v2115 = vld [vmem:[%s14] sm:$0x1]
    %v2117 = vlaneseq
    %v2118 = vshrl.u32 %v2117, 7
    %v2119 = vsub.s32 0, %v2118
    %v2120 = vrot.slane %v2115, %v2119
    %v2126 = vunpack.c.l.b16 %v2111
    %v2127 = vunpack.c.l.b16 %v2112
    %v2128 = vunpack.c.l.b16 %v2113
    %v2129 = vunpack.c.l.b16 %v2114
    %v2130 = vpack.c.b16 %v2127, %v2126
    %v2131 = vpack.c.b16 %v2129, %v2128
    %v2135 = vsel %vm363, %v2110, 0
    %2137 = vmatprep.subr.bf16.mxu0 0
    %2138 = vmatpush1.bf16.msra.mxu0 0
    %2139 = vmatprep.subr.bf16.mxu0 0
    %2140 = vmatpush1.bf16.msra.mxu0 0
    %2141 = vmatprep.subr.bf16.mxu0 0
    %2142 = vmatpush1.bf16.msra.mxu0 0
    %2143 = vmatprep.subr.bf16.mxu0 0
    %2144 = vmatpush1.bf16.msra.mxu0 0
    %2145 = vmatprep.subr.bf16.mxu0 0
    %2146 = vmatpush1.bf16.msra.mxu0 0
    %2147 = vmatprep.subr.bf16.mxu0 0
    %2148 = vmatpush1.bf16.msra.mxu0 0
    %2149 = vmatprep.subr.bf16.mxu0 0
    %2150 = vmatpush1.bf16.msra.mxu0 %v2131
    %2151 = vmatprep.subr.bf16.mxu0 0
    %2152 = vmatpush1.bf16.msra.mxu0 %v2130
    %2153 = vmatprep.subr.bf16.mxu0 0
    %2154 = vmatpush2.bf16.msra.mxu0 0
    %2155 = vmatprep.subr.bf16.mxu0 0
    %2156 = vmatpush2.bf16.msra.mxu0 0
    %2157 = vmatprep.subr.bf16.mxu0 0
    %2158 = vmatpush2.bf16.msra.mxu0 0
    %2159 = vmatprep.subr.bf16.mxu0 0
    %2160 = vmatpush2.bf16.msra.mxu0 0
    %2161 = vmatprep.subr.bf16.mxu0 0
    %2162 = vmatpush2.bf16.msra.mxu0 0
    %2163 = vmatprep.subr.bf16.mxu0 0
    %2164 = vmatpush2.bf16.msra.mxu0 0
    %2165 = vmatprep.subr.bf16.mxu0 0
    %2166 = vmatpush2.bf16.msra.mxu0 0
    %2167 = vmatprep.subr.bf16.mxu0 0
    %2168 = vmatpush2.bf16.msra.mxu0 0
    %2169 = vmatprep.mubr.bf16.mxu0 0
    %2170 = vmatmul.mubr.bf16.gmra.mxu0 %v2135
    %v2171 = vpop.f32.mrf.mxu0
    %v2172 = vadd.f32 %v2120, %v2171
    %v2173 = vpop.f32.mrf.mxu0
    %v2174 = vpop.f32.mrf.mxu0
    %v2175 = vadd.f32 %v2120, %v2174
    %v2176 = vpop.f32.mrf.mxu0
    %2177 = vdwg.mxu0
    %v2178 = vmul.f32 %v2172, 0.5
    %v2179 = vmul.f32 %v2175, 0.5
    %v2180 = vmul.f32 %v2172, 0.70710677
    %v2181 = vmul.f32 %v2175, 0.70710677
    %v2182 = verf.f32.pop %v2180
    %v2183 = verf.f32.pop %v2181
    %v2184 = vadd.f32 %v2182, 1.0
    %v2185 = vadd.f32 %v2183, 1.0
    %v2186 = vmul.f32 %v2178, %v2184
    %v2187 = vmul.f32 %v2179, %v2185
    %v2188 = vpack.c.bf16 %v2187, %v2186
    %v2189 = vld [vmem:[%s15] sm:$0xf]
    %v2190 = vld [vmem:[%s15 + $0x4] sm:$0xf]
    %v2191 = vld [vmem:[%s15 + $0x8] sm:$0xf]
    %v2192 = vld [vmem:[%s15 + $0xc] sm:$0xf]
    %v2193 = vld [vmem:[%s15 + $0x10] sm:$0xf]
    %v2194 = vld [vmem:[%s15 + $0x14] sm:$0xf]
    %v2195 = vld [vmem:[%s15 + $0x18] sm:$0xf]
    %v2196 = vld [vmem:[%s15 + $0x1c] sm:$0xf]
    %v2197 = vld [vmem:[%s15 + $0x20] sm:$0xf]
    %v2198 = vld [vmem:[%s15 + $0x24] sm:$0xf]
    %v2199 = vld [vmem:[%s15 + $0x28] sm:$0xf]
    %v2200 = vld [vmem:[%s15 + $0x2c] sm:$0xf]
    %v2201 = vld [vmem:[%s15 + $0x30] sm:$0xf]
    %v2202 = vld [vmem:[%s15 + $0x34] sm:$0xf]
    %v2203 = vld [vmem:[%s15 + $0x38] sm:$0xf]
    %v2204 = vld [vmem:[%s15 + $0x3c] sm:$0xf]
    %v2221 = vunpack.c.l.b16 %v2189
    %v2222 = vunpack.c.l.b16 %v2190
    %v2223 = vunpack.c.l.b16 %v2191
    %v2224 = vunpack.c.l.b16 %v2192
    %v2225 = vunpack.c.l.b16 %v2193
    %v2226 = vunpack.c.l.b16 %v2194
    %v2227 = vunpack.c.l.b16 %v2195
    %v2228 = vunpack.c.l.b16 %v2196
    %v2229 = vunpack.c.l.b16 %v2197
    %v2230 = vunpack.c.l.b16 %v2198
    %v2231 = vunpack.c.l.b16 %v2199
    %v2232 = vunpack.c.l.b16 %v2200
    %v2233 = vunpack.c.l.b16 %v2201
    %v2234 = vunpack.c.l.b16 %v2202
    %v2235 = vunpack.c.l.b16 %v2203
    %v2236 = vunpack.c.l.b16 %v2204
    %v2237 = vpack.c.b16 %v2222, %v2221
    %v2238 = vpack.c.b16 %v2224, %v2223
    %v2239 = vpack.c.b16 %v2226, %v2225
    %v2240 = vpack.c.b16 %v2228, %v2227
    %v2241 = vpack.c.b16 %v2230, %v2229
    %v2242 = vpack.c.b16 %v2232, %v2231
    %v2243 = vpack.c.b16 %v2234, %v2233
    %v2244 = vpack.c.b16 %v2236, %v2235
    %2253 = vmatprep.subr.bf16.mxu0 0
    %2254 = vmatpush1.bf16.msra.mxu0 %v2244
    %2255 = vmatprep.subr.bf16.mxu0 0
    %2256 = vmatpush1.bf16.msra.mxu0 %v2243
    %2257 = vmatprep.subr.bf16.mxu0 0
    %2258 = vmatpush1.bf16.msra.mxu0 %v2242
    %2259 = vmatprep.subr.bf16.mxu0 0
    %2260 = vmatpush1.bf16.msra.mxu0 %v2241
    %2261 = vmatprep.subr.bf16.mxu0 0
    %2262 = vmatpush1.bf16.msra.mxu0 %v2240
    %2263 = vmatprep.subr.bf16.mxu0 0
    %2264 = vmatpush1.bf16.msra.mxu0 %v2239
    %2265 = vmatprep.subr.bf16.mxu0 0
    %2266 = vmatpush1.bf16.msra.mxu0 %v2238
    %2267 = vmatprep.subr.bf16.mxu0 0
    %2268 = vmatpush1.bf16.msra.mxu0 %v2237
    %2269 = vmatprep.subr.bf16.mxu0 0
    %2270 = vmatpush2.bf16.msra.mxu0 0
    %2271 = vmatprep.subr.bf16.mxu0 0
    %2272 = vmatpush2.bf16.msra.mxu0 0
    %2273 = vmatprep.subr.bf16.mxu0 0
    %2274 = vmatpush2.bf16.msra.mxu0 0
    %2275 = vmatprep.subr.bf16.mxu0 0
    %2276 = vmatpush2.bf16.msra.mxu0 0
    %2277 = vmatprep.subr.bf16.mxu0 0
    %2278 = vmatpush2.bf16.msra.mxu0 0
    %2279 = vmatprep.subr.bf16.mxu0 0
    %2280 = vmatpush2.bf16.msra.mxu0 0
    %2281 = vmatprep.subr.bf16.mxu0 0
    %2282 = vmatpush2.bf16.msra.mxu0 0
    %2283 = vmatprep.subr.bf16.mxu0 0
    %2284 = vmatpush2.bf16.msra.mxu0 0
    %2285 = vmatprep.mubr.bf16.mxu0 0
    %2286 = vmatmul.mubr.bf16.gmra.mxu0 %v2188
    %v2287 = vpop.f32.mrf.mxu0
    %v2288 = vadd.f32 0.0, %v2287
    %v2289 = vpop.f32.mrf.mxu0
    %v2290 = vpop.f32.mrf.mxu0
    %v2291 = vadd.f32 0.0, %v2290
    %v2292 = vpop.f32.mrf.mxu0
    %2293 = vdwg.mxu0
    %v2294 = vadd.f32 %v2064, %v2288
    %v2295 = vadd.f32 %v2065, %v2291
    %v2296 = vld [vmem:[%s16] sm:$0x1]
    %v2298 = vlaneseq
    %v2299 = vshrl.u32 %v2298, 7
    %v2300 = vsub.s32 0, %v2299
    %v2301 = vrot.slane %v2296, %v2300
    %v2303 = vadd.f32 %v2294, %v2301
    %v2304 = vadd.f32 %v2295, %v2301
    %s2305 = scalar_lea.vmem %s4, 1
    %v2306 = vld [vmem:[%s2305] sm:$0x1]
    %s2307 = scalar_lea.vmem %s5, 1
    %v2308 = vld [vmem:[%s2307] sm:$0x1]
    %v2309 = vsel %vm363, %v2303, 0.0
    %2310 = vadd.xlane.f32.xlu0 %v2309
    %v2311 = vpop.xlane.xlu0 %2310
    %v2312 = vsel %vm363, %v2304, 0.0
    %2313 = vadd.xlane.f32.xlu0 %v2312
    %v2314 = vpop.xlane.xlu0 %2313
    %v2315 = vmul.f32 %v2311, %v370
    %v2316 = vmul.f32 %v2314, %v370
    %v2317 = vsub.f32 %v2303, %v2315
    %v2318 = vsub.f32 %v2304, %v2316
    %v2319 = vmul.f32 %v2317, %v2317
    %v2320 = vmul.f32 %v2318, %v2318
    %v2321 = vsel %vm363, %v2319, 0.0
    %2322 = vadd.xlane.f32.xlu0 %v2321
    %v2323 = vpop.xlane.xlu0 %2322
    %v2324 = vsel %vm363, %v2320, 0.0
    %2325 = vadd.xlane.f32.xlu0 %v2324
    %v2326 = vpop.xlane.xlu0 %2325
    %v2327 = vmul.f32 %v2323, %v370
    %v2328 = vmul.f32 %v2326, %v370
    %v2329 = vadd.f32 %v2327, 1e-05
    %v2330 = vadd.f32 %v2328, 1e-05
    %v2331 = vrsqrt.pop %v2329
    %v2332 = vrsqrt.pop %v2330
    %v2333 = vmul.f32 %v2317, %v2331
    %v2334 = vmul.f32 %v2318, %v2332
    %v2336 = vlaneseq
    %v2337 = vshrl.u32 %v2336, 7
    %v2338 = vsub.s32 0, %v2337
    %v2339 = vrot.slane %v2306, %v2338
    %v2341 = vmul.f32 %v2333, %v2339
    %v2342 = vmul.f32 %v2334, %v2339
    %v2344 = vlaneseq
    %v2345 = vshrl.u32 %v2344, 7
    %v2346 = vsub.s32 0, %v2345
    %v2347 = vrot.slane %v2308, %v2346
    %v2349 = vadd.f32 %v2341, %v2347
    %v2350 = vadd.f32 %v2342, %v2347
    %v2351 = vpack.c.bf16 %v2350, %v2349
    %s2352 = scalar_lea.vmem %s6, 64
    %v2353 = vld [vmem:[%s2352] sm:$0xf]
    %v2354 = vld [vmem:[%s2352 + $0x4] sm:$0xf]
    %v2355 = vld [vmem:[%s2352 + $0x8] sm:$0xf]
    %v2356 = vld [vmem:[%s2352 + $0xc] sm:$0xf]
    %v2361 = vunpack.c.l.b16 %v2353
    %v2362 = vunpack.c.l.b16 %v2354
    %v2363 = vunpack.c.l.b16 %v2355
    %v2364 = vunpack.c.l.b16 %v2356
    %v2365 = vpack.c.b16 %v2362, %v2361
    %v2366 = vpack.c.b16 %v2364, %v2363
    %v2370 = vsel %vm363, %v2351, 0
    %2372 = vmatprep.subr.bf16.mxu0 0
    %2373 = vmatpush1.bf16.msra.mxu0 0
    %2374 = vmatprep.subr.bf16.mxu0 0
    %2375 = vmatpush1.bf16.msra.mxu0 0
    %2376 = vmatprep.subr.bf16.mxu0 0
    %2377 = vmatpush1.bf16.msra.mxu0 0
    %2378 = vmatprep.subr.bf16.mxu0 0
    %2379 = vmatpush1.bf16.msra.mxu0 0
    %2380 = vmatprep.subr.bf16.mxu0 0
    %2381 = vmatpush1.bf16.msra.mxu0 0
    %2382 = vmatprep.subr.bf16.mxu0 0
    %2383 = vmatpush1.bf16.msra.mxu0 0
    %2384 = vmatprep.subr.bf16.mxu0 0
    %2385 = vmatpush1.bf16.msra.mxu0 %v2366
    %2386 = vmatprep.subr.bf16.mxu0 0
    %2387 = vmatpush1.bf16.msra.mxu0 %v2365
    %2388 = vmatprep.subr.bf16.mxu0 0
    %2389 = vmatpush2.bf16.msra.mxu0 0
    %2390 = vmatprep.subr.bf16.mxu0 0
    %2391 = vmatpush2.bf16.msra.mxu0 0
    %2392 = vmatprep.subr.bf16.mxu0 0
    %2393 = vmatpush2.bf16.msra.mxu0 0
    %2394 = vmatprep.subr.bf16.mxu0 0
    %2395 = vmatpush2.bf16.msra.mxu0 0
    %2396 = vmatprep.subr.bf16.mxu0 0
    %2397 = vmatpush2.bf16.msra.mxu0 0
    %2398 = vmatprep.subr.bf16.mxu0 0
    %2399 = vmatpush2.bf16.msra.mxu0 0
    %2400 = vmatprep.subr.bf16.mxu0 0
    %2401 = vmatpush2.bf16.msra.mxu0 0
    %2402 = vmatprep.subr.bf16.mxu0 0
    %2403 = vmatpush2.bf16.msra.mxu0 0
    %2404 = vmatprep.mubr.bf16.mxu0 0
    %2405 = vmatmul.mubr.bf16.gmra.mxu0 %v2370
    %v2406 = vpop.f32.mrf.mxu0
    %v2407 = vadd.f32 0.0, %v2406
    %v2408 = vpop.f32.mrf.mxu0
    %v2409 = vpop.f32.mrf.mxu0
    %v2410 = vadd.f32 0.0, %v2409
    %v2411 = vpop.f32.mrf.mxu0
    %2412 = vdwg.mxu0
    %s2413 = scalar_lea.vmem %s7, 64
    %v2414 = vld [vmem:[%s2413] sm:$0xf]
    %v2415 = vld [vmem:[%s2413 + $0x4] sm:$0xf]
    %v2416 = vld [vmem:[%s2413 + $0x8] sm:$0xf]
    %v2417 = vld [vmem:[%s2413 + $0xc] sm:$0xf]
    %v2422 = vunpack.c.l.b16 %v2414
    %v2423 = vunpack.c.l.b16 %v2415
    %v2424 = vunpack.c.l.b16 %v2416
    %v2425 = vunpack.c.l.b16 %v2417
    %v2426 = vpack.c.b16 %v2423, %v2422
    %v2427 = vpack.c.b16 %v2425, %v2424
    %2430 = vmatprep.subr.bf16.mxu0 0
    %2431 = vmatpush1.bf16.msra.mxu0 0
    %2432 = vmatprep.subr.bf16.mxu0 0
    %2433 = vmatpush1.bf16.msra.mxu0 0
    %2434 = vmatprep.subr.bf16.mxu0 0
    %2435 = vmatpush1.bf16.msra.mxu0 0
    %2436 = vmatprep.subr.bf16.mxu0 0
    %2437 = vmatpush1.bf16.msra.mxu0 0
    %2438 = vmatprep.subr.bf16.mxu0 0
    %2439 = vmatpush1.bf16.msra.mxu0 0
    %2440 = vmatprep.subr.bf16.mxu0 0
    %2441 = vmatpush1.bf16.msra.mxu0 0
    %2442 = vmatprep.subr.bf16.mxu0 0
    %2443 = vmatpush1.bf16.msra.mxu0 %v2427
    %2444 = vmatprep.subr.bf16.mxu0 0
    %2445 = vmatpush1.bf16.msra.mxu0 %v2426
    %2446 = vmatprep.subr.bf16.mxu0 0
    %2447 = vmatpush2.bf16.msra.mxu0 0
    %2448 = vmatprep.subr.bf16.mxu0 0
    %2449 = vmatpush2.bf16.msra.mxu0 0
    %2450 = vmatprep.subr.bf16.mxu0 0
    %2451 = vmatpush2.bf16.msra.mxu0 0
    %2452 = vmatprep.subr.bf16.mxu0 0
    %2453 = vmatpush2.bf16.msra.mxu0 0
    %2454 = vmatprep.subr.bf16.mxu0 0
    %2455 = vmatpush2.bf16.msra.mxu0 0
    %2456 = vmatprep.subr.bf16.mxu0 0
    %2457 = vmatpush2.bf16.msra.mxu0 0
    %2458 = vmatprep.subr.bf16.mxu0 0
    %2459 = vmatpush2.bf16.msra.mxu0 0
    %2460 = vmatprep.subr.bf16.mxu0 0
    %2461 = vmatpush2.bf16.msra.mxu0 0
    %2462 = vmatprep.mubr.bf16.mxu0 0
    %2463 = vmatmul.mubr.bf16.gmra.mxu0 %v2370
    %v2464 = vpop.f32.mrf.mxu0
    %v2465 = vadd.f32 0.0, %v2464
    %v2466 = vpop.f32.mrf.mxu0
    %v2467 = vpop.f32.mrf.mxu0
    %v2468 = vadd.f32 0.0, %v2467
    %v2469 = vpop.f32.mrf.mxu0
    %2470 = vdwg.mxu0
    %s2471 = scalar_lea.vmem %s8, 64
    %v2472 = vld [vmem:[%s2471] sm:$0xf]
    %v2473 = vld [vmem:[%s2471 + $0x4] sm:$0xf]
    %v2474 = vld [vmem:[%s2471 + $0x8] sm:$0xf]
    %v2475 = vld [vmem:[%s2471 + $0xc] sm:$0xf]
    %v2480 = vunpack.c.l.b16 %v2472
    %v2481 = vunpack.c.l.b16 %v2473
    %v2482 = vunpack.c.l.b16 %v2474
    %v2483 = vunpack.c.l.b16 %v2475
    %v2484 = vpack.c.b16 %v2481, %v2480
    %v2485 = vpack.c.b16 %v2483, %v2482
    %2488 = vmatprep.subr.bf16.mxu0 0
    %2489 = vmatpush1.bf16.msra.mxu0 0
    %2490 = vmatprep.subr.bf16.mxu0 0
    %2491 = vmatpush1.bf16.msra.mxu0 0
    %2492 = vmatprep.subr.bf16.mxu0 0
    %2493 = vmatpush1.bf16.msra.mxu0 0
    %2494 = vmatprep.subr.bf16.mxu0 0
    %2495 = vmatpush1.bf16.msra.mxu0 0
    %2496 = vmatprep.subr.bf16.mxu0 0
    %2497 = vmatpush1.bf16.msra.mxu0 0
    %2498 = vmatprep.subr.bf16.mxu0 0
    %2499 = vmatpush1.bf16.msra.mxu0 0
    %2500 = vmatprep.subr.bf16.mxu0 0
    %2501 = vmatpush1.bf16.msra.mxu0 %v2485
    %2502 = vmatprep.subr.bf16.mxu0 0
    %2503 = vmatpush1.bf16.msra.mxu0 %v2484
    %2504 = vmatprep.subr.bf16.mxu0 0
    %2505 = vmatpush2.bf16.msra.mxu0 0
    %2506 = vmatprep.subr.bf16.mxu0 0
    %2507 = vmatpush2.bf16.msra.mxu0 0
    %2508 = vmatprep.subr.bf16.mxu0 0
    %2509 = vmatpush2.bf16.msra.mxu0 0
    %2510 = vmatprep.subr.bf16.mxu0 0
    %2511 = vmatpush2.bf16.msra.mxu0 0
    %2512 = vmatprep.subr.bf16.mxu0 0
    %2513 = vmatpush2.bf16.msra.mxu0 0
    %2514 = vmatprep.subr.bf16.mxu0 0
    %2515 = vmatpush2.bf16.msra.mxu0 0
    %2516 = vmatprep.subr.bf16.mxu0 0
    %2517 = vmatpush2.bf16.msra.mxu0 0
    %2518 = vmatprep.subr.bf16.mxu0 0
    %2519 = vmatpush2.bf16.msra.mxu0 0
    %2520 = vmatprep.mubr.bf16.mxu0 0
    %2521 = vmatmul.mubr.bf16.gmra.mxu0 %v2370
    %v2522 = vpop.f32.mrf.mxu0
    %v2523 = vadd.f32 0.0, %v2522
    %v2524 = vpop.f32.mrf.mxu0
    %v2525 = vpop.f32.mrf.mxu0
    %v2526 = vadd.f32 0.0, %v2525
    %v2527 = vpop.f32.mrf.mxu0
    %2528 = vdwg.mxu0
    %s2529 = scalar_lea.vmem %s6, 80
    %v2530 = vld [vmem:[%s2529] sm:$0xf]
    %v2531 = vld [vmem:[%s2529 + $0x4] sm:$0xf]
    %v2532 = vld [vmem:[%s2529 + $0x8] sm:$0xf]
    %v2533 = vld [vmem:[%s2529 + $0xc] sm:$0xf]
    %v2538 = vunpack.c.l.b16 %v2530
    %v2539 = vunpack.c.l.b16 %v2531
    %v2540 = vunpack.c.l.b16 %v2532
    %v2541 = vunpack.c.l.b16 %v2533
    %v2542 = vpack.c.b16 %v2539, %v2538
    %v2543 = vpack.c.b16 %v2541, %v2540
    %2546 = vmatprep.subr.bf16.mxu0 0
    %2547 = vmatpush1.bf16.msra.mxu0 0
    %2548 = vmatprep.subr.bf16.mxu0 0
    %2549 = vmatpush1.bf16.msra.mxu0 0
    %2550 = vmatprep.subr.bf16.mxu0 0
    %2551 = vmatpush1.bf16.msra.mxu0 0
    %2552 = vmatprep.subr.bf16.mxu0 0
    %2553 = vmatpush1.bf16.msra.mxu0 0
    %2554 = vmatprep.subr.bf16.mxu0 0
    %2555 = vmatpush1.bf16.msra.mxu0 0
    %2556 = vmatprep.subr.bf16.mxu0 0
    %2557 = vmatpush1.bf16.msra.mxu0 0
    %2558 = vmatprep.subr.bf16.mxu0 0
    %2559 = vmatpush1.bf16.msra.mxu0 %v2543
    %2560 = vmatprep.subr.bf16.mxu0 0
    %2561 = vmatpush1.bf16.msra.mxu0 %v2542
    %2562 = vmatprep.subr.bf16.mxu0 0
    %2563 = vmatpush2.bf16.msra.mxu0 0
    %2564 = vmatprep.subr.bf16.mxu0 0
    %2565 = vmatpush2.bf16.msra.mxu0 0
    %2566 = vmatprep.subr.bf16.mxu0 0
    %2567 = vmatpush2.bf16.msra.mxu0 0
    %2568 = vmatprep.subr.bf16.mxu0 0
    %2569 = vmatpush2.bf16.msra.mxu0 0
    %2570 = vmatprep.subr.bf16.mxu0 0
    %2571 = vmatpush2.bf16.msra.mxu0 0
    %2572 = vmatprep.subr.bf16.mxu0 0
    %2573 = vmatpush2.bf16.msra.mxu0 0
    %2574 = vmatprep.subr.bf16.mxu0 0
    %2575 = vmatpush2.bf16.msra.mxu0 0
    %2576 = vmatprep.subr.bf16.mxu0 0
    %2577 = vmatpush2.bf16.msra.mxu0 0
    %2578 = vmatprep.mubr.bf16.mxu0 0
    %2579 = vmatmul.mubr.bf16.gmra.mxu0 %v2370
    %v2580 = vpop.f32.mrf.mxu0
    %v2581 = vadd.f32 0.0, %v2580
    %v2582 = vpop.f32.mrf.mxu0
    %v2583 = vpop.f32.mrf.mxu0
    %v2584 = vadd.f32 0.0, %v2583
    %v2585 = vpop.f32.mrf.mxu0
    %2586 = vdwg.mxu0
    %s2587 = scalar_lea.vmem %s7, 80
    %v2588 = vld [vmem:[%s2587] sm:$0xf]
    %v2589 = vld [vmem:[%s2587 + $0x4] sm:$0xf]
    %v2590 = vld [vmem:[%s2587 + $0x8] sm:$0xf]
    %v2591 = vld [vmem:[%s2587 + $0xc] sm:$0xf]
    %v2596 = vunpack.c.l.b16 %v2588
    %v2597 = vunpack.c.l.b16 %v2589
    %v2598 = vunpack.c.l.b16 %v2590
    %v2599 = vunpack.c.l.b16 %v2591
    %v2600 = vpack.c.b16 %v2597, %v2596
    %v2601 = vpack.c.b16 %v2599, %v2598
    %2604 = vmatprep.subr.bf16.mxu0 0
    %2605 = vmatpush1.bf16.msra.mxu0 0
    %2606 = vmatprep.subr.bf16.mxu0 0
    %2607 = vmatpush1.bf16.msra.mxu0 0
    %2608 = vmatprep.subr.bf16.mxu0 0
    %2609 = vmatpush1.bf16.msra.mxu0 0
    %2610 = vmatprep.subr.bf16.mxu0 0
    %2611 = vmatpush1.bf16.msra.mxu0 0
    %2612 = vmatprep.subr.bf16.mxu0 0
    %2613 = vmatpush1.bf16.msra.mxu0 0
    %2614 = vmatprep.subr.bf16.mxu0 0
    %2615 = vmatpush1.bf16.msra.mxu0 0
    %2616 = vmatprep.subr.bf16.mxu0 0
    %2617 = vmatpush1.bf16.msra.mxu0 %v2601
    %2618 = vmatprep.subr.bf16.mxu0 0
    %2619 = vmatpush1.bf16.msra.mxu0 %v2600
    %2620 = vmatprep.subr.bf16.mxu0 0
    %2621 = vmatpush2.bf16.msra.mxu0 0
    %2622 = vmatprep.subr.bf16.mxu0 0
    %2623 = vmatpush2.bf16.msra.mxu0 0
    %2624 = vmatprep.subr.bf16.mxu0 0
    %2625 = vmatpush2.bf16.msra.mxu0 0
    %2626 = vmatprep.subr.bf16.mxu0 0
    %2627 = vmatpush2.bf16.msra.mxu0 0
    %2628 = vmatprep.subr.bf16.mxu0 0
    %2629 = vmatpush2.bf16.msra.mxu0 0
    %2630 = vmatprep.subr.bf16.mxu0 0
    %2631 = vmatpush2.bf16.msra.mxu0 0
    %2632 = vmatprep.subr.bf16.mxu0 0
    %2633 = vmatpush2.bf16.msra.mxu0 0
    %2634 = vmatprep.subr.bf16.mxu0 0
    %2635 = vmatpush2.bf16.msra.mxu0 0
    %2636 = vmatprep.mubr.bf16.mxu0 0
    %2637 = vmatmul.mubr.bf16.gmra.mxu0 %v2370
    %v2638 = vpop.f32.mrf.mxu0
    %v2639 = vadd.f32 0.0, %v2638
    %v2640 = vpop.f32.mrf.mxu0
    %v2641 = vpop.f32.mrf.mxu0
    %v2642 = vadd.f32 0.0, %v2641
    %v2643 = vpop.f32.mrf.mxu0
    %2644 = vdwg.mxu0
    %s2645 = scalar_lea.vmem %s8, 80
    %v2646 = vld [vmem:[%s2645] sm:$0xf]
    %v2647 = vld [vmem:[%s2645 + $0x4] sm:$0xf]
    %v2648 = vld [vmem:[%s2645 + $0x8] sm:$0xf]
    %v2649 = vld [vmem:[%s2645 + $0xc] sm:$0xf]
    %v2654 = vunpack.c.l.b16 %v2646
    %v2655 = vunpack.c.l.b16 %v2647
    %v2656 = vunpack.c.l.b16 %v2648
    %v2657 = vunpack.c.l.b16 %v2649
    %v2658 = vpack.c.b16 %v2655, %v2654
    %v2659 = vpack.c.b16 %v2657, %v2656
    %2662 = vmatprep.subr.bf16.mxu0 0
    %2663 = vmatpush1.bf16.msra.mxu0 0
    %2664 = vmatprep.subr.bf16.mxu0 0
    %2665 = vmatpush1.bf16.msra.mxu0 0
    %2666 = vmatprep.subr.bf16.mxu0 0
    %2667 = vmatpush1.bf16.msra.mxu0 0
    %2668 = vmatprep.subr.bf16.mxu0 0
    %2669 = vmatpush1.bf16.msra.mxu0 0
    %2670 = vmatprep.subr.bf16.mxu0 0
    %2671 = vmatpush1.bf16.msra.mxu0 0
    %2672 = vmatprep.subr.bf16.mxu0 0
    %2673 = vmatpush1.bf16.msra.mxu0 0
    %2674 = vmatprep.subr.bf16.mxu0 0
    %2675 = vmatpush1.bf16.msra.mxu0 %v2659
    %2676 = vmatprep.subr.bf16.mxu0 0
    %2677 = vmatpush1.bf16.msra.mxu0 %v2658
    %2678 = vmatprep.subr.bf16.mxu0 0
    %2679 = vmatpush2.bf16.msra.mxu0 0
    %2680 = vmatprep.subr.bf16.mxu0 0
    %2681 = vmatpush2.bf16.msra.mxu0 0
    %2682 = vmatprep.subr.bf16.mxu0 0
    %2683 = vmatpush2.bf16.msra.mxu0 0
    %2684 = vmatprep.subr.bf16.mxu0 0
    %2685 = vmatpush2.bf16.msra.mxu0 0
    %2686 = vmatprep.subr.bf16.mxu0 0
    %2687 = vmatpush2.bf16.msra.mxu0 0
    %2688 = vmatprep.subr.bf16.mxu0 0
    %2689 = vmatpush2.bf16.msra.mxu0 0
    %2690 = vmatprep.subr.bf16.mxu0 0
    %2691 = vmatpush2.bf16.msra.mxu0 0
    %2692 = vmatprep.subr.bf16.mxu0 0
    %2693 = vmatpush2.bf16.msra.mxu0 0
    %2694 = vmatprep.mubr.bf16.mxu0 0
    %2695 = vmatmul.mubr.bf16.gmra.mxu0 %v2370
    %v2696 = vpop.f32.mrf.mxu0
    %v2697 = vadd.f32 0.0, %v2696
    %v2698 = vpop.f32.mrf.mxu0
    %v2699 = vpop.f32.mrf.mxu0
    %v2700 = vadd.f32 0.0, %v2699
    %v2701 = vpop.f32.mrf.mxu0
    %2702 = vdwg.mxu0
    %s2703 = scalar_lea.vmem %s6, 96
    %v2704 = vld [vmem:[%s2703] sm:$0xf]
    %v2705 = vld [vmem:[%s2703 + $0x4] sm:$0xf]
    %v2706 = vld [vmem:[%s2703 + $0x8] sm:$0xf]
    %v2707 = vld [vmem:[%s2703 + $0xc] sm:$0xf]
    %v2712 = vunpack.c.l.b16 %v2704
    %v2713 = vunpack.c.l.b16 %v2705
    %v2714 = vunpack.c.l.b16 %v2706
    %v2715 = vunpack.c.l.b16 %v2707
    %v2716 = vpack.c.b16 %v2713, %v2712
    %v2717 = vpack.c.b16 %v2715, %v2714
    %2720 = vmatprep.subr.bf16.mxu0 0
    %2721 = vmatpush1.bf16.msra.mxu0 0
    %2722 = vmatprep.subr.bf16.mxu0 0
    %2723 = vmatpush1.bf16.msra.mxu0 0
    %2724 = vmatprep.subr.bf16.mxu0 0
    %2725 = vmatpush1.bf16.msra.mxu0 0
    %2726 = vmatprep.subr.bf16.mxu0 0
    %2727 = vmatpush1.bf16.msra.mxu0 0
    %2728 = vmatprep.subr.bf16.mxu0 0
    %2729 = vmatpush1.bf16.msra.mxu0 0
    %2730 = vmatprep.subr.bf16.mxu0 0
    %2731 = vmatpush1.bf16.msra.mxu0 0
    %2732 = vmatprep.subr.bf16.mxu0 0
    %2733 = vmatpush1.bf16.msra.mxu0 %v2717
    %2734 = vmatprep.subr.bf16.mxu0 0
    %2735 = vmatpush1.bf16.msra.mxu0 %v2716
    %2736 = vmatprep.subr.bf16.mxu0 0
    %2737 = vmatpush2.bf16.msra.mxu0 0
    %2738 = vmatprep.subr.bf16.mxu0 0
    %2739 = vmatpush2.bf16.msra.mxu0 0
    %2740 = vmatprep.subr.bf16.mxu0 0
    %2741 = vmatpush2.bf16.msra.mxu0 0
    %2742 = vmatprep.subr.bf16.mxu0 0
    %2743 = vmatpush2.bf16.msra.mxu0 0
    %2744 = vmatprep.subr.bf16.mxu0 0
    %2745 = vmatpush2.bf16.msra.mxu0 0
    %2746 = vmatprep.subr.bf16.mxu0 0
    %2747 = vmatpush2.bf16.msra.mxu0 0
    %2748 = vmatprep.subr.bf16.mxu0 0
    %2749 = vmatpush2.bf16.msra.mxu0 0
    %2750 = vmatprep.subr.bf16.mxu0 0
    %2751 = vmatpush2.bf16.msra.mxu0 0
    %2752 = vmatprep.mubr.bf16.mxu0 0
    %2753 = vmatmul.mubr.bf16.gmra.mxu0 %v2370
    %v2754 = vpop.f32.mrf.mxu0
    %v2755 = vadd.f32 0.0, %v2754
    %v2756 = vpop.f32.mrf.mxu0
    %v2757 = vpop.f32.mrf.mxu0
    %v2758 = vadd.f32 0.0, %v2757
    %v2759 = vpop.f32.mrf.mxu0
    %2760 = vdwg.mxu0
    %s2761 = scalar_lea.vmem %s7, 96
    %v2762 = vld [vmem:[%s2761] sm:$0xf]
    %v2763 = vld [vmem:[%s2761 + $0x4] sm:$0xf]
    %v2764 = vld [vmem:[%s2761 + $0x8] sm:$0xf]
    %v2765 = vld [vmem:[%s2761 + $0xc] sm:$0xf]
    %v2770 = vunpack.c.l.b16 %v2762
    %v2771 = vunpack.c.l.b16 %v2763
    %v2772 = vunpack.c.l.b16 %v2764
    %v2773 = vunpack.c.l.b16 %v2765
    %v2774 = vpack.c.b16 %v2771, %v2770
    %v2775 = vpack.c.b16 %v2773, %v2772
    %2778 = vmatprep.subr.bf16.mxu0 0
    %2779 = vmatpush1.bf16.msra.mxu0 0
    %2780 = vmatprep.subr.bf16.mxu0 0
    %2781 = vmatpush1.bf16.msra.mxu0 0
    %2782 = vmatprep.subr.bf16.mxu0 0
    %2783 = vmatpush1.bf16.msra.mxu0 0
    %2784 = vmatprep.subr.bf16.mxu0 0
    %2785 = vmatpush1.bf16.msra.mxu0 0
    %2786 = vmatprep.subr.bf16.mxu0 0
    %2787 = vmatpush1.bf16.msra.mxu0 0
    %2788 = vmatprep.subr.bf16.mxu0 0
    %2789 = vmatpush1.bf16.msra.mxu0 0
    %2790 = vmatprep.subr.bf16.mxu0 0
    %2791 = vmatpush1.bf16.msra.mxu0 %v2775
    %2792 = vmatprep.subr.bf16.mxu0 0
    %2793 = vmatpush1.bf16.msra.mxu0 %v2774
    %2794 = vmatprep.subr.bf16.mxu0 0
    %2795 = vmatpush2.bf16.msra.mxu0 0
    %2796 = vmatprep.subr.bf16.mxu0 0
    %2797 = vmatpush2.bf16.msra.mxu0 0
    %2798 = vmatprep.subr.bf16.mxu0 0
    %2799 = vmatpush2.bf16.msra.mxu0 0
    %2800 = vmatprep.subr.bf16.mxu0 0
    %2801 = vmatpush2.bf16.msra.mxu0 0
    %2802 = vmatprep.subr.bf16.mxu0 0
    %2803 = vmatpush2.bf16.msra.mxu0 0
    %2804 = vmatprep.subr.bf16.mxu0 0
    %2805 = vmatpush2.bf16.msra.mxu0 0
    %2806 = vmatprep.subr.bf16.mxu0 0
    %2807 = vmatpush2.bf16.msra.mxu0 0
    %2808 = vmatprep.subr.bf16.mxu0 0
    %2809 = vmatpush2.bf16.msra.mxu0 0
    %2810 = vmatprep.mubr.bf16.mxu0 0
    %2811 = vmatmul.mubr.bf16.gmra.mxu0 %v2370
    %v2812 = vpop.f32.mrf.mxu0
    %v2813 = vadd.f32 0.0, %v2812
    %v2814 = vpop.f32.mrf.mxu0
    %v2815 = vpop.f32.mrf.mxu0
    %v2816 = vadd.f32 0.0, %v2815
    %v2817 = vpop.f32.mrf.mxu0
    %2818 = vdwg.mxu0
    %s2819 = scalar_lea.vmem %s8, 96
    %v2820 = vld [vmem:[%s2819] sm:$0xf]
    %v2821 = vld [vmem:[%s2819 + $0x4] sm:$0xf]
    %v2822 = vld [vmem:[%s2819 + $0x8] sm:$0xf]
    %v2823 = vld [vmem:[%s2819 + $0xc] sm:$0xf]
    %v2828 = vunpack.c.l.b16 %v2820
    %v2829 = vunpack.c.l.b16 %v2821
    %v2830 = vunpack.c.l.b16 %v2822
    %v2831 = vunpack.c.l.b16 %v2823
    %v2832 = vpack.c.b16 %v2829, %v2828
    %v2833 = vpack.c.b16 %v2831, %v2830
    %2836 = vmatprep.subr.bf16.mxu0 0
    %2837 = vmatpush1.bf16.msra.mxu0 0
    %2838 = vmatprep.subr.bf16.mxu0 0
    %2839 = vmatpush1.bf16.msra.mxu0 0
    %2840 = vmatprep.subr.bf16.mxu0 0
    %2841 = vmatpush1.bf16.msra.mxu0 0
    %2842 = vmatprep.subr.bf16.mxu0 0
    %2843 = vmatpush1.bf16.msra.mxu0 0
    %2844 = vmatprep.subr.bf16.mxu0 0
    %2845 = vmatpush1.bf16.msra.mxu0 0
    %2846 = vmatprep.subr.bf16.mxu0 0
    %2847 = vmatpush1.bf16.msra.mxu0 0
    %2848 = vmatprep.subr.bf16.mxu0 0
    %2849 = vmatpush1.bf16.msra.mxu0 %v2833
    %2850 = vmatprep.subr.bf16.mxu0 0
    %2851 = vmatpush1.bf16.msra.mxu0 %v2832
    %2852 = vmatprep.subr.bf16.mxu0 0
    %2853 = vmatpush2.bf16.msra.mxu0 0
    %2854 = vmatprep.subr.bf16.mxu0 0
    %2855 = vmatpush2.bf16.msra.mxu0 0
    %2856 = vmatprep.subr.bf16.mxu0 0
    %2857 = vmatpush2.bf16.msra.mxu0 0
    %2858 = vmatprep.subr.bf16.mxu0 0
    %2859 = vmatpush2.bf16.msra.mxu0 0
    %2860 = vmatprep.subr.bf16.mxu0 0
    %2861 = vmatpush2.bf16.msra.mxu0 0
    %2862 = vmatprep.subr.bf16.mxu0 0
    %2863 = vmatpush2.bf16.msra.mxu0 0
    %2864 = vmatprep.subr.bf16.mxu0 0
    %2865 = vmatpush2.bf16.msra.mxu0 0
    %2866 = vmatprep.subr.bf16.mxu0 0
    %2867 = vmatpush2.bf16.msra.mxu0 0
    %2868 = vmatprep.mubr.bf16.mxu0 0
    %2869 = vmatmul.mubr.bf16.gmra.mxu0 %v2370
    %v2870 = vpop.f32.mrf.mxu0
    %v2871 = vadd.f32 0.0, %v2870
    %v2872 = vpop.f32.mrf.mxu0
    %v2873 = vpop.f32.mrf.mxu0
    %v2874 = vadd.f32 0.0, %v2873
    %v2875 = vpop.f32.mrf.mxu0
    %2876 = vdwg.mxu0
    %s2877 = scalar_lea.vmem %s6, 112
    %v2878 = vld [vmem:[%s2877] sm:$0xf]
    %v2879 = vld [vmem:[%s2877 + $0x4] sm:$0xf]
    %v2880 = vld [vmem:[%s2877 + $0x8] sm:$0xf]
    %v2881 = vld [vmem:[%s2877 + $0xc] sm:$0xf]
    %v2886 = vunpack.c.l.b16 %v2878
    %v2887 = vunpack.c.l.b16 %v2879
    %v2888 = vunpack.c.l.b16 %v2880
    %v2889 = vunpack.c.l.b16 %v2881
    %v2890 = vpack.c.b16 %v2887, %v2886
    %v2891 = vpack.c.b16 %v2889, %v2888
    %2894 = vmatprep.subr.bf16.mxu0 0
    %2895 = vmatpush1.bf16.msra.mxu0 0
    %2896 = vmatprep.subr.bf16.mxu0 0
    %2897 = vmatpush1.bf16.msra.mxu0 0
    %2898 = vmatprep.subr.bf16.mxu0 0
    %2899 = vmatpush1.bf16.msra.mxu0 0
    %2900 = vmatprep.subr.bf16.mxu0 0
    %2901 = vmatpush1.bf16.msra.mxu0 0
    %2902 = vmatprep.subr.bf16.mxu0 0
    %2903 = vmatpush1.bf16.msra.mxu0 0
    %2904 = vmatprep.subr.bf16.mxu0 0
    %2905 = vmatpush1.bf16.msra.mxu0 0
    %2906 = vmatprep.subr.bf16.mxu0 0
    %2907 = vmatpush1.bf16.msra.mxu0 %v2891
    %2908 = vmatprep.subr.bf16.mxu0 0
    %2909 = vmatpush1.bf16.msra.mxu0 %v2890
    %2910 = vmatprep.subr.bf16.mxu0 0
    %2911 = vmatpush2.bf16.msra.mxu0 0
    %2912 = vmatprep.subr.bf16.mxu0 0
    %2913 = vmatpush2.bf16.msra.mxu0 0
    %2914 = vmatprep.subr.bf16.mxu0 0
    %2915 = vmatpush2.bf16.msra.mxu0 0
    %2916 = vmatprep.subr.bf16.mxu0 0
    %2917 = vmatpush2.bf16.msra.mxu0 0
    %2918 = vmatprep.subr.bf16.mxu0 0
    %2919 = vmatpush2.bf16.msra.mxu0 0
    %2920 = vmatprep.subr.bf16.mxu0 0
    %2921 = vmatpush2.bf16.msra.mxu0 0
    %2922 = vmatprep.subr.bf16.mxu0 0
    %2923 = vmatpush2.bf16.msra.mxu0 0
    %2924 = vmatprep.subr.bf16.mxu0 0
    %2925 = vmatpush2.bf16.msra.mxu0 0
    %2926 = vmatprep.mubr.bf16.mxu0 0
    %2927 = vmatmul.mubr.bf16.gmra.mxu0 %v2370
    %v2928 = vpop.f32.mrf.mxu0
    %v2929 = vadd.f32 0.0, %v2928
    %v2930 = vpop.f32.mrf.mxu0
    %v2931 = vpop.f32.mrf.mxu0
    %v2932 = vadd.f32 0.0, %v2931
    %v2933 = vpop.f32.mrf.mxu0
    %2934 = vdwg.mxu0
    %s2935 = scalar_lea.vmem %s7, 112
    %v2936 = vld [vmem:[%s2935] sm:$0xf]
    %v2937 = vld [vmem:[%s2935 + $0x4] sm:$0xf]
    %v2938 = vld [vmem:[%s2935 + $0x8] sm:$0xf]
    %v2939 = vld [vmem:[%s2935 + $0xc] sm:$0xf]
    %v2944 = vunpack.c.l.b16 %v2936
    %v2945 = vunpack.c.l.b16 %v2937
    %v2946 = vunpack.c.l.b16 %v2938
    %v2947 = vunpack.c.l.b16 %v2939
    %v2948 = vpack.c.b16 %v2945, %v2944
    %v2949 = vpack.c.b16 %v2947, %v2946
    %2952 = vmatprep.subr.bf16.mxu0 0
    %2953 = vmatpush1.bf16.msra.mxu0 0
    %2954 = vmatprep.subr.bf16.mxu0 0
    %2955 = vmatpush1.bf16.msra.mxu0 0
    %2956 = vmatprep.subr.bf16.mxu0 0
    %2957 = vmatpush1.bf16.msra.mxu0 0
    %2958 = vmatprep.subr.bf16.mxu0 0
    %2959 = vmatpush1.bf16.msra.mxu0 0
    %2960 = vmatprep.subr.bf16.mxu0 0
    %2961 = vmatpush1.bf16.msra.mxu0 0
    %2962 = vmatprep.subr.bf16.mxu0 0
    %2963 = vmatpush1.bf16.msra.mxu0 0
    %2964 = vmatprep.subr.bf16.mxu0 0
    %2965 = vmatpush1.bf16.msra.mxu0 %v2949
    %2966 = vmatprep.subr.bf16.mxu0 0
    %2967 = vmatpush1.bf16.msra.mxu0 %v2948
    %2968 = vmatprep.subr.bf16.mxu0 0
    %2969 = vmatpush2.bf16.msra.mxu0 0
    %2970 = vmatprep.subr.bf16.mxu0 0
    %2971 = vmatpush2.bf16.msra.mxu0 0
    %2972 = vmatprep.subr.bf16.mxu0 0
    %2973 = vmatpush2.bf16.msra.mxu0 0
    %2974 = vmatprep.subr.bf16.mxu0 0
    %2975 = vmatpush2.bf16.msra.mxu0 0
    %2976 = vmatprep.subr.bf16.mxu0 0
    %2977 = vmatpush2.bf16.msra.mxu0 0
    %2978 = vmatprep.subr.bf16.mxu0 0
    %2979 = vmatpush2.bf16.msra.mxu0 0
    %2980 = vmatprep.subr.bf16.mxu0 0
    %2981 = vmatpush2.bf16.msra.mxu0 0
    %2982 = vmatprep.subr.bf16.mxu0 0
    %2983 = vmatpush2.bf16.msra.mxu0 0
    %2984 = vmatprep.mubr.bf16.mxu0 0
    %2985 = vmatmul.mubr.bf16.gmra.mxu0 %v2370
    %v2986 = vpop.f32.mrf.mxu0
    %v2987 = vadd.f32 0.0, %v2986
    %v2988 = vpop.f32.mrf.mxu0
    %v2989 = vpop.f32.mrf.mxu0
    %v2990 = vadd.f32 0.0, %v2989
    %v2991 = vpop.f32.mrf.mxu0
    %2992 = vdwg.mxu0
    %s2993 = scalar_lea.vmem %s8, 112
    %v2994 = vld [vmem:[%s2993] sm:$0xf]
    %v2995 = vld [vmem:[%s2993 + $0x4] sm:$0xf]
    %v2996 = vld [vmem:[%s2993 + $0x8] sm:$0xf]
    %v2997 = vld [vmem:[%s2993 + $0xc] sm:$0xf]
    %v3002 = vunpack.c.l.b16 %v2994
    %v3003 = vunpack.c.l.b16 %v2995
    %v3004 = vunpack.c.l.b16 %v2996
    %v3005 = vunpack.c.l.b16 %v2997
    %v3006 = vpack.c.b16 %v3003, %v3002
    %v3007 = vpack.c.b16 %v3005, %v3004
    %3010 = vmatprep.subr.bf16.mxu0 0
    %3011 = vmatpush1.bf16.msra.mxu0 0
    %3012 = vmatprep.subr.bf16.mxu0 0
    %3013 = vmatpush1.bf16.msra.mxu0 0
    %3014 = vmatprep.subr.bf16.mxu0 0
    %3015 = vmatpush1.bf16.msra.mxu0 0
    %3016 = vmatprep.subr.bf16.mxu0 0
    %3017 = vmatpush1.bf16.msra.mxu0 0
    %3018 = vmatprep.subr.bf16.mxu0 0
    %3019 = vmatpush1.bf16.msra.mxu0 0
    %3020 = vmatprep.subr.bf16.mxu0 0
    %3021 = vmatpush1.bf16.msra.mxu0 0
    %3022 = vmatprep.subr.bf16.mxu0 0
    %3023 = vmatpush1.bf16.msra.mxu0 %v3007
    %3024 = vmatprep.subr.bf16.mxu0 0
    %3025 = vmatpush1.bf16.msra.mxu0 %v3006
    %3026 = vmatprep.subr.bf16.mxu0 0
    %3027 = vmatpush2.bf16.msra.mxu0 0
    %3028 = vmatprep.subr.bf16.mxu0 0
    %3029 = vmatpush2.bf16.msra.mxu0 0
    %3030 = vmatprep.subr.bf16.mxu0 0
    %3031 = vmatpush2.bf16.msra.mxu0 0
    %3032 = vmatprep.subr.bf16.mxu0 0
    %3033 = vmatpush2.bf16.msra.mxu0 0
    %3034 = vmatprep.subr.bf16.mxu0 0
    %3035 = vmatpush2.bf16.msra.mxu0 0
    %3036 = vmatprep.subr.bf16.mxu0 0
    %3037 = vmatpush2.bf16.msra.mxu0 0
    %3038 = vmatprep.subr.bf16.mxu0 0
    %3039 = vmatpush2.bf16.msra.mxu0 0
    %3040 = vmatprep.subr.bf16.mxu0 0
    %3041 = vmatpush2.bf16.msra.mxu0 0
    %3042 = vmatprep.mubr.bf16.mxu0 0
    %3043 = vmatmul.mubr.bf16.gmra.mxu0 %v2370
    %v3044 = vpop.f32.mrf.mxu0
    %v3045 = vadd.f32 0.0, %v3044
    %v3046 = vpop.f32.mrf.mxu0
    %v3047 = vpop.f32.mrf.mxu0
    %v3048 = vadd.f32 0.0, %v3047
    %v3049 = vpop.f32.mrf.mxu0
    %3050 = vdwg.mxu0
    %v3051 = vpack.c.bf16 %v2407, %v2407
    %v3052 = vpack.c.bf16 %v2410, %v2410
    %v3053 = vpack.c.bf16 %v2581, %v2581
    %v3054 = vpack.c.bf16 %v2584, %v2584
    %v3055 = vpack.c.bf16 %v2755, %v2755
    %v3056 = vpack.c.bf16 %v2758, %v2758
    %v3057 = vpack.c.bf16 %v2929, %v2929
    %v3058 = vpack.c.bf16 %v2932, %v2932
    %v3059 = vpack.c.bf16 %v2465, %v2465
    %v3060 = vpack.c.bf16 %v2468, %v2468
    %v3061 = vpack.c.bf16 %v2639, %v2639
    %v3062 = vpack.c.bf16 %v2642, %v2642
    %v3063 = vpack.c.bf16 %v2813, %v2813
    %v3064 = vpack.c.bf16 %v2816, %v2816
    %v3065 = vpack.c.bf16 %v2987, %v2987
    %v3066 = vpack.c.bf16 %v2990, %v2990
    %v3067 = vpack.c.bf16 %v2523, %v2523
    %v3068 = vpack.c.bf16 %v2526, %v2526
    %v3069 = vpack.c.bf16 %v2697, %v2697
    %v3070 = vpack.c.bf16 %v2700, %v2700
    %v3071 = vpack.c.bf16 %v2871, %v2871
    %v3072 = vpack.c.bf16 %v2874, %v2874
    %v3073 = vpack.c.bf16 %v3045, %v3045
    %v3074 = vpack.c.bf16 %v3048, %v3048
    %v3076 = vsel %vm1128, %v3051, 0
    %v3079 = vsel %vm1128, %v3059, 0
    %3081 = vmatprep.subr.bf16.mxu0 0
    %3082 = vmatpush1.bf16.xpose.msra.mxu0 0
    %3083 = vmatprep.subr.bf16.mxu0 0
    %3084 = vmatpush1.bf16.xpose.msra.mxu0 0
    %3085 = vmatprep.subr.bf16.mxu0 0
    %3086 = vmatpush1.bf16.xpose.msra.mxu0 0
    %3087 = vmatprep.subr.bf16.mxu0 0
    %3088 = vmatpush1.bf16.xpose.msra.mxu0 0
    %3089 = vmatprep.subr.bf16.mxu0 0
    %3090 = vmatpush1.bf16.xpose.msra.mxu0 0
    %3091 = vmatprep.subr.bf16.mxu0 0
    %3092 = vmatpush1.bf16.xpose.msra.mxu0 0
    %3093 = vmatprep.subr.bf16.mxu0 0
    %3094 = vmatpush1.bf16.xpose.msra.mxu0 0
    %3095 = vmatprep.subr.bf16.mxu0 0
    %3096 = vmatpush1.bf16.xpose.msra.mxu0 %v3079
    %3097 = vmatprep.subr.bf16.mxu0 0
    %3098 = vmatpush2.bf16.xpose.msra.mxu0 0
    %3099 = vmatprep.subr.bf16.mxu0 0
    %3100 = vmatpush2.bf16.xpose.msra.mxu0 0
    %3101 = vmatprep.subr.bf16.mxu0 0
    %3102 = vmatpush2.bf16.xpose.msra.mxu0 0
    %3103 = vmatprep.subr.bf16.mxu0 0
    %3104 = vmatpush2.bf16.xpose.msra.mxu0 0
    %3105 = vmatprep.subr.bf16.mxu0 0
    %3106 = vmatpush2.bf16.xpose.msra.mxu0 0
    %3107 = vmatprep.subr.bf16.mxu0 0
    %3108 = vmatpush2.bf16.xpose.msra.mxu0 0
    %3109 = vmatprep.subr.bf16.mxu0 0
    %3110 = vmatpush2.bf16.xpose.msra.mxu0 0
    %3111 = vmatprep.subr.bf16.mxu0 0
    %3112 = vmatpush2.bf16.xpose.msra.mxu0 0
    %3113 = vmatprep.mubr.bf16.mxu0 0
    %3114 = vmatmul.mubr.bf16.gmra.mxu0 %v3076
    %v3115 = vpop.f32.mrf.mxu0
    %v3116 = vadd.f32 0.0, %v3115
    %v3117 = vpop.f32.mrf.mxu0
    %v3118 = vpop.f32.mrf.mxu0
    %v3119 = vpop.f32.mrf.mxu0
    %3120 = vdwg.mxu0
    %v3122 = vsel %vm1128, %v3052, 0
    %v3125 = vsel %vm1128, %v3060, 0
    %3127 = vmatprep.subr.bf16.mxu0 0
    %3128 = vmatpush1.bf16.xpose.msra.mxu0 0
    %3129 = vmatprep.subr.bf16.mxu0 0
    %3130 = vmatpush1.bf16.xpose.msra.mxu0 0
    %3131 = vmatprep.subr.bf16.mxu0 0
    %3132 = vmatpush1.bf16.xpose.msra.mxu0 0
    %3133 = vmatprep.subr.bf16.mxu0 0
    %3134 = vmatpush1.bf16.xpose.msra.mxu0 0
    %3135 = vmatprep.subr.bf16.mxu0 0
    %3136 = vmatpush1.bf16.xpose.msra.mxu0 0
    %3137 = vmatprep.subr.bf16.mxu0 0
    %3138 = vmatpush1.bf16.xpose.msra.mxu0 0
    %3139 = vmatprep.subr.bf16.mxu0 0
    %3140 = vmatpush1.bf16.xpose.msra.mxu0 0
    %3141 = vmatprep.subr.bf16.mxu0 0
    %3142 = vmatpush1.bf16.xpose.msra.mxu0 %v3125
    %3143 = vmatprep.subr.bf16.mxu0 0
    %3144 = vmatpush2.bf16.xpose.msra.mxu0 0
    %3145 = vmatprep.subr.bf16.mxu0 0
    %3146 = vmatpush2.bf16.xpose.msra.mxu0 0
    %3147 = vmatprep.subr.bf16.mxu0 0
    %3148 = vmatpush2.bf16.xpose.msra.mxu0 0
    %3149 = vmatprep.subr.bf16.mxu0 0
    %3150 = vmatpush2.bf16.xpose.msra.mxu0 0
    %3151 = vmatprep.subr.bf16.mxu0 0
    %3152 = vmatpush2.bf16.xpose.msra.mxu0 0
    %3153 = vmatprep.subr.bf16.mxu0 0
    %3154 = vmatpush2.bf16.xpose.msra.mxu0 0
    %3155 = vmatprep.subr.bf16.mxu0 0
    %3156 = vmatpush2.bf16.xpose.msra.mxu0 0
    %3157 = vmatprep.subr.bf16.mxu0 0
    %3158 = vmatpush2.bf16.xpose.msra.mxu0 0
    %3159 = vmatprep.mubr.bf16.mxu0 0
    %3160 = vmatmul.mubr.bf16.gmra.mxu0 %v3122
    %v3161 = vpop.f32.mrf.mxu0
    %v3162 = vadd.f32 0.0, %v3161
    %v3163 = vpop.f32.mrf.mxu0
    %v3164 = vpop.f32.mrf.mxu0
    %v3165 = vpop.f32.mrf.mxu0
    %3166 = vdwg.mxu0
    %v3168 = vsel %vm1128, %v3053, 0
    %v3171 = vsel %vm1128, %v3061, 0
    %3173 = vmatprep.subr.bf16.mxu0 0
    %3174 = vmatpush1.bf16.xpose.msra.mxu0 0
    %3175 = vmatprep.subr.bf16.mxu0 0
    %3176 = vmatpush1.bf16.xpose.msra.mxu0 0
    %3177 = vmatprep.subr.bf16.mxu0 0
    %3178 = vmatpush1.bf16.xpose.msra.mxu0 0
    %3179 = vmatprep.subr.bf16.mxu0 0
    %3180 = vmatpush1.bf16.xpose.msra.mxu0 0
    %3181 = vmatprep.subr.bf16.mxu0 0
    %3182 = vmatpush1.bf16.xpose.msra.mxu0 0
    %3183 = vmatprep.subr.bf16.mxu0 0
    %3184 = vmatpush1.bf16.xpose.msra.mxu0 0
    %3185 = vmatprep.subr.bf16.mxu0 0
    %3186 = vmatpush1.bf16.xpose.msra.mxu0 0
    %3187 = vmatprep.subr.bf16.mxu0 0
    %3188 = vmatpush1.bf16.xpose.msra.mxu0 %v3171
    %3189 = vmatprep.subr.bf16.mxu0 0
    %3190 = vmatpush2.bf16.xpose.msra.mxu0 0
    %3191 = vmatprep.subr.bf16.mxu0 0
    %3192 = vmatpush2.bf16.xpose.msra.mxu0 0
    %3193 = vmatprep.subr.bf16.mxu0 0
    %3194 = vmatpush2.bf16.xpose.msra.mxu0 0
    %3195 = vmatprep.subr.bf16.mxu0 0
    %3196 = vmatpush2.bf16.xpose.msra.mxu0 0
    %3197 = vmatprep.subr.bf16.mxu0 0
    %3198 = vmatpush2.bf16.xpose.msra.mxu0 0
    %3199 = vmatprep.subr.bf16.mxu0 0
    %3200 = vmatpush2.bf16.xpose.msra.mxu0 0
    %3201 = vmatprep.subr.bf16.mxu0 0
    %3202 = vmatpush2.bf16.xpose.msra.mxu0 0
    %3203 = vmatprep.subr.bf16.mxu0 0
    %3204 = vmatpush2.bf16.xpose.msra.mxu0 0
    %3205 = vmatprep.mubr.bf16.mxu0 0
    %3206 = vmatmul.mubr.bf16.gmra.mxu0 %v3168
    %v3207 = vpop.f32.mrf.mxu0
    %v3208 = vadd.f32 0.0, %v3207
    %v3209 = vpop.f32.mrf.mxu0
    %v3210 = vpop.f32.mrf.mxu0
    %v3211 = vpop.f32.mrf.mxu0
    %3212 = vdwg.mxu0
    %v3214 = vsel %vm1128, %v3054, 0
    %v3217 = vsel %vm1128, %v3062, 0
    %3219 = vmatprep.subr.bf16.mxu0 0
    %3220 = vmatpush1.bf16.xpose.msra.mxu0 0
    %3221 = vmatprep.subr.bf16.mxu0 0
    %3222 = vmatpush1.bf16.xpose.msra.mxu0 0
    %3223 = vmatprep.subr.bf16.mxu0 0
    %3224 = vmatpush1.bf16.xpose.msra.mxu0 0
    %3225 = vmatprep.subr.bf16.mxu0 0
    %3226 = vmatpush1.bf16.xpose.msra.mxu0 0
    %3227 = vmatprep.subr.bf16.mxu0 0
    %3228 = vmatpush1.bf16.xpose.msra.mxu0 0
    %3229 = vmatprep.subr.bf16.mxu0 0
    %3230 = vmatpush1.bf16.xpose.msra.mxu0 0
    %3231 = vmatprep.subr.bf16.mxu0 0
    %3232 = vmatpush1.bf16.xpose.msra.mxu0 0
    %3233 = vmatprep.subr.bf16.mxu0 0
    %3234 = vmatpush1.bf16.xpose.msra.mxu0 %v3217
    %3235 = vmatprep.subr.bf16.mxu0 0
    %3236 = vmatpush2.bf16.xpose.msra.mxu0 0
    %3237 = vmatprep.subr.bf16.mxu0 0
    %3238 = vmatpush2.bf16.xpose.msra.mxu0 0
    %3239 = vmatprep.subr.bf16.mxu0 0
    %3240 = vmatpush2.bf16.xpose.msra.mxu0 0
    %3241 = vmatprep.subr.bf16.mxu0 0
    %3242 = vmatpush2.bf16.xpose.msra.mxu0 0
    %3243 = vmatprep.subr.bf16.mxu0 0
    %3244 = vmatpush2.bf16.xpose.msra.mxu0 0
    %3245 = vmatprep.subr.bf16.mxu0 0
    %3246 = vmatpush2.bf16.xpose.msra.mxu0 0
    %3247 = vmatprep.subr.bf16.mxu0 0
    %3248 = vmatpush2.bf16.xpose.msra.mxu0 0
    %3249 = vmatprep.subr.bf16.mxu0 0
    %3250 = vmatpush2.bf16.xpose.msra.mxu0 0
    %3251 = vmatprep.mubr.bf16.mxu0 0
    %3252 = vmatmul.mubr.bf16.gmra.mxu0 %v3214
    %v3253 = vpop.f32.mrf.mxu0
    %v3254 = vadd.f32 0.0, %v3253
    %v3255 = vpop.f32.mrf.mxu0
    %v3256 = vpop.f32.mrf.mxu0
    %v3257 = vpop.f32.mrf.mxu0
    %3258 = vdwg.mxu0
    %v3260 = vsel %vm1128, %v3055, 0
    %v3263 = vsel %vm1128, %v3063, 0
    %3265 = vmatprep.subr.bf16.mxu0 0
    %3266 = vmatpush1.bf16.xpose.msra.mxu0 0
    %3267 = vmatprep.subr.bf16.mxu0 0
    %3268 = vmatpush1.bf16.xpose.msra.mxu0 0
    %3269 = vmatprep.subr.bf16.mxu0 0
    %3270 = vmatpush1.bf16.xpose.msra.mxu0 0
    %3271 = vmatprep.subr.bf16.mxu0 0
    %3272 = vmatpush1.bf16.xpose.msra.mxu0 0
    %3273 = vmatprep.subr.bf16.mxu0 0
    %3274 = vmatpush1.bf16.xpose.msra.mxu0 0
    %3275 = vmatprep.subr.bf16.mxu0 0
    %3276 = vmatpush1.bf16.xpose.msra.mxu0 0
    %3277 = vmatprep.subr.bf16.mxu0 0
    %3278 = vmatpush1.bf16.xpose.msra.mxu0 0
    %3279 = vmatprep.subr.bf16.mxu0 0
    %3280 = vmatpush1.bf16.xpose.msra.mxu0 %v3263
    %3281 = vmatprep.subr.bf16.mxu0 0
    %3282 = vmatpush2.bf16.xpose.msra.mxu0 0
    %3283 = vmatprep.subr.bf16.mxu0 0
    %3284 = vmatpush2.bf16.xpose.msra.mxu0 0
    %3285 = vmatprep.subr.bf16.mxu0 0
    %3286 = vmatpush2.bf16.xpose.msra.mxu0 0
    %3287 = vmatprep.subr.bf16.mxu0 0
    %3288 = vmatpush2.bf16.xpose.msra.mxu0 0
    %3289 = vmatprep.subr.bf16.mxu0 0
    %3290 = vmatpush2.bf16.xpose.msra.mxu0 0
    %3291 = vmatprep.subr.bf16.mxu0 0
    %3292 = vmatpush2.bf16.xpose.msra.mxu0 0
    %3293 = vmatprep.subr.bf16.mxu0 0
    %3294 = vmatpush2.bf16.xpose.msra.mxu0 0
    %3295 = vmatprep.subr.bf16.mxu0 0
    %3296 = vmatpush2.bf16.xpose.msra.mxu0 0
    %3297 = vmatprep.mubr.bf16.mxu0 0
    %3298 = vmatmul.mubr.bf16.gmra.mxu0 %v3260
    %v3299 = vpop.f32.mrf.mxu0
    %v3300 = vadd.f32 0.0, %v3299
    %v3301 = vpop.f32.mrf.mxu0
    %v3302 = vpop.f32.mrf.mxu0
    %v3303 = vpop.f32.mrf.mxu0
    %3304 = vdwg.mxu0
    %v3306 = vsel %vm1128, %v3056, 0
    %v3309 = vsel %vm1128, %v3064, 0
    %3311 = vmatprep.subr.bf16.mxu0 0
    %3312 = vmatpush1.bf16.xpose.msra.mxu0 0
    %3313 = vmatprep.subr.bf16.mxu0 0
    %3314 = vmatpush1.bf16.xpose.msra.mxu0 0
    %3315 = vmatprep.subr.bf16.mxu0 0
    %3316 = vmatpush1.bf16.xpose.msra.mxu0 0
    %3317 = vmatprep.subr.bf16.mxu0 0
    %3318 = vmatpush1.bf16.xpose.msra.mxu0 0
    %3319 = vmatprep.subr.bf16.mxu0 0
    %3320 = vmatpush1.bf16.xpose.msra.mxu0 0
    %3321 = vmatprep.subr.bf16.mxu0 0
    %3322 = vmatpush1.bf16.xpose.msra.mxu0 0
    %3323 = vmatprep.subr.bf16.mxu0 0
    %3324 = vmatpush1.bf16.xpose.msra.mxu0 0
    %3325 = vmatprep.subr.bf16.mxu0 0
    %3326 = vmatpush1.bf16.xpose.msra.mxu0 %v3309
    %3327 = vmatprep.subr.bf16.mxu0 0
    %3328 = vmatpush2.bf16.xpose.msra.mxu0 0
    %3329 = vmatprep.subr.bf16.mxu0 0
    %3330 = vmatpush2.bf16.xpose.msra.mxu0 0
    %3331 = vmatprep.subr.bf16.mxu0 0
    %3332 = vmatpush2.bf16.xpose.msra.mxu0 0
    %3333 = vmatprep.subr.bf16.mxu0 0
    %3334 = vmatpush2.bf16.xpose.msra.mxu0 0
    %3335 = vmatprep.subr.bf16.mxu0 0
    %3336 = vmatpush2.bf16.xpose.msra.mxu0 0
    %3337 = vmatprep.subr.bf16.mxu0 0
    %3338 = vmatpush2.bf16.xpose.msra.mxu0 0
    %3339 = vmatprep.subr.bf16.mxu0 0
    %3340 = vmatpush2.bf16.xpose.msra.mxu0 0
    %3341 = vmatprep.subr.bf16.mxu0 0
    %3342 = vmatpush2.bf16.xpose.msra.mxu0 0
    %3343 = vmatprep.mubr.bf16.mxu0 0
    %3344 = vmatmul.mubr.bf16.gmra.mxu0 %v3306
    %v3345 = vpop.f32.mrf.mxu0
    %v3346 = vadd.f32 0.0, %v3345
    %v3347 = vpop.f32.mrf.mxu0
    %v3348 = vpop.f32.mrf.mxu0
    %v3349 = vpop.f32.mrf.mxu0
    %3350 = vdwg.mxu0
    %v3352 = vsel %vm1128, %v3057, 0
    %v3355 = vsel %vm1128, %v3065, 0
    %3357 = vmatprep.subr.bf16.mxu0 0
    %3358 = vmatpush1.bf16.xpose.msra.mxu0 0
    %3359 = vmatprep.subr.bf16.mxu0 0
    %3360 = vmatpush1.bf16.xpose.msra.mxu0 0
    %3361 = vmatprep.subr.bf16.mxu0 0
    %3362 = vmatpush1.bf16.xpose.msra.mxu0 0
    %3363 = vmatprep.subr.bf16.mxu0 0
    %3364 = vmatpush1.bf16.xpose.msra.mxu0 0
    %3365 = vmatprep.subr.bf16.mxu0 0
    %3366 = vmatpush1.bf16.xpose.msra.mxu0 0
    %3367 = vmatprep.subr.bf16.mxu0 0
    %3368 = vmatpush1.bf16.xpose.msra.mxu0 0
    %3369 = vmatprep.subr.bf16.mxu0 0
    %3370 = vmatpush1.bf16.xpose.msra.mxu0 0
    %3371 = vmatprep.subr.bf16.mxu0 0
    %3372 = vmatpush1.bf16.xpose.msra.mxu0 %v3355
    %3373 = vmatprep.subr.bf16.mxu0 0
    %3374 = vmatpush2.bf16.xpose.msra.mxu0 0
    %3375 = vmatprep.subr.bf16.mxu0 0
    %3376 = vmatpush2.bf16.xpose.msra.mxu0 0
    %3377 = vmatprep.subr.bf16.mxu0 0
    %3378 = vmatpush2.bf16.xpose.msra.mxu0 0
    %3379 = vmatprep.subr.bf16.mxu0 0
    %3380 = vmatpush2.bf16.xpose.msra.mxu0 0
    %3381 = vmatprep.subr.bf16.mxu0 0
    %3382 = vmatpush2.bf16.xpose.msra.mxu0 0
    %3383 = vmatprep.subr.bf16.mxu0 0
    %3384 = vmatpush2.bf16.xpose.msra.mxu0 0
    %3385 = vmatprep.subr.bf16.mxu0 0
    %3386 = vmatpush2.bf16.xpose.msra.mxu0 0
    %3387 = vmatprep.subr.bf16.mxu0 0
    %3388 = vmatpush2.bf16.xpose.msra.mxu0 0
    %3389 = vmatprep.mubr.bf16.mxu0 0
    %3390 = vmatmul.mubr.bf16.gmra.mxu0 %v3352
    %v3391 = vpop.f32.mrf.mxu0
    %v3392 = vadd.f32 0.0, %v3391
    %v3393 = vpop.f32.mrf.mxu0
    %v3394 = vpop.f32.mrf.mxu0
    %v3395 = vpop.f32.mrf.mxu0
    %3396 = vdwg.mxu0
    %v3398 = vsel %vm1128, %v3058, 0
    %v3401 = vsel %vm1128, %v3066, 0
    %3403 = vmatprep.subr.bf16.mxu0 0
    %3404 = vmatpush1.bf16.xpose.msra.mxu0 0
    %3405 = vmatprep.subr.bf16.mxu0 0
    %3406 = vmatpush1.bf16.xpose.msra.mxu0 0
    %3407 = vmatprep.subr.bf16.mxu0 0
    %3408 = vmatpush1.bf16.xpose.msra.mxu0 0
    %3409 = vmatprep.subr.bf16.mxu0 0
    %3410 = vmatpush1.bf16.xpose.msra.mxu0 0
    %3411 = vmatprep.subr.bf16.mxu0 0
    %3412 = vmatpush1.bf16.xpose.msra.mxu0 0
    %3413 = vmatprep.subr.bf16.mxu0 0
    %3414 = vmatpush1.bf16.xpose.msra.mxu0 0
    %3415 = vmatprep.subr.bf16.mxu0 0
    %3416 = vmatpush1.bf16.xpose.msra.mxu0 0
    %3417 = vmatprep.subr.bf16.mxu0 0
    %3418 = vmatpush1.bf16.xpose.msra.mxu0 %v3401
    %3419 = vmatprep.subr.bf16.mxu0 0
    %3420 = vmatpush2.bf16.xpose.msra.mxu0 0
    %3421 = vmatprep.subr.bf16.mxu0 0
    %3422 = vmatpush2.bf16.xpose.msra.mxu0 0
    %3423 = vmatprep.subr.bf16.mxu0 0
    %3424 = vmatpush2.bf16.xpose.msra.mxu0 0
    %3425 = vmatprep.subr.bf16.mxu0 0
    %3426 = vmatpush2.bf16.xpose.msra.mxu0 0
    %3427 = vmatprep.subr.bf16.mxu0 0
    %3428 = vmatpush2.bf16.xpose.msra.mxu0 0
    %3429 = vmatprep.subr.bf16.mxu0 0
    %3430 = vmatpush2.bf16.xpose.msra.mxu0 0
    %3431 = vmatprep.subr.bf16.mxu0 0
    %3432 = vmatpush2.bf16.xpose.msra.mxu0 0
    %3433 = vmatprep.subr.bf16.mxu0 0
    %3434 = vmatpush2.bf16.xpose.msra.mxu0 0
    %3435 = vmatprep.mubr.bf16.mxu0 0
    %3436 = vmatmul.mubr.bf16.gmra.mxu0 %v3398
    %v3437 = vpop.f32.mrf.mxu0
    %v3438 = vadd.f32 0.0, %v3437
    %v3439 = vpop.f32.mrf.mxu0
    %v3440 = vpop.f32.mrf.mxu0
    %v3441 = vpop.f32.mrf.mxu0
    %3442 = vdwg.mxu0
    %v3443 = vsel %vm1128, %v3116, -inf
    %3444 = vmax.xlane.f32.xlu0 %v3443
    %v3445 = vpop.xlane.xlu0 %3444
    %v3446 = vsel %vm1128, %v3162, -inf
    %3447 = vmax.xlane.f32.xlu0 %v3446
    %v3448 = vpop.xlane.xlu0 %3447
    %v3449 = vsel %vm1128, %v3208, -inf
    %3450 = vmax.xlane.f32.xlu0 %v3449
    %v3451 = vpop.xlane.xlu0 %3450
    %v3452 = vsel %vm1128, %v3254, -inf
    %3453 = vmax.xlane.f32.xlu0 %v3452
    %v3454 = vpop.xlane.xlu0 %3453
    %v3455 = vsel %vm1128, %v3300, -inf
    %3456 = vmax.xlane.f32.xlu0 %v3455
    %v3457 = vpop.xlane.xlu0 %3456
    %v3458 = vsel %vm1128, %v3346, -inf
    %3459 = vmax.xlane.f32.xlu0 %v3458
    %v3460 = vpop.xlane.xlu0 %3459
    %v3461 = vsel %vm1128, %v3392, -inf
    %3462 = vmax.xlane.f32.xlu0 %v3461
    %v3463 = vpop.xlane.xlu0 %3462
    %v3464 = vsel %vm1128, %v3438, -inf
    %3465 = vmax.xlane.f32.xlu0 %v3464
    %v3466 = vpop.xlane.xlu0 %3465
    %v3467 = vsub.f32 %v3116, %v3445
    %v3468 = vsub.f32 %v3162, %v3448
    %v3469 = vsub.f32 %v3208, %v3451
    %v3470 = vsub.f32 %v3254, %v3454
    %v3471 = vsub.f32 %v3300, %v3457
    %v3472 = vsub.f32 %v3346, %v3460
    %v3473 = vsub.f32 %v3392, %v3463
    %v3474 = vsub.f32 %v3438, %v3466
    %v3475 = vmul.f32 %v3467, 1.442695
    %v3476 = vpow.pop %v3475
    %v3477 = vmul.f32 %v3468, 1.442695
    %v3478 = vpow.pop %v3477
    %v3479 = vmul.f32 %v3469, 1.442695
    %v3480 = vpow.pop %v3479
    %v3481 = vmul.f32 %v3470, 1.442695
    %v3482 = vpow.pop %v3481
    %v3483 = vmul.f32 %v3471, 1.442695
    %v3484 = vpow.pop %v3483
    %v3485 = vmul.f32 %v3472, 1.442695
    %v3486 = vpow.pop %v3485
    %v3487 = vmul.f32 %v3473, 1.442695
    %v3488 = vpow.pop %v3487
    %v3489 = vmul.f32 %v3474, 1.442695
    %v3490 = vpow.pop %v3489
    %v3491 = vsel %vm1128, %v3476, 0.0
    %3492 = vadd.xlane.f32.xlu0 %v3491
    %v3493 = vpop.xlane.xlu0 %3492
    %v3494 = vsel %vm1128, %v3478, 0.0
    %3495 = vadd.xlane.f32.xlu0 %v3494
    %v3496 = vpop.xlane.xlu0 %3495
    %v3497 = vsel %vm1128, %v3480, 0.0
    %3498 = vadd.xlane.f32.xlu0 %v3497
    %v3499 = vpop.xlane.xlu0 %3498
    %v3500 = vsel %vm1128, %v3482, 0.0
    %3501 = vadd.xlane.f32.xlu0 %v3500
    %v3502 = vpop.xlane.xlu0 %3501
    %v3503 = vsel %vm1128, %v3484, 0.0
    %3504 = vadd.xlane.f32.xlu0 %v3503
    %v3505 = vpop.xlane.xlu0 %3504
    %v3506 = vsel %vm1128, %v3486, 0.0
    %3507 = vadd.xlane.f32.xlu0 %v3506
    %v3508 = vpop.xlane.xlu0 %3507
    %v3509 = vsel %vm1128, %v3488, 0.0
    %3510 = vadd.xlane.f32.xlu0 %v3509
    %v3511 = vpop.xlane.xlu0 %3510
    %v3512 = vsel %vm1128, %v3490, 0.0
    %3513 = vadd.xlane.f32.xlu0 %v3512
    %v3514 = vpop.xlane.xlu0 %3513
    %v3515 = vrcp.pop %v3493
    %v3516 = vrcp.pop %v3496
    %v3517 = vrcp.pop %v3499
    %v3518 = vrcp.pop %v3502
    %v3519 = vrcp.pop %v3505
    %v3520 = vrcp.pop %v3508
    %v3521 = vrcp.pop %v3511
    %v3522 = vrcp.pop %v3514
    %v3523 = vpack.c.bf16 %v3476, %v3476
    %v3524 = vpack.c.bf16 %v3478, %v3478
    %v3525 = vpack.c.bf16 %v3480, %v3480
    %v3526 = vpack.c.bf16 %v3482, %v3482
    %v3527 = vpack.c.bf16 %v3484, %v3484
    %v3528 = vpack.c.bf16 %v3486, %v3486
    %v3529 = vpack.c.bf16 %v3488, %v3488
    %v3530 = vpack.c.bf16 %v3490, %v3490
    %v3532 = vsel %vm1128, %v3523, 0
    %v3535 = vsel %vm1588, %v3067, 0
    %3537 = vmatprep.subr.bf16.mxu0 0
    %3538 = vmatpush1.bf16.msra.mxu0 0
    %3539 = vmatprep.subr.bf16.mxu0 0
    %3540 = vmatpush1.bf16.msra.mxu0 0
    %3541 = vmatprep.subr.bf16.mxu0 0
    %3542 = vmatpush1.bf16.msra.mxu0 0
    %3543 = vmatprep.subr.bf16.mxu0 0
    %3544 = vmatpush1.bf16.msra.mxu0 0
    %3545 = vmatprep.subr.bf16.mxu0 0
    %3546 = vmatpush1.bf16.msra.mxu0 0
    %3547 = vmatprep.subr.bf16.mxu0 0
    %3548 = vmatpush1.bf16.msra.mxu0 0
    %3549 = vmatprep.subr.bf16.mxu0 0
    %3550 = vmatpush1.bf16.msra.mxu0 0
    %3551 = vmatprep.subr.bf16.mxu0 0
    %3552 = vmatpush1.bf16.msra.mxu0 %v3535
    %3553 = vmatprep.subr.bf16.mxu0 0
    %3554 = vmatpush2.bf16.msra.mxu0 0
    %3555 = vmatprep.subr.bf16.mxu0 0
    %3556 = vmatpush2.bf16.msra.mxu0 0
    %3557 = vmatprep.subr.bf16.mxu0 0
    %3558 = vmatpush2.bf16.msra.mxu0 0
    %3559 = vmatprep.subr.bf16.mxu0 0
    %3560 = vmatpush2.bf16.msra.mxu0 0
    %3561 = vmatprep.subr.bf16.mxu0 0
    %3562 = vmatpush2.bf16.msra.mxu0 0
    %3563 = vmatprep.subr.bf16.mxu0 0
    %3564 = vmatpush2.bf16.msra.mxu0 0
    %3565 = vmatprep.subr.bf16.mxu0 0
    %3566 = vmatpush2.bf16.msra.mxu0 0
    %3567 = vmatprep.subr.bf16.mxu0 0
    %3568 = vmatpush2.bf16.msra.mxu0 0
    %3569 = vmatprep.mubr.bf16.mxu0 0
    %3570 = vmatmul.mubr.bf16.gmra.mxu0 %v3532
    %v3571 = vpop.f32.mrf.mxu0
    %v3572 = vadd.f32 0.0, %v3571
    %v3573 = vpop.f32.mrf.mxu0
    %v3574 = vpop.f32.mrf.mxu0
    %v3575 = vpop.f32.mrf.mxu0
    %3576 = vdwg.mxu0
    %v3578 = vsel %vm1128, %v3524, 0
    %v3581 = vsel %vm1588, %v3068, 0
    %3583 = vmatprep.subr.bf16.mxu0 0
    %3584 = vmatpush1.bf16.msra.mxu0 0
    %3585 = vmatprep.subr.bf16.mxu0 0
    %3586 = vmatpush1.bf16.msra.mxu0 0
    %3587 = vmatprep.subr.bf16.mxu0 0
    %3588 = vmatpush1.bf16.msra.mxu0 0
    %3589 = vmatprep.subr.bf16.mxu0 0
    %3590 = vmatpush1.bf16.msra.mxu0 0
    %3591 = vmatprep.subr.bf16.mxu0 0
    %3592 = vmatpush1.bf16.msra.mxu0 0
    %3593 = vmatprep.subr.bf16.mxu0 0
    %3594 = vmatpush1.bf16.msra.mxu0 0
    %3595 = vmatprep.subr.bf16.mxu0 0
    %3596 = vmatpush1.bf16.msra.mxu0 0
    %3597 = vmatprep.subr.bf16.mxu0 0
    %3598 = vmatpush1.bf16.msra.mxu0 %v3581
    %3599 = vmatprep.subr.bf16.mxu0 0
    %3600 = vmatpush2.bf16.msra.mxu0 0
    %3601 = vmatprep.subr.bf16.mxu0 0
    %3602 = vmatpush2.bf16.msra.mxu0 0
    %3603 = vmatprep.subr.bf16.mxu0 0
    %3604 = vmatpush2.bf16.msra.mxu0 0
    %3605 = vmatprep.subr.bf16.mxu0 0
    %3606 = vmatpush2.bf16.msra.mxu0 0
    %3607 = vmatprep.subr.bf16.mxu0 0
    %3608 = vmatpush2.bf16.msra.mxu0 0
    %3609 = vmatprep.subr.bf16.mxu0 0
    %3610 = vmatpush2.bf16.msra.mxu0 0
    %3611 = vmatprep.subr.bf16.mxu0 0
    %3612 = vmatpush2.bf16.msra.mxu0 0
    %3613 = vmatprep.subr.bf16.mxu0 0
    %3614 = vmatpush2.bf16.msra.mxu0 0
    %3615 = vmatprep.mubr.bf16.mxu0 0
    %3616 = vmatmul.mubr.bf16.gmra.mxu0 %v3578
    %v3617 = vpop.f32.mrf.mxu0
    %v3618 = vadd.f32 0.0, %v3617
    %v3619 = vpop.f32.mrf.mxu0
    %v3620 = vpop.f32.mrf.mxu0
    %v3621 = vpop.f32.mrf.mxu0
    %3622 = vdwg.mxu0
    %v3624 = vsel %vm1128, %v3525, 0
    %v3627 = vsel %vm1588, %v3069, 0
    %3629 = vmatprep.subr.bf16.mxu0 0
    %3630 = vmatpush1.bf16.msra.mxu0 0
    %3631 = vmatprep.subr.bf16.mxu0 0
    %3632 = vmatpush1.bf16.msra.mxu0 0
    %3633 = vmatprep.subr.bf16.mxu0 0
    %3634 = vmatpush1.bf16.msra.mxu0 0
    %3635 = vmatprep.subr.bf16.mxu0 0
    %3636 = vmatpush1.bf16.msra.mxu0 0
    %3637 = vmatprep.subr.bf16.mxu0 0
    %3638 = vmatpush1.bf16.msra.mxu0 0
    %3639 = vmatprep.subr.bf16.mxu0 0
    %3640 = vmatpush1.bf16.msra.mxu0 0
    %3641 = vmatprep.subr.bf16.mxu0 0
    %3642 = vmatpush1.bf16.msra.mxu0 0
    %3643 = vmatprep.subr.bf16.mxu0 0
    %3644 = vmatpush1.bf16.msra.mxu0 %v3627
    %3645 = vmatprep.subr.bf16.mxu0 0
    %3646 = vmatpush2.bf16.msra.mxu0 0
    %3647 = vmatprep.subr.bf16.mxu0 0
    %3648 = vmatpush2.bf16.msra.mxu0 0
    %3649 = vmatprep.subr.bf16.mxu0 0
    %3650 = vmatpush2.bf16.msra.mxu0 0
    %3651 = vmatprep.subr.bf16.mxu0 0
    %3652 = vmatpush2.bf16.msra.mxu0 0
    %3653 = vmatprep.subr.bf16.mxu0 0
    %3654 = vmatpush2.bf16.msra.mxu0 0
    %3655 = vmatprep.subr.bf16.mxu0 0
    %3656 = vmatpush2.bf16.msra.mxu0 0
    %3657 = vmatprep.subr.bf16.mxu0 0
    %3658 = vmatpush2.bf16.msra.mxu0 0
    %3659 = vmatprep.subr.bf16.mxu0 0
    %3660 = vmatpush2.bf16.msra.mxu0 0
    %3661 = vmatprep.mubr.bf16.mxu0 0
    %3662 = vmatmul.mubr.bf16.gmra.mxu0 %v3624
    %v3663 = vpop.f32.mrf.mxu0
    %v3664 = vadd.f32 0.0, %v3663
    %v3665 = vpop.f32.mrf.mxu0
    %v3666 = vpop.f32.mrf.mxu0
    %v3667 = vpop.f32.mrf.mxu0
    %3668 = vdwg.mxu0
    %v3670 = vsel %vm1128, %v3526, 0
    %v3673 = vsel %vm1588, %v3070, 0
    %3675 = vmatprep.subr.bf16.mxu0 0
    %3676 = vmatpush1.bf16.msra.mxu0 0
    %3677 = vmatprep.subr.bf16.mxu0 0
    %3678 = vmatpush1.bf16.msra.mxu0 0
    %3679 = vmatprep.subr.bf16.mxu0 0
    %3680 = vmatpush1.bf16.msra.mxu0 0
    %3681 = vmatprep.subr.bf16.mxu0 0
    %3682 = vmatpush1.bf16.msra.mxu0 0
    %3683 = vmatprep.subr.bf16.mxu0 0
    %3684 = vmatpush1.bf16.msra.mxu0 0
    %3685 = vmatprep.subr.bf16.mxu0 0
    %3686 = vmatpush1.bf16.msra.mxu0 0
    %3687 = vmatprep.subr.bf16.mxu0 0
    %3688 = vmatpush1.bf16.msra.mxu0 0
    %3689 = vmatprep.subr.bf16.mxu0 0
    %3690 = vmatpush1.bf16.msra.mxu0 %v3673
    %3691 = vmatprep.subr.bf16.mxu0 0
    %3692 = vmatpush2.bf16.msra.mxu0 0
    %3693 = vmatprep.subr.bf16.mxu0 0
    %3694 = vmatpush2.bf16.msra.mxu0 0
    %3695 = vmatprep.subr.bf16.mxu0 0
    %3696 = vmatpush2.bf16.msra.mxu0 0
    %3697 = vmatprep.subr.bf16.mxu0 0
    %3698 = vmatpush2.bf16.msra.mxu0 0
    %3699 = vmatprep.subr.bf16.mxu0 0
    %3700 = vmatpush2.bf16.msra.mxu0 0
    %3701 = vmatprep.subr.bf16.mxu0 0
    %3702 = vmatpush2.bf16.msra.mxu0 0
    %3703 = vmatprep.subr.bf16.mxu0 0
    %3704 = vmatpush2.bf16.msra.mxu0 0
    %3705 = vmatprep.subr.bf16.mxu0 0
    %3706 = vmatpush2.bf16.msra.mxu0 0
    %3707 = vmatprep.mubr.bf16.mxu0 0
    %3708 = vmatmul.mubr.bf16.gmra.mxu0 %v3670
    %v3709 = vpop.f32.mrf.mxu0
    %v3710 = vadd.f32 0.0, %v3709
    %v3711 = vpop.f32.mrf.mxu0
    %v3712 = vpop.f32.mrf.mxu0
    %v3713 = vpop.f32.mrf.mxu0
    %3714 = vdwg.mxu0
    %v3716 = vsel %vm1128, %v3527, 0
    %v3719 = vsel %vm1588, %v3071, 0
    %3721 = vmatprep.subr.bf16.mxu0 0
    %3722 = vmatpush1.bf16.msra.mxu0 0
    %3723 = vmatprep.subr.bf16.mxu0 0
    %3724 = vmatpush1.bf16.msra.mxu0 0
    %3725 = vmatprep.subr.bf16.mxu0 0
    %3726 = vmatpush1.bf16.msra.mxu0 0
    %3727 = vmatprep.subr.bf16.mxu0 0
    %3728 = vmatpush1.bf16.msra.mxu0 0
    %3729 = vmatprep.subr.bf16.mxu0 0
    %3730 = vmatpush1.bf16.msra.mxu0 0
    %3731 = vmatprep.subr.bf16.mxu0 0
    %3732 = vmatpush1.bf16.msra.mxu0 0
    %3733 = vmatprep.subr.bf16.mxu0 0
    %3734 = vmatpush1.bf16.msra.mxu0 0
    %3735 = vmatprep.subr.bf16.mxu0 0
    %3736 = vmatpush1.bf16.msra.mxu0 %v3719
    %3737 = vmatprep.subr.bf16.mxu0 0
    %3738 = vmatpush2.bf16.msra.mxu0 0
    %3739 = vmatprep.subr.bf16.mxu0 0
    %3740 = vmatpush2.bf16.msra.mxu0 0
    %3741 = vmatprep.subr.bf16.mxu0 0
    %3742 = vmatpush2.bf16.msra.mxu0 0
    %3743 = vmatprep.subr.bf16.mxu0 0
    %3744 = vmatpush2.bf16.msra.mxu0 0
    %3745 = vmatprep.subr.bf16.mxu0 0
    %3746 = vmatpush2.bf16.msra.mxu0 0
    %3747 = vmatprep.subr.bf16.mxu0 0
    %3748 = vmatpush2.bf16.msra.mxu0 0
    %3749 = vmatprep.subr.bf16.mxu0 0
    %3750 = vmatpush2.bf16.msra.mxu0 0
    %3751 = vmatprep.subr.bf16.mxu0 0
    %3752 = vmatpush2.bf16.msra.mxu0 0
    %3753 = vmatprep.mubr.bf16.mxu0 0
    %3754 = vmatmul.mubr.bf16.gmra.mxu0 %v3716
    %v3755 = vpop.f32.mrf.mxu0
    %v3756 = vadd.f32 0.0, %v3755
    %v3757 = vpop.f32.mrf.mxu0
    %v3758 = vpop.f32.mrf.mxu0
    %v3759 = vpop.f32.mrf.mxu0
    %3760 = vdwg.mxu0
    %v3762 = vsel %vm1128, %v3528, 0
    %v3765 = vsel %vm1588, %v3072, 0
    %3767 = vmatprep.subr.bf16.mxu0 0
    %3768 = vmatpush1.bf16.msra.mxu0 0
    %3769 = vmatprep.subr.bf16.mxu0 0
    %3770 = vmatpush1.bf16.msra.mxu0 0
    %3771 = vmatprep.subr.bf16.mxu0 0
    %3772 = vmatpush1.bf16.msra.mxu0 0
    %3773 = vmatprep.subr.bf16.mxu0 0
    %3774 = vmatpush1.bf16.msra.mxu0 0
    %3775 = vmatprep.subr.bf16.mxu0 0
    %3776 = vmatpush1.bf16.msra.mxu0 0
    %3777 = vmatprep.subr.bf16.mxu0 0
    %3778 = vmatpush1.bf16.msra.mxu0 0
    %3779 = vmatprep.subr.bf16.mxu0 0
    %3780 = vmatpush1.bf16.msra.mxu0 0
    %3781 = vmatprep.subr.bf16.mxu0 0
    %3782 = vmatpush1.bf16.msra.mxu0 %v3765
    %3783 = vmatprep.subr.bf16.mxu0 0
    %3784 = vmatpush2.bf16.msra.mxu0 0
    %3785 = vmatprep.subr.bf16.mxu0 0
    %3786 = vmatpush2.bf16.msra.mxu0 0
    %3787 = vmatprep.subr.bf16.mxu0 0
    %3788 = vmatpush2.bf16.msra.mxu0 0
    %3789 = vmatprep.subr.bf16.mxu0 0
    %3790 = vmatpush2.bf16.msra.mxu0 0
    %3791 = vmatprep.subr.bf16.mxu0 0
    %3792 = vmatpush2.bf16.msra.mxu0 0
    %3793 = vmatprep.subr.bf16.mxu0 0
    %3794 = vmatpush2.bf16.msra.mxu0 0
    %3795 = vmatprep.subr.bf16.mxu0 0
    %3796 = vmatpush2.bf16.msra.mxu0 0
    %3797 = vmatprep.subr.bf16.mxu0 0
    %3798 = vmatpush2.bf16.msra.mxu0 0
    %3799 = vmatprep.mubr.bf16.mxu0 0
    %3800 = vmatmul.mubr.bf16.gmra.mxu0 %v3762
    %v3801 = vpop.f32.mrf.mxu0
    %v3802 = vadd.f32 0.0, %v3801
    %v3803 = vpop.f32.mrf.mxu0
    %v3804 = vpop.f32.mrf.mxu0
    %v3805 = vpop.f32.mrf.mxu0
    %3806 = vdwg.mxu0
    %v3808 = vsel %vm1128, %v3529, 0
    %v3811 = vsel %vm1588, %v3073, 0
    %3813 = vmatprep.subr.bf16.mxu0 0
    %3814 = vmatpush1.bf16.msra.mxu0 0
    %3815 = vmatprep.subr.bf16.mxu0 0
    %3816 = vmatpush1.bf16.msra.mxu0 0
    %3817 = vmatprep.subr.bf16.mxu0 0
    %3818 = vmatpush1.bf16.msra.mxu0 0
    %3819 = vmatprep.subr.bf16.mxu0 0
    %3820 = vmatpush1.bf16.msra.mxu0 0
    %3821 = vmatprep.subr.bf16.mxu0 0
    %3822 = vmatpush1.bf16.msra.mxu0 0
    %3823 = vmatprep.subr.bf16.mxu0 0
    %3824 = vmatpush1.bf16.msra.mxu0 0
    %3825 = vmatprep.subr.bf16.mxu0 0
    %3826 = vmatpush1.bf16.msra.mxu0 0
    %3827 = vmatprep.subr.bf16.mxu0 0
    %3828 = vmatpush1.bf16.msra.mxu0 %v3811
    %3829 = vmatprep.subr.bf16.mxu0 0
    %3830 = vmatpush2.bf16.msra.mxu0 0
    %3831 = vmatprep.subr.bf16.mxu0 0
    %3832 = vmatpush2.bf16.msra.mxu0 0
    %3833 = vmatprep.subr.bf16.mxu0 0
    %3834 = vmatpush2.bf16.msra.mxu0 0
    %3835 = vmatprep.subr.bf16.mxu0 0
    %3836 = vmatpush2.bf16.msra.mxu0 0
    %3837 = vmatprep.subr.bf16.mxu0 0
    %3838 = vmatpush2.bf16.msra.mxu0 0
    %3839 = vmatprep.subr.bf16.mxu0 0
    %3840 = vmatpush2.bf16.msra.mxu0 0
    %3841 = vmatprep.subr.bf16.mxu0 0
    %3842 = vmatpush2.bf16.msra.mxu0 0
    %3843 = vmatprep.subr.bf16.mxu0 0
    %3844 = vmatpush2.bf16.msra.mxu0 0
    %3845 = vmatprep.mubr.bf16.mxu0 0
    %3846 = vmatmul.mubr.bf16.gmra.mxu0 %v3808
    %v3847 = vpop.f32.mrf.mxu0
    %v3848 = vadd.f32 0.0, %v3847
    %v3849 = vpop.f32.mrf.mxu0
    %v3850 = vpop.f32.mrf.mxu0
    %v3851 = vpop.f32.mrf.mxu0
    %3852 = vdwg.mxu0
    %v3854 = vsel %vm1128, %v3530, 0
    %v3857 = vsel %vm1588, %v3074, 0
    %3859 = vmatprep.subr.bf16.mxu0 0
    %3860 = vmatpush1.bf16.msra.mxu0 0
    %3861 = vmatprep.subr.bf16.mxu0 0
    %3862 = vmatpush1.bf16.msra.mxu0 0
    %3863 = vmatprep.subr.bf16.mxu0 0
    %3864 = vmatpush1.bf16.msra.mxu0 0
    %3865 = vmatprep.subr.bf16.mxu0 0
    %3866 = vmatpush1.bf16.msra.mxu0 0
    %3867 = vmatprep.subr.bf16.mxu0 0
    %3868 = vmatpush1.bf16.msra.mxu0 0
    %3869 = vmatprep.subr.bf16.mxu0 0
    %3870 = vmatpush1.bf16.msra.mxu0 0
    %3871 = vmatprep.subr.bf16.mxu0 0
    %3872 = vmatpush1.bf16.msra.mxu0 0
    %3873 = vmatprep.subr.bf16.mxu0 0
    %3874 = vmatpush1.bf16.msra.mxu0 %v3857
    %3875 = vmatprep.subr.bf16.mxu0 0
    %3876 = vmatpush2.bf16.msra.mxu0 0
    %3877 = vmatprep.subr.bf16.mxu0 0
    %3878 = vmatpush2.bf16.msra.mxu0 0
    %3879 = vmatprep.subr.bf16.mxu0 0
    %3880 = vmatpush2.bf16.msra.mxu0 0
    %3881 = vmatprep.subr.bf16.mxu0 0
    %3882 = vmatpush2.bf16.msra.mxu0 0
    %3883 = vmatprep.subr.bf16.mxu0 0
    %3884 = vmatpush2.bf16.msra.mxu0 0
    %3885 = vmatprep.subr.bf16.mxu0 0
    %3886 = vmatpush2.bf16.msra.mxu0 0
    %3887 = vmatprep.subr.bf16.mxu0 0
    %3888 = vmatpush2.bf16.msra.mxu0 0
    %3889 = vmatprep.subr.bf16.mxu0 0
    %3890 = vmatpush2.bf16.msra.mxu0 0
    %3891 = vmatprep.mubr.bf16.mxu0 0
    %3892 = vmatmul.mubr.bf16.gmra.mxu0 %v3854
    %v3893 = vpop.f32.mrf.mxu0
    %v3894 = vadd.f32 0.0, %v3893
    %v3895 = vpop.f32.mrf.mxu0
    %v3896 = vpop.f32.mrf.mxu0
    %v3897 = vpop.f32.mrf.mxu0
    %3898 = vdwg.mxu0
    %v3899 = vmul.f32 %v3572, %v3515
    %v3900 = vmul.f32 %v3618, %v3516
    %v3901 = vmul.f32 %v3664, %v3517
    %v3902 = vmul.f32 %v3710, %v3518
    %v3903 = vmul.f32 %v3756, %v3519
    %v3904 = vmul.f32 %v3802, %v3520
    %v3905 = vmul.f32 %v3848, %v3521
    %v3906 = vmul.f32 %v3894, %v3522
    %3909 = vrot.lane.b32.xlu0 %v3901, 8
    %v3910 = vpop.permute.xlu0 %3909
    %3911 = vrot.lane.b32.xlu0 %v3902, 8
    %v3912 = vpop.permute.xlu0 %3911
    %3917 = vrot.lane.b32.xlu0 %v3903, 16
    %v3918 = vpop.permute.xlu0 %3917
    %3919 = vrot.lane.b32.xlu0 %v3904, 16
    %v3920 = vpop.permute.xlu0 %3919
    %3925 = vrot.lane.b32.xlu0 %v3905, 24
    %v3926 = vpop.permute.xlu0 %3925
    %3927 = vrot.lane.b32.xlu0 %v3906, 24
    %v3928 = vpop.permute.xlu0 %3927
    %v3931 = vsel %vm1128, %v3899, %v3910
    %v3932 = vsel %vm1128, %v3900, %v3912
    %v3933 = vsel %vm1988, %v3931, %v3918
    %v3934 = vsel %vm1988, %v3932, %v3920
    %v3935 = vsel %vm1991, %v3933, %v3926
    %v3936 = vsel %vm1991, %v3934, %v3928
    %v3937 = vpack.c.bf16 %v3936, %v3935
    %s3938 = scalar_lea.vmem %s9, 16
    %v3939 = vld [vmem:[%s3938] sm:$0xf]
    %v3940 = vld [vmem:[%s3938 + $0x4] sm:$0xf]
    %v3941 = vld [vmem:[%s3938 + $0x8] sm:$0xf]
    %v3942 = vld [vmem:[%s3938 + $0xc] sm:$0xf]
    %v3947 = vunpack.c.l.b16 %v3939
    %v3948 = vunpack.c.l.b16 %v3940
    %v3949 = vunpack.c.l.b16 %v3941
    %v3950 = vunpack.c.l.b16 %v3942
    %v3951 = vpack.c.b16 %v3948, %v3947
    %v3952 = vpack.c.b16 %v3950, %v3949
    %v3956 = vsel %vm363, %v3937, 0
    %3958 = vmatprep.subr.bf16.mxu0 0
    %3959 = vmatpush1.bf16.msra.mxu0 0
    %3960 = vmatprep.subr.bf16.mxu0 0
    %3961 = vmatpush1.bf16.msra.mxu0 0
    %3962 = vmatprep.subr.bf16.mxu0 0
    %3963 = vmatpush1.bf16.msra.mxu0 0
    %3964 = vmatprep.subr.bf16.mxu0 0
    %3965 = vmatpush1.bf16.msra.mxu0 0
    %3966 = vmatprep.subr.bf16.mxu0 0
    %3967 = vmatpush1.bf16.msra.mxu0 0
    %3968 = vmatprep.subr.bf16.mxu0 0
    %3969 = vmatpush1.bf16.msra.mxu0 0
    %3970 = vmatprep.subr.bf16.mxu0 0
    %3971 = vmatpush1.bf16.msra.mxu0 %v3952
    %3972 = vmatprep.subr.bf16.mxu0 0
    %3973 = vmatpush1.bf16.msra.mxu0 %v3951
    %3974 = vmatprep.subr.bf16.mxu0 0
    %3975 = vmatpush2.bf16.msra.mxu0 0
    %3976 = vmatprep.subr.bf16.mxu0 0
    %3977 = vmatpush2.bf16.msra.mxu0 0
    %3978 = vmatprep.subr.bf16.mxu0 0
    %3979 = vmatpush2.bf16.msra.mxu0 0
    %3980 = vmatprep.subr.bf16.mxu0 0
    %3981 = vmatpush2.bf16.msra.mxu0 0
    %3982 = vmatprep.subr.bf16.mxu0 0
    %3983 = vmatpush2.bf16.msra.mxu0 0
    %3984 = vmatprep.subr.bf16.mxu0 0
    %3985 = vmatpush2.bf16.msra.mxu0 0
    %3986 = vmatprep.subr.bf16.mxu0 0
    %3987 = vmatpush2.bf16.msra.mxu0 0
    %3988 = vmatprep.subr.bf16.mxu0 0
    %3989 = vmatpush2.bf16.msra.mxu0 0
    %3990 = vmatprep.mubr.bf16.mxu0 0
    %3991 = vmatmul.mubr.bf16.gmra.mxu0 %v3956
    %v3992 = vpop.f32.mrf.mxu0
    %v3993 = vadd.f32 0.0, %v3992
    %v3994 = vpop.f32.mrf.mxu0
    %v3995 = vpop.f32.mrf.mxu0
    %v3996 = vadd.f32 0.0, %v3995
    %v3997 = vpop.f32.mrf.mxu0
    %3998 = vdwg.mxu0
    %v3999 = vadd.f32 %v2303, %v3993
    %v4000 = vadd.f32 %v2304, %v3996
    %s4001 = scalar_lea.vmem %s10, 1
    %v4002 = vld [vmem:[%s4001] sm:$0x1]
    %v4004 = vlaneseq
    %v4005 = vshrl.u32 %v4004, 7
    %v4006 = vsub.s32 0, %v4005
    %v4007 = vrot.slane %v4002, %v4006
    %v4009 = vadd.f32 %v3999, %v4007
    %v4010 = vadd.f32 %v4000, %v4007
    %s4011 = scalar_lea.vmem %s11, 1
    %v4012 = vld [vmem:[%s4011] sm:$0x1]
    %s4013 = scalar_lea.vmem %s12, 1
    %v4014 = vld [vmem:[%s4013] sm:$0x1]
    %v4015 = vsel %vm363, %v4009, 0.0
    %4016 = vadd.xlane.f32.xlu0 %v4015
    %v4017 = vpop.xlane.xlu0 %4016
    %v4018 = vsel %vm363, %v4010, 0.0
    %4019 = vadd.xlane.f32.xlu0 %v4018
    %v4020 = vpop.xlane.xlu0 %4019
    %v4021 = vmul.f32 %v4017, %v370
    %v4022 = vmul.f32 %v4020, %v370
    %v4023 = vsub.f32 %v4009, %v4021
    %v4024 = vsub.f32 %v4010, %v4022
    %v4025 = vmul.f32 %v4023, %v4023
    %v4026 = vmul.f32 %v4024, %v4024
    %v4027 = vsel %vm363, %v4025, 0.0
    %4028 = vadd.xlane.f32.xlu0 %v4027
    %v4029 = vpop.xlane.xlu0 %4028
    %v4030 = vsel %vm363, %v4026, 0.0
    %4031 = vadd.xlane.f32.xlu0 %v4030
    %v4032 = vpop.xlane.xlu0 %4031
    %v4033 = vmul.f32 %v4029, %v370
    %v4034 = vmul.f32 %v4032, %v370
    %v4035 = vadd.f32 %v4033, 1e-05
    %v4036 = vadd.f32 %v4034, 1e-05
    %v4037 = vrsqrt.pop %v4035
    %v4038 = vrsqrt.pop %v4036
    %v4039 = vmul.f32 %v4023, %v4037
    %v4040 = vmul.f32 %v4024, %v4038
    %v4042 = vlaneseq
    %v4043 = vshrl.u32 %v4042, 7
    %v4044 = vsub.s32 0, %v4043
    %v4045 = vrot.slane %v4012, %v4044
    %v4047 = vmul.f32 %v4039, %v4045
    %v4048 = vmul.f32 %v4040, %v4045
    %v4050 = vlaneseq
    %v4051 = vshrl.u32 %v4050, 7
    %v4052 = vsub.s32 0, %v4051
    %v4053 = vrot.slane %v4014, %v4052
    %v4055 = vadd.f32 %v4047, %v4053
    %v4056 = vadd.f32 %v4048, %v4053
    %v4057 = vpack.c.bf16 %v4056, %v4055
    %s4058 = scalar_lea.vmem %s13, 16
    %v4059 = vld [vmem:[%s4058] sm:$0xf]
    %v4060 = vld [vmem:[%s4058 + $0x4] sm:$0xf]
    %v4061 = vld [vmem:[%s4058 + $0x8] sm:$0xf]
    %v4062 = vld [vmem:[%s4058 + $0xc] sm:$0xf]
    %s4063 = scalar_lea.vmem %s14, 1
    %v4064 = vld [vmem:[%s4063] sm:$0x1]
    %v4066 = vlaneseq
    %v4067 = vshrl.u32 %v4066, 7
    %v4068 = vsub.s32 0, %v4067
    %v4069 = vrot.slane %v4064, %v4068
    %v4075 = vunpack.c.l.b16 %v4059
    %v4076 = vunpack.c.l.b16 %v4060
    %v4077 = vunpack.c.l.b16 %v4061
    %v4078 = vunpack.c.l.b16 %v4062
    %v4079 = vpack.c.b16 %v4076, %v4075
    %v4080 = vpack.c.b16 %v4078, %v4077
    %v4084 = vsel %vm363, %v4057, 0
    %4086 = vmatprep.subr.bf16.mxu0 0
    %4087 = vmatpush1.bf16.msra.mxu0 0
    %4088 = vmatprep.subr.bf16.mxu0 0
    %4089 = vmatpush1.bf16.msra.mxu0 0
    %4090 = vmatprep.subr.bf16.mxu0 0
    %4091 = vmatpush1.bf16.msra.mxu0 0
    %4092 = vmatprep.subr.bf16.mxu0 0
    %4093 = vmatpush1.bf16.msra.mxu0 0
    %4094 = vmatprep.subr.bf16.mxu0 0
    %4095 = vmatpush1.bf16.msra.mxu0 0
    %4096 = vmatprep.subr.bf16.mxu0 0
    %4097 = vmatpush1.bf16.msra.mxu0 0
    %4098 = vmatprep.subr.bf16.mxu0 0
    %4099 = vmatpush1.bf16.msra.mxu0 %v4080
    %4100 = vmatprep.subr.bf16.mxu0 0
    %4101 = vmatpush1.bf16.msra.mxu0 %v4079
    %4102 = vmatprep.subr.bf16.mxu0 0
    %4103 = vmatpush2.bf16.msra.mxu0 0
    %4104 = vmatprep.subr.bf16.mxu0 0
    %4105 = vmatpush2.bf16.msra.mxu0 0
    %4106 = vmatprep.subr.bf16.mxu0 0
    %4107 = vmatpush2.bf16.msra.mxu0 0
    %4108 = vmatprep.subr.bf16.mxu0 0
    %4109 = vmatpush2.bf16.msra.mxu0 0
    %4110 = vmatprep.subr.bf16.mxu0 0
    %4111 = vmatpush2.bf16.msra.mxu0 0
    %4112 = vmatprep.subr.bf16.mxu0 0
    %4113 = vmatpush2.bf16.msra.mxu0 0
    %4114 = vmatprep.subr.bf16.mxu0 0
    %4115 = vmatpush2.bf16.msra.mxu0 0
    %4116 = vmatprep.subr.bf16.mxu0 0
    %4117 = vmatpush2.bf16.msra.mxu0 0
    %4118 = vmatprep.mubr.bf16.mxu0 0
    %4119 = vmatmul.mubr.bf16.gmra.mxu0 %v4084
    %v4120 = vpop.f32.mrf.mxu0
    %v4121 = vadd.f32 %v4069, %v4120
    %v4122 = vpop.f32.mrf.mxu0
    %v4123 = vpop.f32.mrf.mxu0
    %v4124 = vadd.f32 %v4069, %v4123
    %v4125 = vpop.f32.mrf.mxu0
    %4126 = vdwg.mxu0
    %v4127 = vmul.f32 %v4121, 0.5
    %v4128 = vmul.f32 %v4124, 0.5
    %v4129 = vmul.f32 %v4121, 0.70710677
    %v4130 = vmul.f32 %v4124, 0.70710677
    %v4131 = verf.f32.pop %v4129
    %v4132 = verf.f32.pop %v4130
    %v4133 = vadd.f32 %v4131, 1.0
    %v4134 = vadd.f32 %v4132, 1.0
    %v4135 = vmul.f32 %v4127, %v4133
    %v4136 = vmul.f32 %v4128, %v4134
    %v4137 = vpack.c.bf16 %v4136, %v4135
    %s4138 = scalar_lea.vmem %s15, 64
    %v4139 = vld [vmem:[%s4138] sm:$0xf]
    %v4140 = vld [vmem:[%s4138 + $0x4] sm:$0xf]
    %v4141 = vld [vmem:[%s4138 + $0x8] sm:$0xf]
    %v4142 = vld [vmem:[%s4138 + $0xc] sm:$0xf]
    %v4143 = vld [vmem:[%s4138 + $0x10] sm:$0xf]
    %v4144 = vld [vmem:[%s4138 + $0x14] sm:$0xf]
    %v4145 = vld [vmem:[%s4138 + $0x18] sm:$0xf]
    %v4146 = vld [vmem:[%s4138 + $0x1c] sm:$0xf]
    %v4147 = vld [vmem:[%s4138 + $0x20] sm:$0xf]
    %v4148 = vld [vmem:[%s4138 + $0x24] sm:$0xf]
    %v4149 = vld [vmem:[%s4138 + $0x28] sm:$0xf]
    %v4150 = vld [vmem:[%s4138 + $0x2c] sm:$0xf]
    %v4151 = vld [vmem:[%s4138 + $0x30] sm:$0xf]
    %v4152 = vld [vmem:[%s4138 + $0x34] sm:$0xf]
    %v4153 = vld [vmem:[%s4138 + $0x38] sm:$0xf]
    %v4154 = vld [vmem:[%s4138 + $0x3c] sm:$0xf]
    %v4171 = vunpack.c.l.b16 %v4139
    %v4172 = vunpack.c.l.b16 %v4140
    %v4173 = vunpack.c.l.b16 %v4141
    %v4174 = vunpack.c.l.b16 %v4142
    %v4175 = vunpack.c.l.b16 %v4143
    %v4176 = vunpack.c.l.b16 %v4144
    %v4177 = vunpack.c.l.b16 %v4145
    %v4178 = vunpack.c.l.b16 %v4146
    %v4179 = vunpack.c.l.b16 %v4147
    %v4180 = vunpack.c.l.b16 %v4148
    %v4181 = vunpack.c.l.b16 %v4149
    %v4182 = vunpack.c.l.b16 %v4150
    %v4183 = vunpack.c.l.b16 %v4151
    %v4184 = vunpack.c.l.b16 %v4152
    %v4185 = vunpack.c.l.b16 %v4153
    %v4186 = vunpack.c.l.b16 %v4154
    %v4187 = vpack.c.b16 %v4172, %v4171
    %v4188 = vpack.c.b16 %v4174, %v4173
    %v4189 = vpack.c.b16 %v4176, %v4175
    %v4190 = vpack.c.b16 %v4178, %v4177
    %v4191 = vpack.c.b16 %v4180, %v4179
    %v4192 = vpack.c.b16 %v4182, %v4181
    %v4193 = vpack.c.b16 %v4184, %v4183
    %v4194 = vpack.c.b16 %v4186, %v4185
    %4203 = vmatprep.subr.bf16.mxu0 0
    %4204 = vmatpush1.bf16.msra.mxu0 %v4194
    %4205 = vmatprep.subr.bf16.mxu0 0
    %4206 = vmatpush1.bf16.msra.mxu0 %v4193
    %4207 = vmatprep.subr.bf16.mxu0 0
    %4208 = vmatpush1.bf16.msra.mxu0 %v4192
    %4209 = vmatprep.subr.bf16.mxu0 0
    %4210 = vmatpush1.bf16.msra.mxu0 %v4191
    %4211 = vmatprep.subr.bf16.mxu0 0
    %4212 = vmatpush1.bf16.msra.mxu0 %v4190
    %4213 = vmatprep.subr.bf16.mxu0 0
    %4214 = vmatpush1.bf16.msra.mxu0 %v4189
    %4215 = vmatprep.subr.bf16.mxu0 0
    %4216 = vmatpush1.bf16.msra.mxu0 %v4188
    %4217 = vmatprep.subr.bf16.mxu0 0
    %4218 = vmatpush1.bf16.msra.mxu0 %v4187
    %4219 = vmatprep.subr.bf16.mxu0 0
    %4220 = vmatpush2.bf16.msra.mxu0 0
    %4221 = vmatprep.subr.bf16.mxu0 0
    %4222 = vmatpush2.bf16.msra.mxu0 0
    %4223 = vmatprep.subr.bf16.mxu0 0
    %4224 = vmatpush2.bf16.msra.mxu0 0
    %4225 = vmatprep.subr.bf16.mxu0 0
    %4226 = vmatpush2.bf16.msra.mxu0 0
    %4227 = vmatprep.subr.bf16.mxu0 0
    %4228 = vmatpush2.bf16.msra.mxu0 0
    %4229 = vmatprep.subr.bf16.mxu0 0
    %4230 = vmatpush2.bf16.msra.mxu0 0
    %4231 = vmatprep.subr.bf16.mxu0 0
    %4232 = vmatpush2.bf16.msra.mxu0 0
    %4233 = vmatprep.subr.bf16.mxu0 0
    %4234 = vmatpush2.bf16.msra.mxu0 0
    %4235 = vmatprep.mubr.bf16.mxu0 0
    %4236 = vmatmul.mubr.bf16.gmra.mxu0 %v4137
    %v4237 = vpop.f32.mrf.mxu0
    %v4238 = vadd.f32 0.0, %v4237
    %v4239 = vpop.f32.mrf.mxu0
    %v4240 = vpop.f32.mrf.mxu0
    %v4241 = vadd.f32 0.0, %v4240
    %v4242 = vpop.f32.mrf.mxu0
    %4243 = vdwg.mxu0
    %v4244 = vadd.f32 %v4009, %v4238
    %v4245 = vadd.f32 %v4010, %v4241
    %s4246 = scalar_lea.vmem %s16, 1
    %v4247 = vld [vmem:[%s4246] sm:$0x1]
    %v4249 = vlaneseq
    %v4250 = vshrl.u32 %v4249, 7
    %v4251 = vsub.s32 0, %v4250
    %v4252 = vrot.slane %v4247, %v4251
    %v4254 = vadd.f32 %v4244, %v4252
    %v4255 = vadd.f32 %v4245, %v4252
    %v4256 = vld [vmem:[%s17] sm:$0x1]
    %v4257 = vld [vmem:[%s18] sm:$0x1]
    %v4258 = vsel %vm363, %v4254, 0.0
    %4259 = vadd.xlane.f32.xlu0 %v4258
    %v4260 = vpop.xlane.xlu0 %4259
    %v4261 = vsel %vm363, %v4255, 0.0
    %4262 = vadd.xlane.f32.xlu0 %v4261
    %v4263 = vpop.xlane.xlu0 %4262
    %v4264 = vmul.f32 %v4260, %v370
    %v4265 = vmul.f32 %v4263, %v370
    %v4266 = vsub.f32 %v4254, %v4264
    %v4267 = vsub.f32 %v4255, %v4265
    %v4268 = vmul.f32 %v4266, %v4266
    %v4269 = vmul.f32 %v4267, %v4267
    %v4270 = vsel %vm363, %v4268, 0.0
    %4271 = vadd.xlane.f32.xlu0 %v4270
    %v4272 = vpop.xlane.xlu0 %4271
    %v4273 = vsel %vm363, %v4269, 0.0
    %4274 = vadd.xlane.f32.xlu0 %v4273
    %v4275 = vpop.xlane.xlu0 %4274
    %v4276 = vmul.f32 %v4272, %v370
    %v4277 = vmul.f32 %v4275, %v370
    %v4278 = vadd.f32 %v4276, 1e-05
    %v4279 = vadd.f32 %v4277, 1e-05
    %v4280 = vrsqrt.pop %v4278
    %v4281 = vrsqrt.pop %v4279
    %v4282 = vmul.f32 %v4266, %v4280
    %v4283 = vmul.f32 %v4267, %v4281
    %v4285 = vlaneseq
    %v4286 = vshrl.u32 %v4285, 7
    %v4287 = vsub.s32 0, %v4286
    %v4288 = vrot.slane %v4256, %v4287
    %v4290 = vmul.f32 %v4282, %v4288
    %v4291 = vmul.f32 %v4283, %v4288
    %v4293 = vlaneseq
    %v4294 = vshrl.u32 %v4293, 7
    %v4295 = vsub.s32 0, %v4294
    %v4296 = vrot.slane %v4257, %v4295
    %v4298 = vadd.f32 %v4290, %v4296
    %v4299 = vadd.f32 %v4291, %v4296
    %v4300 = vld [vmem:[%s19] sm:$0xf]
    %v4302 = vsel %vm1988, %v4300, 0
    %4304 = vmatprep.subr.mxu0 0.0
    %4305 = vmatpush1.msra.mxu0 0.0
    %4306 = vmatprep.subr.mxu0 0.0
    %4307 = vmatpush1.msra.mxu0 0.0
    %4308 = vmatprep.subr.mxu0 0.0
    %4309 = vmatpush1.msra.mxu0 0.0
    %4310 = vmatprep.subr.mxu0 0.0
    %4311 = vmatpush1.msra.mxu0 0.0
    %4312 = vmatprep.subr.mxu0 0.0
    %4313 = vmatpush1.msra.mxu0 0.0
    %4314 = vmatprep.subr.mxu0 0.0
    %4315 = vmatpush1.msra.mxu0 0.0
    %4316 = vmatprep.subr.mxu0 0.0
    %4317 = vmatpush1.msra.mxu0 0.0
    %4318 = vmatprep.subr.mxu0 0.0
    %4319 = vmatpush1.msra.mxu0 0.0
    %4320 = vmatprep.subr.mxu0 0.0
    %4321 = vmatpush1.msra.mxu0 0.0
    %4322 = vmatprep.subr.mxu0 0.0
    %4323 = vmatpush1.msra.mxu0 0.0
    %4324 = vmatprep.subr.mxu0 0.0
    %4325 = vmatpush1.msra.mxu0 0.0
    %4326 = vmatprep.subr.mxu0 0.0
    %4327 = vmatpush1.msra.mxu0 0.0
    %4328 = vmatprep.subr.mxu0 0.0
    %4329 = vmatpush1.msra.mxu0 0.0
    %4330 = vmatprep.subr.mxu0 0.0
    %4331 = vmatpush1.msra.mxu0 0.0
    %4332 = vmatprep.subr.mxu0 0.0
    %4333 = vmatpush1.msra.mxu0 %v4299
    %4334 = vmatprep.subr.mxu0 0.0
    %4335 = vmatpush1.msra.mxu0 %v4298
    %4336 = vmatprep.subr.mxu0 0.0
    %4337 = vmatpush2.msra.mxu0 0.0
    %4338 = vmatprep.subr.mxu0 0.0
    %4339 = vmatpush2.msra.mxu0 0.0
    %4340 = vmatprep.subr.mxu0 0.0
    %4341 = vmatpush2.msra.mxu0 0.0
    %4342 = vmatprep.subr.mxu0 0.0
    %4343 = vmatpush2.msra.mxu0 0.0
    %4344 = vmatprep.subr.mxu0 0.0
    %4345 = vmatpush2.msra.mxu0 0.0
    %4346 = vmatprep.subr.mxu0 0.0
    %4347 = vmatpush2.msra.mxu0 0.0
    %4348 = vmatprep.subr.mxu0 0.0
    %4349 = vmatpush2.msra.mxu0 0.0
    %4350 = vmatprep.subr.mxu0 0.0
    %4351 = vmatpush2.msra.mxu0 0.0
    %4352 = vmatprep.subr.mxu0 0.0
    %4353 = vmatpush2.msra.mxu0 0.0
    %4354 = vmatprep.subr.mxu0 0.0
    %4355 = vmatpush2.msra.mxu0 0.0
    %4356 = vmatprep.subr.mxu0 0.0
    %4357 = vmatpush2.msra.mxu0 0.0
    %4358 = vmatprep.subr.mxu0 0.0
    %4359 = vmatpush2.msra.mxu0 0.0
    %4360 = vmatprep.subr.mxu0 0.0
    %4361 = vmatpush2.msra.mxu0 0.0
    %4362 = vmatprep.subr.mxu0 0.0
    %4363 = vmatpush2.msra.mxu0 0.0
    %4364 = vmatprep.subr.mxu0 0.0
    %4365 = vmatpush2.msra.mxu0 0.0
    %4366 = vmatprep.subr.mxu0 0.0
    %4367 = vmatpush2.msra.mxu0 0.0
    %4368 = vmatprep.mubr.f32.mxu0 0.0
    %4369 = vmatmul.mubr.f32.gmra.mxu0 %v4302
    %v4370 = vpop.f32.mrf.mxu0
    %v4371 = vadd.f32 0.0, %v4370
    %v4372 = vpop.f32.mrf.mxu0
    %4373 = vdwg.mxu0
    %vm4374 = vcmask 257024
    %4375 = vst.msk [vmem:[#allocation2] sm:$0xf] %vm4374, %v4371
    // Predicated region
    $region82: #{vit_forward.1} parent=1 // pred_check
      _
    $region83: #{vit_forward.1} parent=1 // pred_check_branch
      %4377 = sbr.rel (0) target = $region85
    $region84: #{vit_forward.1} parent=1 // pred_region
      %s4379 = ssub.s32 64, 64
      %4380 = vsyncadd [#allocation3], %s4379
      %s4382 = sshll.u32 [#allocation2], 4
      %s4383 = int_to_ptr.vmem [resolvable:$true] %s4382
      %4385 = dma.vmem_to_hbm [thread:$0]  %s4383, 64, %s20, [#allocation3]
    $region85: #{vit_forward.1} parent=1 // pred_fallthru
      _
    // Predicated region
    $region86: #{vit_forward.1} parent=1 // pred_check
      _
    $region87: #{vit_forward.1} parent=1 // pred_check_branch
      %4387 = sbr.rel (0) target = $region89
    $region88: #{vit_forward.1} parent=1 // pred_region
      %4388 = dma.done [#allocation3], 64
    $region89: #{vit_forward.1} parent=1 // pred_fallthru
      _
    %4389 = vsyncpa [#allocation3], 1

</llo_original>
